<compile_context>
chip_gen: v6e
topology: v6e:2x2x1
jax: 0.10.0
libtpu: 0.0.40
codegen_flags: <defaults>
</compile_context>

<pallas_src>
import math

import jax
import jax.numpy as jnp
from jax.experimental import pallas as pl
from jax.experimental.pallas import tpu as pltpu

D_MODEL = 32
SEQ_LEN = 8
N_HEADS = 4
N_LAYERS = 2
BATCH = 2
LN_EPS = 1e-5
HEAD_DIM = D_MODEL // N_HEADS


def _layer_norm(x, gamma, beta):
    mu = jnp.mean(x, axis=-1, keepdims=True)
    xc = x - mu
    var = jnp.mean(xc * xc, axis=-1, keepdims=True)
    inv = jax.lax.rsqrt(var + LN_EPS)
    return xc * inv * gamma + beta


def tmae_kernel(
    # inputs
    h0_ref,                                   # (B*S, D) f32  embedded + positional
    wqkv_ref, bqkv_ref,                       # (L, B*H, D, 3*hd) bf16 / (L, B*H, 1, 3*hd) f32
    wo_ref, bo_ref,                           # (L, B*H, hd, D) bf16 / (L, 1, D) f32
    g1_ref, beta1_ref, g2_ref, beta2_ref,     # LayerNorm params (L, 1, D) f32
    w1_ref, b1_ref, w2_ref, b2_ref,           # FFN weights bf16 / biases f32
    wrec_ref, brec_ref,                       # (S, D, 3) f32 / (1, 3) f32
    # outputs
    latent_ref, recon_ref,                    # (B*S, D) f32 / (B, 3) f32
):
    rows, D = h0_ref.shape
    S = SEQ_LEN
    nb = rows // S
    H = N_HEADS
    hd = D // H
    scale = 1.0 / math.sqrt(hd)
    f32 = jnp.float32
    bf16 = jnp.bfloat16

    h = h0_ref[...]                                               # (rows, D) f32

    for l in range(N_LAYERS):
        # ---- multi-head self-attention: all heads in one batched einsum ----
        h3 = h.reshape(nb, S, D).astype(bf16)
        hb = jnp.broadcast_to(h3[:, None], (nb, H, S, D)).reshape(nb * H, S, D)
        qkv = jnp.einsum("bsc,bce->bse", hb, wqkv_ref[l],
                         preferred_element_type=f32) + bqkv_ref[l]     # (nb*H, S, 3hd)
        q = qkv[:, :, 0 * hd:1 * hd].astype(bf16)
        k = qkv[:, :, 1 * hd:2 * hd].astype(bf16)
        v = qkv[:, :, 2 * hd:3 * hd].astype(bf16)

        s = jnp.einsum("bqd,bkd->bqk", q, k,
                       preferred_element_type=f32) * scale             # (nb*H, S, S)
        s = s - jnp.max(s, axis=-1, keepdims=True)
        p = jnp.exp(s)
        p = p * pl.reciprocal(jnp.sum(p, axis=-1, keepdims=True), approx=True)
        ctx = jnp.einsum("bqk,bkd->bqd", p.astype(bf16), v,
                         preferred_element_type=f32)                   # (nb*H, S, hd)

        proj_hm = jnp.einsum("bsd,bde->bse", ctx.astype(bf16), wo_ref[l],
                             preferred_element_type=f32)               # (nb*H, S, D)
        proj4 = proj_hm.reshape(nb, H, S, D)
        proj = proj4[:, 0]
        for hh in range(1, H):                                         # sum over heads
            proj = proj + proj4[:, hh]
        proj = proj.reshape(rows, D) + bo_ref[l]

        h = _layer_norm(h + proj, g1_ref[l], beta1_ref[l])

        # ---- feed-forward (ReLU); dropout = identity ------------------------
        ff = jnp.dot(h.astype(bf16), w1_ref[l],
                     preferred_element_type=f32) + b1_ref[l]
        ff = jnp.maximum(ff, 0.0)
        ff = jnp.dot(ff.astype(bf16), w2_ref[l],
                     preferred_element_type=f32) + b2_ref[l]
        h = _layer_norm(h + ff, g2_ref[l], beta2_ref[l])

    # ---- latent stored as (rows, D); recon = sum_s h[:, s, :] @ Wrec[s] ------
    latent_ref[...] = h
    h3 = h.reshape(nb, S, D)
    rec = jnp.dot(h3[:, 0, :], wrec_ref[0], preferred_element_type=f32)
    for s_i in range(1, S):
        rec = rec + jnp.dot(h3[:, s_i, :], wrec_ref[s_i],
                            preferred_element_type=f32)
    recon_ref[...] = rec + brec_ref[...]


def init_params(key):
    D, S, L = D_MODEL, SEQ_LEN, N_LAYERS
    ks = jax.random.split(key, 20)

    def w(k, shape, scale=0.05):
        return jax.random.normal(k, shape, jnp.float32) * scale

    p = {}
    p["wemb_t"] = w(ks[0], (1, D))                     # Linear(1, D) weight^T
    p["bemb"] = w(ks[1], (1, D))
    p["pos"] = jax.random.normal(ks[2], (S, D), jnp.float32)
    p["wq_t"] = w(ks[3], (L, D, D)); p["bq"] = w(ks[4], (L, 1, D))
    p["wk_t"] = w(ks[5], (L, D, D)); p["bk"] = w(ks[6], (L, 1, D))
    p["wv_t"] = w(ks[7], (L, D, D)); p["bv"] = w(ks[8], (L, 1, D))
    p["wo_t"] = w(ks[9], (L, D, D)); p["bo"] = w(ks[10], (L, 1, D))
    p["g1"] = jnp.ones((L, 1, D), jnp.float32)
    p["beta1"] = jnp.zeros((L, 1, D), jnp.float32)
    p["g2"] = jnp.ones((L, 1, D), jnp.float32)
    p["beta2"] = jnp.zeros((L, 1, D), jnp.float32)
    p["w1_t"] = w(ks[11], (L, D, 4 * D)); p["b1"] = w(ks[12], (L, 1, 4 * D))
    p["w2_t"] = w(ks[13], (L, 4 * D, D)); p["b2"] = w(ks[14], (L, 1, D))
    p["wrec_t"] = w(ks[15], (S * D, 3)); p["brec"] = w(ks[16], (1, 3))
    return p


@jax.jit
def tmae_forward(x, p):
    B = x.shape[0]
    D, S, L, H, hd = D_MODEL, SEQ_LEN, N_LAYERS, N_HEADS, HEAD_DIM
    bf16 = jnp.bfloat16

    # Fold Linear(1,D) embedding + bias + positional embedding into the wrapper.
    h0 = (x * p["wemb_t"] + p["bemb"] + p["pos"][None]).reshape(B * S, D)
    h0 = h0.astype(jnp.float32)

    # Head-major fused QKV weights/biases: batch-head index = b*H + h.
    wq = p["wq_t"].reshape(L, D, H, hd)
    wk = p["wk_t"].reshape(L, D, H, hd)
    wv = p["wv_t"].reshape(L, D, H, hd)
    wqkv = jnp.concatenate([wq, wk, wv], axis=-1).transpose(0, 2, 1, 3)   # (L,H,D,3hd)
    wqkv_hm = jnp.broadcast_to(wqkv[:, None], (L, B, H, D, 3 * hd)
                               ).reshape(L, B * H, D, 3 * hd).astype(bf16)

    bq = p["bq"].reshape(L, 1, H, hd)
    bk = p["bk"].reshape(L, 1, H, hd)
    bv = p["bv"].reshape(L, 1, H, hd)
    bqkv = jnp.concatenate([bq, bk, bv], axis=-1).transpose(0, 2, 1, 3)   # (L,H,1,3hd)
    bqkv_hm = jnp.broadcast_to(bqkv[:, None], (L, B, H, 1, 3 * hd)
                               ).reshape(L, B * H, 1, 3 * hd)

    # Head-major output-projection weights: Wo rows [h*hd:(h+1)*hd] per head.
    wo = p["wo_t"].reshape(L, H, hd, D)
    wo_hm = jnp.broadcast_to(wo[:, None], (L, B, H, hd, D)
                             ).reshape(L, B * H, hd, D).astype(bf16)

    w1 = p["w1_t"].astype(bf16)
    w2 = p["w2_t"].astype(bf16)
    wrec3 = p["wrec_t"].reshape(S, D, 3)

    vmem = pl.BlockSpec(memory_space=pltpu.MemorySpace.VMEM)
    args = (h0, wqkv_hm, bqkv_hm, wo_hm, p["bo"],
            p["g1"], p["beta1"], p["g2"], p["beta2"],
            w1, p["b1"], w2, p["b2"], wrec3, p["brec"])

    latent, recon = pl.pallas_call(
        tmae_kernel,
        out_shape=(jax.ShapeDtypeStruct((B * S, D), jnp.float32),
                   jax.ShapeDtypeStruct((B, 3), jnp.float32)),
        in_specs=[vmem] * len(args),
        out_specs=(vmem, vmem),
    )(*args)
    return latent.reshape(B, S * D), recon


def tmae_reference(x, p):
    """Plain-JAX reference mirroring the PyTorch forward (eval mode)."""
    B, S, _ = x.shape
    D, H, hd = D_MODEL, N_HEADS, HEAD_DIM

    def ln(y, g, b):
        mu = y.mean(-1, keepdims=True)
        var = ((y - mu) ** 2).mean(-1, keepdims=True)
        return (y - mu) * jax.lax.rsqrt(var + LN_EPS) * g + b

    h = x * p["wemb_t"] + p["bemb"] + p["pos"][None]
    for l in range(N_LAYERS):
        q = h @ p["wq_t"][l] + p["bq"][l]
        k = h @ p["wk_t"][l] + p["bk"][l]
        v = h @ p["wv_t"][l] + p["bv"][l]
        qh = q.reshape(B, S, H, hd).transpose(0, 2, 1, 3)
        kh = k.reshape(B, S, H, hd).transpose(0, 2, 1, 3)
        vh = v.reshape(B, S, H, hd).transpose(0, 2, 1, 3)
        sc = jnp.einsum("bhqd,bhkd->bhqk", qh, kh) / math.sqrt(hd)
        pr = jax.nn.softmax(sc, axis=-1)
        attn = jnp.einsum("bhqk,bhkd->bhqd", pr, vh).transpose(0, 2, 1, 3).reshape(B, S, D)
        h = ln(h + attn @ p["wo_t"][l] + p["bo"][l], p["g1"][l], p["beta1"][l])
        ff = jax.nn.relu(h @ p["w1_t"][l] + p["b1"][l]) @ p["w2_t"][l] + p["b2"][l]
        h = ln(h + ff, p["g2"][l], p["beta2"][l])
    latent = h.reshape(B, S * D)
    recon = latent @ p["wrec_t"] + p["brec"]
    return latent, recon


if __name__ == "__main__":
    key = jax.random.PRNGKey(0)
    pkey, xkey = jax.random.split(key)
    params = init_params(pkey)
    x = jax.random.normal(xkey, (BATCH, SEQ_LEN, 1), jnp.float32)

    latent, recon = tmae_forward(x, params)
    jax.block_until_ready((latent, recon))

    ref_latent, ref_recon = tmae_reference(x, params)
    assert latent.shape == (BATCH, SEQ_LEN * D_MODEL)
    assert recon.shape == (BATCH, 3)
    assert jnp.allclose(latent, ref_latent, atol=3e-2, rtol=3e-2)
    assert jnp.allclose(recon, ref_recon, atol=3e-2, rtol=3e-2)
    print("KERNEL_OK")
</pallas_src>

<mosaic_0001>
module attributes {stable_mosaic.version = 11 : i64} {
  func.func @tmae_kernel(%arg0: memref<16x32xf32, #tpu.memory_space<vmem>>, %arg1: memref<2x8x32x24xbf16, #tpu.memory_space<vmem>>, %arg2: memref<2x8x1x24xf32, #tpu.memory_space<vmem>>, %arg3: memref<2x8x8x32xbf16, #tpu.memory_space<vmem>>, %arg4: memref<2x1x32xf32, #tpu.memory_space<vmem>>, %arg5: memref<2x1x32xf32, #tpu.memory_space<vmem>>, %arg6: memref<2x1x32xf32, #tpu.memory_space<vmem>>, %arg7: memref<2x1x32xf32, #tpu.memory_space<vmem>>, %arg8: memref<2x1x32xf32, #tpu.memory_space<vmem>>, %arg9: memref<2x32x128xbf16, #tpu.memory_space<vmem>>, %arg10: memref<2x1x128xf32, #tpu.memory_space<vmem>>, %arg11: memref<2x128x32xbf16, #tpu.memory_space<vmem>>, %arg12: memref<2x1x32xf32, #tpu.memory_space<vmem>>, %arg13: memref<8x32x3xf32, #tpu.memory_space<vmem>>, %arg14: memref<1x3xf32, #tpu.memory_space<vmem>>, %arg15: memref<16x32xf32, #tpu.memory_space<vmem>>, %arg16: memref<2x3xf32, #tpu.memory_space<vmem>>) attributes {dimension_semantics = [], scalar_prefetch = 0 : i64, scratch_operands = 0 : i64, tpu.core_type = #tpu.core_type<tc>} {
    %c0 = arith.constant 0 : index
    %c0_0 = arith.constant 0 : index
    %0 = vector.load %arg0[%c0, %c0_0] : memref<16x32xf32, #tpu.memory_space<vmem>>, vector<16x32xf32>
    %1 = vector.shape_cast %0 : vector<16x32xf32> to vector<2x8x32xf32>
    %2 = arith.truncf %1 : vector<2x8x32xf32> to vector<2x8x32xbf16>
    %3 = vector.shape_cast %2 : vector<2x8x32xbf16> to vector<2x1x8x32xbf16>
    %4 = vector.shape_cast %3 : vector<2x1x8x32xbf16> to vector<2x1x8x32xbf16>
    %5 = vector.broadcast %4 : vector<2x1x8x32xbf16> to vector<2x4x8x32xbf16>
    %6 = vector.shape_cast %5 : vector<2x4x8x32xbf16> to vector<8x8x32xbf16>
    %c0_1 = arith.constant 0 : index
    %c0_2 = arith.constant 0 : index
    %c0_3 = arith.constant 0 : index
    %c0_4 = arith.constant 0 : index
    %7 = vector.load %arg1[%c0_1, %c0_2, %c0_3, %c0_4] : memref<2x8x32x24xbf16, #tpu.memory_space<vmem>>, vector<1x8x32x24xbf16>
    %8 = vector.shape_cast %7 : vector<1x8x32x24xbf16> to vector<8x32x24xbf16>
    "tpu.trace_start"() <{level = 10 : i32, message = "bsc,bce->bse"}> : () -> ()
    %cst = arith.constant dense<0.000000e+00> : vector<8x8x24xf32>
    %9 = tpu.matmul %6, %8, %cst {dimension_numbers = #tpu.dot_dimension_numbers<[2], [1], [1], [2], [0, 0, 0, 1, 1, 2], [0], [0]>} : vector<8x8x32xbf16>, vector<8x32x24xbf16>, vector<8x8x24xf32> -> vector<8x8x24xf32>
    "tpu.trace_stop"() : () -> ()
    %c0_5 = arith.constant 0 : index
    %c0_6 = arith.constant 0 : index
    %c0_7 = arith.constant 0 : index
    %c0_8 = arith.constant 0 : index
    %10 = vector.load %arg2[%c0_5, %c0_6, %c0_7, %c0_8] : memref<2x8x1x24xf32, #tpu.memory_space<vmem>>, vector<1x8x1x24xf32>
    %11 = vector.shape_cast %10 : vector<1x8x1x24xf32> to vector<8x1x24xf32>
    %12 = vector.broadcast %11 : vector<8x1x24xf32> to vector<8x8x24xf32>
    %13 = arith.addf %9, %12 : vector<8x8x24xf32>
    %14 = vector.extract_strided_slice %13 {offsets = [0, 0, 0], sizes = [8, 8, 8], strides = [1, 1, 1]} : vector<8x8x24xf32> to vector<8x8x8xf32>
    %15 = arith.truncf %14 : vector<8x8x8xf32> to vector<8x8x8xbf16>
    %16 = vector.extract_strided_slice %13 {offsets = [0, 0, 8], sizes = [8, 8, 8], strides = [1, 1, 1]} : vector<8x8x24xf32> to vector<8x8x8xf32>
    %17 = arith.truncf %16 : vector<8x8x8xf32> to vector<8x8x8xbf16>
    %18 = vector.extract_strided_slice %13 {offsets = [0, 0, 16], sizes = [8, 8, 8], strides = [1, 1, 1]} : vector<8x8x24xf32> to vector<8x8x8xf32>
    %19 = arith.truncf %18 : vector<8x8x8xf32> to vector<8x8x8xbf16>
    "tpu.trace_start"() <{level = 10 : i32, message = "bqd,bkd->bqk"}> : () -> ()
    %cst_9 = arith.constant dense<0.000000e+00> : vector<8x8x8xf32>
    %20 = tpu.matmul %15, %17, %cst_9 {dimension_numbers = #tpu.dot_dimension_numbers<[2], [2], [1], [1], [0, 0, 0, 1, 1, 1], [0], [0]>} : vector<8x8x8xbf16>, vector<8x8x8xbf16>, vector<8x8x8xf32> -> vector<8x8x8xf32>
    "tpu.trace_stop"() : () -> ()
    %cst_10 = arith.constant 0.353553385 : f32
    %21 = vector.broadcast %cst_10 : f32 to vector<8x8x8xf32>
    %22 = arith.mulf %20, %21 : vector<8x8x8xf32>
    %cst_11 = arith.constant dense<0xFF800000> : vector<8x8xf32>
    %23 = vector.multi_reduction <maximumf>, %22, %cst_11 [2] : vector<8x8x8xf32> to vector<8x8xf32>
    %24 = vector.shape_cast %23 : vector<8x8xf32> to vector<8x8x1xf32>
    %25 = vector.broadcast %24 : vector<8x8x1xf32> to vector<8x8x8xf32>
    %26 = arith.subf %22, %25 : vector<8x8x8xf32>
    %27 = math.exp %26 : vector<8x8x8xf32>
    %cst_12 = arith.constant dense<0.000000e+00> : vector<8x8xf32>
    %28 = vector.multi_reduction <add>, %27, %cst_12 [2] : vector<8x8x8xf32> to vector<8x8xf32>
    %29 = vector.shape_cast %28 : vector<8x8xf32> to vector<8x8x1xf32>
    %30 = tpu.reciprocal %29 {approx = true} : vector<8x8x1xf32> -> vector<8x8x1xf32>
    %31 = vector.broadcast %30 : vector<8x8x1xf32> to vector<8x8x8xf32>
    %32 = arith.mulf %27, %31 : vector<8x8x8xf32>
    %33 = arith.truncf %32 : vector<8x8x8xf32> to vector<8x8x8xbf16>
    "tpu.trace_start"() <{level = 10 : i32, message = "bqk,bkd->bqd"}> : () -> ()
    %cst_13 = arith.constant dense<0.000000e+00> : vector<8x8x8xf32>
    %34 = tpu.matmul %33, %19, %cst_13 {dimension_numbers = #tpu.dot_dimension_numbers<[2], [1], [1], [2], [0, 0, 0, 1, 1, 2], [0], [0]>} : vector<8x8x8xbf16>, vector<8x8x8xbf16>, vector<8x8x8xf32> -> vector<8x8x8xf32>
    "tpu.trace_stop"() : () -> ()
    %35 = arith.truncf %34 : vector<8x8x8xf32> to vector<8x8x8xbf16>
    %c0_14 = arith.constant 0 : index
    %c0_15 = arith.constant 0 : index
    %c0_16 = arith.constant 0 : index
    %c0_17 = arith.constant 0 : index
    %36 = vector.load %arg3[%c0_14, %c0_15, %c0_16, %c0_17] : memref<2x8x8x32xbf16, #tpu.memory_space<vmem>>, vector<1x8x8x32xbf16>
    %37 = vector.shape_cast %36 : vector<1x8x8x32xbf16> to vector<8x8x32xbf16>
    "tpu.trace_start"() <{level = 10 : i32, message = "bsd,bde->bse"}> : () -> ()
    %cst_18 = arith.constant dense<0.000000e+00> : vector<8x8x32xf32>
    %38 = tpu.matmul %35, %37, %cst_18 {dimension_numbers = #tpu.dot_dimension_numbers<[2], [1], [1], [2], [0, 0, 0, 1, 1, 2], [0], [0]>} : vector<8x8x8xbf16>, vector<8x8x32xbf16>, vector<8x8x32xf32> -> vector<8x8x32xf32>
    "tpu.trace_stop"() : () -> ()
    %39 = vector.shape_cast %38 : vector<8x8x32xf32> to vector<2x4x8x32xf32>
    %40 = vector.extract_strided_slice %39 {offsets = [0, 0, 0, 0], sizes = [2, 1, 8, 32], strides = [1, 1, 1, 1]} : vector<2x4x8x32xf32> to vector<2x1x8x32xf32>
    %41 = vector.shape_cast %40 : vector<2x1x8x32xf32> to vector<2x8x32xf32>
    %42 = vector.extract_strided_slice %39 {offsets = [0, 1, 0, 0], sizes = [2, 1, 8, 32], strides = [1, 1, 1, 1]} : vector<2x4x8x32xf32> to vector<2x1x8x32xf32>
    %43 = vector.shape_cast %42 : vector<2x1x8x32xf32> to vector<2x8x32xf32>
    %44 = arith.addf %41, %43 : vector<2x8x32xf32>
    %45 = vector.extract_strided_slice %39 {offsets = [0, 2, 0, 0], sizes = [2, 1, 8, 32], strides = [1, 1, 1, 1]} : vector<2x4x8x32xf32> to vector<2x1x8x32xf32>
    %46 = vector.shape_cast %45 : vector<2x1x8x32xf32> to vector<2x8x32xf32>
    %47 = arith.addf %44, %46 : vector<2x8x32xf32>
    %48 = vector.extract_strided_slice %39 {offsets = [0, 3, 0, 0], sizes = [2, 1, 8, 32], strides = [1, 1, 1, 1]} : vector<2x4x8x32xf32> to vector<2x1x8x32xf32>
    %49 = vector.shape_cast %48 : vector<2x1x8x32xf32> to vector<2x8x32xf32>
    %50 = arith.addf %47, %49 : vector<2x8x32xf32>
    %51 = vector.shape_cast %50 : vector<2x8x32xf32> to vector<16x32xf32>
    %c0_19 = arith.constant 0 : index
    %c0_20 = arith.constant 0 : index
    %c0_21 = arith.constant 0 : index
    %52 = vector.load %arg4[%c0_19, %c0_20, %c0_21] : memref<2x1x32xf32, #tpu.memory_space<vmem>>, vector<1x1x32xf32>
    %53 = vector.shape_cast %52 : vector<1x1x32xf32> to vector<1x32xf32>
    %54 = vector.broadcast %53 : vector<1x32xf32> to vector<16x32xf32>
    %55 = arith.addf %51, %54 : vector<16x32xf32>
    %56 = arith.addf %0, %55 : vector<16x32xf32>
    %c0_22 = arith.constant 0 : index
    %c0_23 = arith.constant 0 : index
    %c0_24 = arith.constant 0 : index
    %57 = vector.load %arg5[%c0_22, %c0_23, %c0_24] : memref<2x1x32xf32, #tpu.memory_space<vmem>>, vector<1x1x32xf32>
    %58 = vector.shape_cast %57 : vector<1x1x32xf32> to vector<1x32xf32>
    %c0_25 = arith.constant 0 : index
    %c0_26 = arith.constant 0 : index
    %c0_27 = arith.constant 0 : index
    %59 = vector.load %arg6[%c0_25, %c0_26, %c0_27] : memref<2x1x32xf32, #tpu.memory_space<vmem>>, vector<1x1x32xf32>
    %60 = vector.shape_cast %59 : vector<1x1x32xf32> to vector<1x32xf32>
    %cst_28 = arith.constant dense<0.000000e+00> : vector<16xf32>
    %61 = vector.multi_reduction <add>, %56, %cst_28 [1] : vector<16x32xf32> to vector<16xf32>
    %62 = vector.shape_cast %61 : vector<16xf32> to vector<16x1xf32>
    %cst_29 = arith.constant 3.200000e+01 : f32
    %63 = vector.broadcast %cst_29 : f32 to vector<16x1xf32>
    %64 = arith.divf %62, %63 : vector<16x1xf32>
    %65 = vector.broadcast %64 : vector<16x1xf32> to vector<16x32xf32>
    %66 = arith.subf %56, %65 : vector<16x32xf32>
    %67 = arith.mulf %66, %66 : vector<16x32xf32>
    %cst_30 = arith.constant dense<0.000000e+00> : vector<16xf32>
    %68 = vector.multi_reduction <add>, %67, %cst_30 [1] : vector<16x32xf32> to vector<16xf32>
    %69 = vector.shape_cast %68 : vector<16xf32> to vector<16x1xf32>
    %cst_31 = arith.constant 3.200000e+01 : f32
    %70 = vector.broadcast %cst_31 : f32 to vector<16x1xf32>
    %71 = arith.divf %69, %70 : vector<16x1xf32>
    %cst_32 = arith.constant 9.99999974E-6 : f32
    %72 = vector.broadcast %cst_32 : f32 to vector<16x1xf32>
    %73 = arith.addf %71, %72 : vector<16x1xf32>
    %74 = math.rsqrt %73 : vector<16x1xf32>
    %75 = vector.broadcast %74 : vector<16x1xf32> to vector<16x32xf32>
    %76 = arith.mulf %66, %75 : vector<16x32xf32>
    %77 = vector.broadcast %58 : vector<1x32xf32> to vector<16x32xf32>
    %78 = arith.mulf %76, %77 : vector<16x32xf32>
    %79 = vector.broadcast %60 : vector<1x32xf32> to vector<16x32xf32>
    %80 = arith.addf %78, %79 : vector<16x32xf32>
    %81 = arith.truncf %80 : vector<16x32xf32> to vector<16x32xbf16>
    %c0_33 = arith.constant 0 : index
    %c0_34 = arith.constant 0 : index
    %c0_35 = arith.constant 0 : index
    %82 = vector.load %arg9[%c0_33, %c0_34, %c0_35] : memref<2x32x128xbf16, #tpu.memory_space<vmem>>, vector<1x32x128xbf16>
    %83 = vector.shape_cast %82 : vector<1x32x128xbf16> to vector<32x128xbf16>
    %cst_36 = arith.constant dense<0.000000e+00> : vector<16x128xf32>
    %84 = tpu.matmul %81, %83, %cst_36 {dimension_numbers = #tpu.dot_dimension_numbers<[1], [0], [0], [1], [0, 0, 1, 1], [], []>} : vector<16x32xbf16>, vector<32x128xbf16>, vector<16x128xf32> -> vector<16x128xf32>
    %c0_37 = arith.constant 0 : index
    %c0_38 = arith.constant 0 : index
    %c0_39 = arith.constant 0 : index
    %85 = vector.load %arg10[%c0_37, %c0_38, %c0_39] : memref<2x1x128xf32, #tpu.memory_space<vmem>>, vector<1x1x128xf32>
    %86 = vector.shape_cast %85 : vector<1x1x128xf32> to vector<1x128xf32>
    %87 = vector.broadcast %86 : vector<1x128xf32> to vector<16x128xf32>
    %88 = arith.addf %84, %87 : vector<16x128xf32>
    %cst_40 = arith.constant 0.000000e+00 : f32
    %89 = vector.broadcast %cst_40 : f32 to vector<16x128xf32>
    %90 = arith.maximumf %88, %89 : vector<16x128xf32>
    %91 = arith.truncf %90 : vector<16x128xf32> to vector<16x128xbf16>
    %c0_41 = arith.constant 0 : index
    %c0_42 = arith.constant 0 : index
    %c0_43 = arith.constant 0 : index
    %92 = vector.load %arg11[%c0_41, %c0_42, %c0_43] : memref<2x128x32xbf16, #tpu.memory_space<vmem>>, vector<1x128x32xbf16>
    %93 = vector.shape_cast %92 : vector<1x128x32xbf16> to vector<128x32xbf16>
    %cst_44 = arith.constant dense<0.000000e+00> : vector<16x32xf32>
    %94 = tpu.matmul %91, %93, %cst_44 {dimension_numbers = #tpu.dot_dimension_numbers<[1], [0], [0], [1], [0, 0, 1, 1], [], []>} : vector<16x128xbf16>, vector<128x32xbf16>, vector<16x32xf32> -> vector<16x32xf32>
    %c0_45 = arith.constant 0 : index
    %c0_46 = arith.constant 0 : index
    %c0_47 = arith.constant 0 : index
    %95 = vector.load %arg12[%c0_45, %c0_46, %c0_47] : memref<2x1x32xf32, #tpu.memory_space<vmem>>, vector<1x1x32xf32>
    %96 = vector.shape_cast %95 : vector<1x1x32xf32> to vector<1x32xf32>
    %97 = vector.broadcast %96 : vector<1x32xf32> to vector<16x32xf32>
    %98 = arith.addf %94, %97 : vector<16x32xf32>
    %99 = arith.addf %80, %98 : vector<16x32xf32>
    %c0_48 = arith.constant 0 : index
    %c0_49 = arith.constant 0 : index
    %c0_50 = arith.constant 0 : index
    %100 = vector.load %arg7[%c0_48, %c0_49, %c0_50] : memref<2x1x32xf32, #tpu.memory_space<vmem>>, vector<1x1x32xf32>
    %101 = vector.shape_cast %100 : vector<1x1x32xf32> to vector<1x32xf32>
    %c0_51 = arith.constant 0 : index
    %c0_52 = arith.constant 0 : index
    %c0_53 = arith.constant 0 : index
    %102 = vector.load %arg8[%c0_51, %c0_52, %c0_53] : memref<2x1x32xf32, #tpu.memory_space<vmem>>, vector<1x1x32xf32>
    %103 = vector.shape_cast %102 : vector<1x1x32xf32> to vector<1x32xf32>
    %cst_54 = arith.constant dense<0.000000e+00> : vector<16xf32>
    %104 = vector.multi_reduction <add>, %99, %cst_54 [1] : vector<16x32xf32> to vector<16xf32>
    %105 = vector.shape_cast %104 : vector<16xf32> to vector<16x1xf32>
    %cst_55 = arith.constant 3.200000e+01 : f32
    %106 = vector.broadcast %cst_55 : f32 to vector<16x1xf32>
    %107 = arith.divf %105, %106 : vector<16x1xf32>
    %108 = vector.broadcast %107 : vector<16x1xf32> to vector<16x32xf32>
    %109 = arith.subf %99, %108 : vector<16x32xf32>
    %110 = arith.mulf %109, %109 : vector<16x32xf32>
    %cst_56 = arith.constant dense<0.000000e+00> : vector<16xf32>
    %111 = vector.multi_reduction <add>, %110, %cst_56 [1] : vector<16x32xf32> to vector<16xf32>
    %112 = vector.shape_cast %111 : vector<16xf32> to vector<16x1xf32>
    %cst_57 = arith.constant 3.200000e+01 : f32
    %113 = vector.broadcast %cst_57 : f32 to vector<16x1xf32>
    %114 = arith.divf %112, %113 : vector<16x1xf32>
    %cst_58 = arith.constant 9.99999974E-6 : f32
    %115 = vector.broadcast %cst_58 : f32 to vector<16x1xf32>
    %116 = arith.addf %114, %115 : vector<16x1xf32>
    %117 = math.rsqrt %116 : vector<16x1xf32>
    %118 = vector.broadcast %117 : vector<16x1xf32> to vector<16x32xf32>
    %119 = arith.mulf %109, %118 : vector<16x32xf32>
    %120 = vector.broadcast %101 : vector<1x32xf32> to vector<16x32xf32>
    %121 = arith.mulf %119, %120 : vector<16x32xf32>
    %122 = vector.broadcast %103 : vector<1x32xf32> to vector<16x32xf32>
    %123 = arith.addf %121, %122 : vector<16x32xf32>
    %124 = vector.shape_cast %123 : vector<16x32xf32> to vector<2x8x32xf32>
    %125 = arith.truncf %124 : vector<2x8x32xf32> to vector<2x8x32xbf16>
    %126 = vector.shape_cast %125 : vector<2x8x32xbf16> to vector<2x1x8x32xbf16>
    %127 = vector.shape_cast %126 : vector<2x1x8x32xbf16> to vector<2x1x8x32xbf16>
    %128 = vector.broadcast %127 : vector<2x1x8x32xbf16> to vector<2x4x8x32xbf16>
    %129 = vector.shape_cast %128 : vector<2x4x8x32xbf16> to vector<8x8x32xbf16>
    %c1 = arith.constant 1 : index
    %c0_59 = arith.constant 0 : index
    %c0_60 = arith.constant 0 : index
    %c0_61 = arith.constant 0 : index
    %130 = vector.load %arg1[%c1, %c0_59, %c0_60, %c0_61] : memref<2x8x32x24xbf16, #tpu.memory_space<vmem>>, vector<1x8x32x24xbf16>
    %131 = vector.shape_cast %130 : vector<1x8x32x24xbf16> to vector<8x32x24xbf16>
    "tpu.trace_start"() <{level = 10 : i32, message = "bsc,bce->bse"}> : () -> ()
    %cst_62 = arith.constant dense<0.000000e+00> : vector<8x8x24xf32>
    %132 = tpu.matmul %129, %131, %cst_62 {dimension_numbers = #tpu.dot_dimension_numbers<[2], [1], [1], [2], [0, 0, 0, 1, 1, 2], [0], [0]>} : vector<8x8x32xbf16>, vector<8x32x24xbf16>, vector<8x8x24xf32> -> vector<8x8x24xf32>
    "tpu.trace_stop"() : () -> ()
    %c1_63 = arith.constant 1 : index
    %c0_64 = arith.constant 0 : index
    %c0_65 = arith.constant 0 : index
    %c0_66 = arith.constant 0 : index
    %133 = vector.load %arg2[%c1_63, %c0_64, %c0_65, %c0_66] : memref<2x8x1x24xf32, #tpu.memory_space<vmem>>, vector<1x8x1x24xf32>
    %134 = vector.shape_cast %133 : vector<1x8x1x24xf32> to vector<8x1x24xf32>
    %135 = vector.broadcast %134 : vector<8x1x24xf32> to vector<8x8x24xf32>
    %136 = arith.addf %132, %135 : vector<8x8x24xf32>
    %137 = vector.extract_strided_slice %136 {offsets = [0, 0, 0], sizes = [8, 8, 8], strides = [1, 1, 1]} : vector<8x8x24xf32> to vector<8x8x8xf32>
    %138 = arith.truncf %137 : vector<8x8x8xf32> to vector<8x8x8xbf16>
    %139 = vector.extract_strided_slice %136 {offsets = [0, 0, 8], sizes = [8, 8, 8], strides = [1, 1, 1]} : vector<8x8x24xf32> to vector<8x8x8xf32>
    %140 = arith.truncf %139 : vector<8x8x8xf32> to vector<8x8x8xbf16>
    %141 = vector.extract_strided_slice %136 {offsets = [0, 0, 16], sizes = [8, 8, 8], strides = [1, 1, 1]} : vector<8x8x24xf32> to vector<8x8x8xf32>
    %142 = arith.truncf %141 : vector<8x8x8xf32> to vector<8x8x8xbf16>
    "tpu.trace_start"() <{level = 10 : i32, message = "bqd,bkd->bqk"}> : () -> ()
    %cst_67 = arith.constant dense<0.000000e+00> : vector<8x8x8xf32>
    %143 = tpu.matmul %138, %140, %cst_67 {dimension_numbers = #tpu.dot_dimension_numbers<[2], [2], [1], [1], [0, 0, 0, 1, 1, 1], [0], [0]>} : vector<8x8x8xbf16>, vector<8x8x8xbf16>, vector<8x8x8xf32> -> vector<8x8x8xf32>
    "tpu.trace_stop"() : () -> ()
    %cst_68 = arith.constant 0.353553385 : f32
    %144 = vector.broadcast %cst_68 : f32 to vector<8x8x8xf32>
    %145 = arith.mulf %143, %144 : vector<8x8x8xf32>
    %cst_69 = arith.constant dense<0xFF800000> : vector<8x8xf32>
    %146 = vector.multi_reduction <maximumf>, %145, %cst_69 [2] : vector<8x8x8xf32> to vector<8x8xf32>
    %147 = vector.shape_cast %146 : vector<8x8xf32> to vector<8x8x1xf32>
    %148 = vector.broadcast %147 : vector<8x8x1xf32> to vector<8x8x8xf32>
    %149 = arith.subf %145, %148 : vector<8x8x8xf32>
    %150 = math.exp %149 : vector<8x8x8xf32>
    %cst_70 = arith.constant dense<0.000000e+00> : vector<8x8xf32>
    %151 = vector.multi_reduction <add>, %150, %cst_70 [2] : vector<8x8x8xf32> to vector<8x8xf32>
    %152 = vector.shape_cast %151 : vector<8x8xf32> to vector<8x8x1xf32>
    %153 = tpu.reciprocal %152 {approx = true} : vector<8x8x1xf32> -> vector<8x8x1xf32>
    %154 = vector.broadcast %153 : vector<8x8x1xf32> to vector<8x8x8xf32>
    %155 = arith.mulf %150, %154 : vector<8x8x8xf32>
    %156 = arith.truncf %155 : vector<8x8x8xf32> to vector<8x8x8xbf16>
    "tpu.trace_start"() <{level = 10 : i32, message = "bqk,bkd->bqd"}> : () -> ()
    %cst_71 = arith.constant dense<0.000000e+00> : vector<8x8x8xf32>
    %157 = tpu.matmul %156, %142, %cst_71 {dimension_numbers = #tpu.dot_dimension_numbers<[2], [1], [1], [2], [0, 0, 0, 1, 1, 2], [0], [0]>} : vector<8x8x8xbf16>, vector<8x8x8xbf16>, vector<8x8x8xf32> -> vector<8x8x8xf32>
    "tpu.trace_stop"() : () -> ()
    %158 = arith.truncf %157 : vector<8x8x8xf32> to vector<8x8x8xbf16>
    %c1_72 = arith.constant 1 : index
    %c0_73 = arith.constant 0 : index
    %c0_74 = arith.constant 0 : index
    %c0_75 = arith.constant 0 : index
    %159 = vector.load %arg3[%c1_72, %c0_73, %c0_74, %c0_75] : memref<2x8x8x32xbf16, #tpu.memory_space<vmem>>, vector<1x8x8x32xbf16>
    %160 = vector.shape_cast %159 : vector<1x8x8x32xbf16> to vector<8x8x32xbf16>
    "tpu.trace_start"() <{level = 10 : i32, message = "bsd,bde->bse"}> : () -> ()
    %cst_76 = arith.constant dense<0.000000e+00> : vector<8x8x32xf32>
    %161 = tpu.matmul %158, %160, %cst_76 {dimension_numbers = #tpu.dot_dimension_numbers<[2], [1], [1], [2], [0, 0, 0, 1, 1, 2], [0], [0]>} : vector<8x8x8xbf16>, vector<8x8x32xbf16>, vector<8x8x32xf32> -> vector<8x8x32xf32>
    "tpu.trace_stop"() : () -> ()
    %162 = vector.shape_cast %161 : vector<8x8x32xf32> to vector<2x4x8x32xf32>
    %163 = vector.extract_strided_slice %162 {offsets = [0, 0, 0, 0], sizes = [2, 1, 8, 32], strides = [1, 1, 1, 1]} : vector<2x4x8x32xf32> to vector<2x1x8x32xf32>
    %164 = vector.shape_cast %163 : vector<2x1x8x32xf32> to vector<2x8x32xf32>
    %165 = vector.extract_strided_slice %162 {offsets = [0, 1, 0, 0], sizes = [2, 1, 8, 32], strides = [1, 1, 1, 1]} : vector<2x4x8x32xf32> to vector<2x1x8x32xf32>
    %166 = vector.shape_cast %165 : vector<2x1x8x32xf32> to vector<2x8x32xf32>
    %167 = arith.addf %164, %166 : vector<2x8x32xf32>
    %168 = vector.extract_strided_slice %162 {offsets = [0, 2, 0, 0], sizes = [2, 1, 8, 32], strides = [1, 1, 1, 1]} : vector<2x4x8x32xf32> to vector<2x1x8x32xf32>
    %169 = vector.shape_cast %168 : vector<2x1x8x32xf32> to vector<2x8x32xf32>
    %170 = arith.addf %167, %169 : vector<2x8x32xf32>
    %171 = vector.extract_strided_slice %162 {offsets = [0, 3, 0, 0], sizes = [2, 1, 8, 32], strides = [1, 1, 1, 1]} : vector<2x4x8x32xf32> to vector<2x1x8x32xf32>
    %172 = vector.shape_cast %171 : vector<2x1x8x32xf32> to vector<2x8x32xf32>
    %173 = arith.addf %170, %172 : vector<2x8x32xf32>
    %174 = vector.shape_cast %173 : vector<2x8x32xf32> to vector<16x32xf32>
    %c1_77 = arith.constant 1 : index
    %c0_78 = arith.constant 0 : index
    %c0_79 = arith.constant 0 : index
    %175 = vector.load %arg4[%c1_77, %c0_78, %c0_79] : memref<2x1x32xf32, #tpu.memory_space<vmem>>, vector<1x1x32xf32>
    %176 = vector.shape_cast %175 : vector<1x1x32xf32> to vector<1x32xf32>
    %177 = vector.broadcast %176 : vector<1x32xf32> to vector<16x32xf32>
    %178 = arith.addf %174, %177 : vector<16x32xf32>
    %179 = arith.addf %123, %178 : vector<16x32xf32>
    %c1_80 = arith.constant 1 : index
    %c0_81 = arith.constant 0 : index
    %c0_82 = arith.constant 0 : index
    %180 = vector.load %arg5[%c1_80, %c0_81, %c0_82] : memref<2x1x32xf32, #tpu.memory_space<vmem>>, vector<1x1x32xf32>
    %181 = vector.shape_cast %180 : vector<1x1x32xf32> to vector<1x32xf32>
    %c1_83 = arith.constant 1 : index
    %c0_84 = arith.constant 0 : index
    %c0_85 = arith.constant 0 : index
    %182 = vector.load %arg6[%c1_83, %c0_84, %c0_85] : memref<2x1x32xf32, #tpu.memory_space<vmem>>, vector<1x1x32xf32>
    %183 = vector.shape_cast %182 : vector<1x1x32xf32> to vector<1x32xf32>
    %cst_86 = arith.constant dense<0.000000e+00> : vector<16xf32>
    %184 = vector.multi_reduction <add>, %179, %cst_86 [1] : vector<16x32xf32> to vector<16xf32>
    %185 = vector.shape_cast %184 : vector<16xf32> to vector<16x1xf32>
    %cst_87 = arith.constant 3.200000e+01 : f32
    %186 = vector.broadcast %cst_87 : f32 to vector<16x1xf32>
    %187 = arith.divf %185, %186 : vector<16x1xf32>
    %188 = vector.broadcast %187 : vector<16x1xf32> to vector<16x32xf32>
    %189 = arith.subf %179, %188 : vector<16x32xf32>
    %190 = arith.mulf %189, %189 : vector<16x32xf32>
    %cst_88 = arith.constant dense<0.000000e+00> : vector<16xf32>
    %191 = vector.multi_reduction <add>, %190, %cst_88 [1] : vector<16x32xf32> to vector<16xf32>
    %192 = vector.shape_cast %191 : vector<16xf32> to vector<16x1xf32>
    %cst_89 = arith.constant 3.200000e+01 : f32
    %193 = vector.broadcast %cst_89 : f32 to vector<16x1xf32>
    %194 = arith.divf %192, %193 : vector<16x1xf32>
    %cst_90 = arith.constant 9.99999974E-6 : f32
    %195 = vector.broadcast %cst_90 : f32 to vector<16x1xf32>
    %196 = arith.addf %194, %195 : vector<16x1xf32>
    %197 = math.rsqrt %196 : vector<16x1xf32>
    %198 = vector.broadcast %197 : vector<16x1xf32> to vector<16x32xf32>
    %199 = arith.mulf %189, %198 : vector<16x32xf32>
    %200 = vector.broadcast %181 : vector<1x32xf32> to vector<16x32xf32>
    %201 = arith.mulf %199, %200 : vector<16x32xf32>
    %202 = vector.broadcast %183 : vector<1x32xf32> to vector<16x32xf32>
    %203 = arith.addf %201, %202 : vector<16x32xf32>
    %204 = arith.truncf %203 : vector<16x32xf32> to vector<16x32xbf16>
    %c1_91 = arith.constant 1 : index
    %c0_92 = arith.constant 0 : index
    %c0_93 = arith.constant 0 : index
    %205 = vector.load %arg9[%c1_91, %c0_92, %c0_93] : memref<2x32x128xbf16, #tpu.memory_space<vmem>>, vector<1x32x128xbf16>
    %206 = vector.shape_cast %205 : vector<1x32x128xbf16> to vector<32x128xbf16>
    %cst_94 = arith.constant dense<0.000000e+00> : vector<16x128xf32>
    %207 = tpu.matmul %204, %206, %cst_94 {dimension_numbers = #tpu.dot_dimension_numbers<[1], [0], [0], [1], [0, 0, 1, 1], [], []>} : vector<16x32xbf16>, vector<32x128xbf16>, vector<16x128xf32> -> vector<16x128xf32>
    %c1_95 = arith.constant 1 : index
    %c0_96 = arith.constant 0 : index
    %c0_97 = arith.constant 0 : index
    %208 = vector.load %arg10[%c1_95, %c0_96, %c0_97] : memref<2x1x128xf32, #tpu.memory_space<vmem>>, vector<1x1x128xf32>
    %209 = vector.shape_cast %208 : vector<1x1x128xf32> to vector<1x128xf32>
    %210 = vector.broadcast %209 : vector<1x128xf32> to vector<16x128xf32>
    %211 = arith.addf %207, %210 : vector<16x128xf32>
    %cst_98 = arith.constant 0.000000e+00 : f32
    %212 = vector.broadcast %cst_98 : f32 to vector<16x128xf32>
    %213 = arith.maximumf %211, %212 : vector<16x128xf32>
    %214 = arith.truncf %213 : vector<16x128xf32> to vector<16x128xbf16>
    %c1_99 = arith.constant 1 : index
    %c0_100 = arith.constant 0 : index
    %c0_101 = arith.constant 0 : index
    %215 = vector.load %arg11[%c1_99, %c0_100, %c0_101] : memref<2x128x32xbf16, #tpu.memory_space<vmem>>, vector<1x128x32xbf16>
    %216 = vector.shape_cast %215 : vector<1x128x32xbf16> to vector<128x32xbf16>
    %cst_102 = arith.constant dense<0.000000e+00> : vector<16x32xf32>
    %217 = tpu.matmul %214, %216, %cst_102 {dimension_numbers = #tpu.dot_dimension_numbers<[1], [0], [0], [1], [0, 0, 1, 1], [], []>} : vector<16x128xbf16>, vector<128x32xbf16>, vector<16x32xf32> -> vector<16x32xf32>
    %c1_103 = arith.constant 1 : index
    %c0_104 = arith.constant 0 : index
    %c0_105 = arith.constant 0 : index
    %218 = vector.load %arg12[%c1_103, %c0_104, %c0_105] : memref<2x1x32xf32, #tpu.memory_space<vmem>>, vector<1x1x32xf32>
    %219 = vector.shape_cast %218 : vector<1x1x32xf32> to vector<1x32xf32>
    %220 = vector.broadcast %219 : vector<1x32xf32> to vector<16x32xf32>
    %221 = arith.addf %217, %220 : vector<16x32xf32>
    %222 = arith.addf %203, %221 : vector<16x32xf32>
    %c1_106 = arith.constant 1 : index
    %c0_107 = arith.constant 0 : index
    %c0_108 = arith.constant 0 : index
    %223 = vector.load %arg7[%c1_106, %c0_107, %c0_108] : memref<2x1x32xf32, #tpu.memory_space<vmem>>, vector<1x1x32xf32>
    %224 = vector.shape_cast %223 : vector<1x1x32xf32> to vector<1x32xf32>
    %c1_109 = arith.constant 1 : index
    %c0_110 = arith.constant 0 : index
    %c0_111 = arith.constant 0 : index
    %225 = vector.load %arg8[%c1_109, %c0_110, %c0_111] : memref<2x1x32xf32, #tpu.memory_space<vmem>>, vector<1x1x32xf32>
    %226 = vector.shape_cast %225 : vector<1x1x32xf32> to vector<1x32xf32>
    %cst_112 = arith.constant dense<0.000000e+00> : vector<16xf32>
    %227 = vector.multi_reduction <add>, %222, %cst_112 [1] : vector<16x32xf32> to vector<16xf32>
    %228 = vector.shape_cast %227 : vector<16xf32> to vector<16x1xf32>
    %cst_113 = arith.constant 3.200000e+01 : f32
    %229 = vector.broadcast %cst_113 : f32 to vector<16x1xf32>
    %230 = arith.divf %228, %229 : vector<16x1xf32>
    %231 = vector.broadcast %230 : vector<16x1xf32> to vector<16x32xf32>
    %232 = arith.subf %222, %231 : vector<16x32xf32>
    %233 = arith.mulf %232, %232 : vector<16x32xf32>
    %cst_114 = arith.constant dense<0.000000e+00> : vector<16xf32>
    %234 = vector.multi_reduction <add>, %233, %cst_114 [1] : vector<16x32xf32> to vector<16xf32>
    %235 = vector.shape_cast %234 : vector<16xf32> to vector<16x1xf32>
    %cst_115 = arith.constant 3.200000e+01 : f32
    %236 = vector.broadcast %cst_115 : f32 to vector<16x1xf32>
    %237 = arith.divf %235, %236 : vector<16x1xf32>
    %cst_116 = arith.constant 9.99999974E-6 : f32
    %238 = vector.broadcast %cst_116 : f32 to vector<16x1xf32>
    %239 = arith.addf %237, %238 : vector<16x1xf32>
    %240 = math.rsqrt %239 : vector<16x1xf32>
    %241 = vector.broadcast %240 : vector<16x1xf32> to vector<16x32xf32>
    %242 = arith.mulf %232, %241 : vector<16x32xf32>
    %243 = vector.broadcast %224 : vector<1x32xf32> to vector<16x32xf32>
    %244 = arith.mulf %242, %243 : vector<16x32xf32>
    %245 = vector.broadcast %226 : vector<1x32xf32> to vector<16x32xf32>
    %246 = arith.addf %244, %245 : vector<16x32xf32>
    %c0_117 = arith.constant 0 : index
    %c0_118 = arith.constant 0 : index
    %247 = vector.load %arg15[%c0_117, %c0_118] : memref<16x32xf32, #tpu.memory_space<vmem>>, vector<16x32xf32>
    tpu.vector_store %arg15[%c0_117, %c0_118], %246 {strides = array<i32>} : memref<16x32xf32, #tpu.memory_space<vmem>>, vector<16x32xf32>,
    %248 = vector.shape_cast %246 : vector<16x32xf32> to vector<2x8x32xf32>
    %249 = vector.extract_strided_slice %248 {offsets = [0, 0, 0], sizes = [2, 1, 32], strides = [1, 1, 1]} : vector<2x8x32xf32> to vector<2x1x32xf32>
    %250 = vector.shape_cast %249 : vector<2x1x32xf32> to vector<2x32xf32>
    %c0_119 = arith.constant 0 : index
    %c0_120 = arith.constant 0 : index
    %c0_121 = arith.constant 0 : index
    %251 = vector.load %arg13[%c0_119, %c0_120, %c0_121] : memref<8x32x3xf32, #tpu.memory_space<vmem>>, vector<1x32x3xf32>
    %252 = vector.shape_cast %251 : vector<1x32x3xf32> to vector<32x3xf32>
    %cst_122 = arith.constant dense<0.000000e+00> : vector<2x3xf32>
    %253 = tpu.matmul %250, %252, %cst_122 {dimension_numbers = #tpu.dot_dimension_numbers<[1], [0], [0], [1], [0, 0, 1, 1], [], []>} : vector<2x32xf32>, vector<32x3xf32>, vector<2x3xf32> -> vector<2x3xf32>
    %254 = vector.extract_strided_slice %248 {offsets = [0, 1, 0], sizes = [2, 1, 32], strides = [1, 1, 1]} : vector<2x8x32xf32> to vector<2x1x32xf32>
    %255 = vector.shape_cast %254 : vector<2x1x32xf32> to vector<2x32xf32>
    %c1_123 = arith.constant 1 : index
    %c0_124 = arith.constant 0 : index
    %c0_125 = arith.constant 0 : index
    %256 = vector.load %arg13[%c1_123, %c0_124, %c0_125] : memref<8x32x3xf32, #tpu.memory_space<vmem>>, vector<1x32x3xf32>
    %257 = vector.shape_cast %256 : vector<1x32x3xf32> to vector<32x3xf32>
    %cst_126 = arith.constant dense<0.000000e+00> : vector<2x3xf32>
    %258 = tpu.matmul %255, %257, %cst_126 {dimension_numbers = #tpu.dot_dimension_numbers<[1], [0], [0], [1], [0, 0, 1, 1], [], []>} : vector<2x32xf32>, vector<32x3xf32>, vector<2x3xf32> -> vector<2x3xf32>
    %259 = arith.addf %253, %258 : vector<2x3xf32>
    %260 = vector.extract_strided_slice %248 {offsets = [0, 2, 0], sizes = [2, 1, 32], strides = [1, 1, 1]} : vector<2x8x32xf32> to vector<2x1x32xf32>
    %261 = vector.shape_cast %260 : vector<2x1x32xf32> to vector<2x32xf32>
    %c2 = arith.constant 2 : index
    %c0_127 = arith.constant 0 : index
    %c0_128 = arith.constant 0 : index
    %262 = vector.load %arg13[%c2, %c0_127, %c0_128] : memref<8x32x3xf32, #tpu.memory_space<vmem>>, vector<1x32x3xf32>
    %263 = vector.shape_cast %262 : vector<1x32x3xf32> to vector<32x3xf32>
    %cst_129 = arith.constant dense<0.000000e+00> : vector<2x3xf32>
    %264 = tpu.matmul %261, %263, %cst_129 {dimension_numbers = #tpu.dot_dimension_numbers<[1], [0], [0], [1], [0, 0, 1, 1], [], []>} : vector<2x32xf32>, vector<32x3xf32>, vector<2x3xf32> -> vector<2x3xf32>
    %265 = arith.addf %259, %264 : vector<2x3xf32>
    %266 = vector.extract_strided_slice %248 {offsets = [0, 3, 0], sizes = [2, 1, 32], strides = [1, 1, 1]} : vector<2x8x32xf32> to vector<2x1x32xf32>
    %267 = vector.shape_cast %266 : vector<2x1x32xf32> to vector<2x32xf32>
    %c3 = arith.constant 3 : index
    %c0_130 = arith.constant 0 : index
    %c0_131 = arith.constant 0 : index
    %268 = vector.load %arg13[%c3, %c0_130, %c0_131] : memref<8x32x3xf32, #tpu.memory_space<vmem>>, vector<1x32x3xf32>
    %269 = vector.shape_cast %268 : vector<1x32x3xf32> to vector<32x3xf32>
    %cst_132 = arith.constant dense<0.000000e+00> : vector<2x3xf32>
    %270 = tpu.matmul %267, %269, %cst_132 {dimension_numbers = #tpu.dot_dimension_numbers<[1], [0], [0], [1], [0, 0, 1, 1], [], []>} : vector<2x32xf32>, vector<32x3xf32>, vector<2x3xf32> -> vector<2x3xf32>
    %271 = arith.addf %265, %270 : vector<2x3xf32>
    %272 = vector.extract_strided_slice %248 {offsets = [0, 4, 0], sizes = [2, 1, 32], strides = [1, 1, 1]} : vector<2x8x32xf32> to vector<2x1x32xf32>
    %273 = vector.shape_cast %272 : vector<2x1x32xf32> to vector<2x32xf32>
    %c4 = arith.constant 4 : index
    %c0_133 = arith.constant 0 : index
    %c0_134 = arith.constant 0 : index
    %274 = vector.load %arg13[%c4, %c0_133, %c0_134] : memref<8x32x3xf32, #tpu.memory_space<vmem>>, vector<1x32x3xf32>
    %275 = vector.shape_cast %274 : vector<1x32x3xf32> to vector<32x3xf32>
    %cst_135 = arith.constant dense<0.000000e+00> : vector<2x3xf32>
    %276 = tpu.matmul %273, %275, %cst_135 {dimension_numbers = #tpu.dot_dimension_numbers<[1], [0], [0], [1], [0, 0, 1, 1], [], []>} : vector<2x32xf32>, vector<32x3xf32>, vector<2x3xf32> -> vector<2x3xf32>
    %277 = arith.addf %271, %276 : vector<2x3xf32>
    %278 = vector.extract_strided_slice %248 {offsets = [0, 5, 0], sizes = [2, 1, 32], strides = [1, 1, 1]} : vector<2x8x32xf32> to vector<2x1x32xf32>
    %279 = vector.shape_cast %278 : vector<2x1x32xf32> to vector<2x32xf32>
    %c5 = arith.constant 5 : index
    %c0_136 = arith.constant 0 : index
    %c0_137 = arith.constant 0 : index
    %280 = vector.load %arg13[%c5, %c0_136, %c0_137] : memref<8x32x3xf32, #tpu.memory_space<vmem>>, vector<1x32x3xf32>
    %281 = vector.shape_cast %280 : vector<1x32x3xf32> to vector<32x3xf32>
    %cst_138 = arith.constant dense<0.000000e+00> : vector<2x3xf32>
    %282 = tpu.matmul %279, %281, %cst_138 {dimension_numbers = #tpu.dot_dimension_numbers<[1], [0], [0], [1], [0, 0, 1, 1], [], []>} : vector<2x32xf32>, vector<32x3xf32>, vector<2x3xf32> -> vector<2x3xf32>
    %283 = arith.addf %277, %282 : vector<2x3xf32>
    %284 = vector.extract_strided_slice %248 {offsets = [0, 6, 0], sizes = [2, 1, 32], strides = [1, 1, 1]} : vector<2x8x32xf32> to vector<2x1x32xf32>
    %285 = vector.shape_cast %284 : vector<2x1x32xf32> to vector<2x32xf32>
    %c6 = arith.constant 6 : index
    %c0_139 = arith.constant 0 : index
    %c0_140 = arith.constant 0 : index
    %286 = vector.load %arg13[%c6, %c0_139, %c0_140] : memref<8x32x3xf32, #tpu.memory_space<vmem>>, vector<1x32x3xf32>
    %287 = vector.shape_cast %286 : vector<1x32x3xf32> to vector<32x3xf32>
    %cst_141 = arith.constant dense<0.000000e+00> : vector<2x3xf32>
    %288 = tpu.matmul %285, %287, %cst_141 {dimension_numbers = #tpu.dot_dimension_numbers<[1], [0], [0], [1], [0, 0, 1, 1], [], []>} : vector<2x32xf32>, vector<32x3xf32>, vector<2x3xf32> -> vector<2x3xf32>
    %289 = arith.addf %283, %288 : vector<2x3xf32>
    %290 = vector.extract_strided_slice %248 {offsets = [0, 7, 0], sizes = [2, 1, 32], strides = [1, 1, 1]} : vector<2x8x32xf32> to vector<2x1x32xf32>
    %291 = vector.shape_cast %290 : vector<2x1x32xf32> to vector<2x32xf32>
    %c7 = arith.constant 7 : index
    %c0_142 = arith.constant 0 : index
    %c0_143 = arith.constant 0 : index
    %292 = vector.load %arg13[%c7, %c0_142, %c0_143] : memref<8x32x3xf32, #tpu.memory_space<vmem>>, vector<1x32x3xf32>
    %293 = vector.shape_cast %292 : vector<1x32x3xf32> to vector<32x3xf32>
    %cst_144 = arith.constant dense<0.000000e+00> : vector<2x3xf32>
    %294 = tpu.matmul %291, %293, %cst_144 {dimension_numbers = #tpu.dot_dimension_numbers<[1], [0], [0], [1], [0, 0, 1, 1], [], []>} : vector<2x32xf32>, vector<32x3xf32>, vector<2x3xf32> -> vector<2x3xf32>
    %295 = arith.addf %289, %294 : vector<2x3xf32>
    %c0_145 = arith.constant 0 : index
    %c0_146 = arith.constant 0 : index
    %296 = vector.load %arg14[%c0_145, %c0_146] : memref<1x3xf32, #tpu.memory_space<vmem>>, vector<1x3xf32>
    %297 = vector.broadcast %296 : vector<1x3xf32> to vector<2x3xf32>
    %298 = arith.addf %295, %297 : vector<2x3xf32>
    %c0_147 = arith.constant 0 : index
    %c0_148 = arith.constant 0 : index
    %299 = vector.load %arg16[%c0_147, %c0_148] : memref<2x3xf32, #tpu.memory_space<vmem>>, vector<2x3xf32>
    tpu.vector_store %arg16[%c0_147, %c0_148], %298 {strides = array<i32>} : memref<2x3xf32, #tpu.memory_space<vmem>>, vector<2x3xf32>,
    return
  }
}

</mosaic_0001>

<llo_original>
// kernel: tmae_forward.1
$region0: #{tmae_forward.1}
  #allocation0 [shape = 'u32[]', space=smem, size = 0x4, offset = 0x4, fixed_abs, tag = 'smem constant byte address 0x4 - core index']
  #allocation1 [shape = 'u32[144,128]{1,0:T(1,128)}', space=vmem, size = 0x12000, scoped, tag = 'internal scratch']
  %s0 = inlined_call_operand.vmem [shape: f32[16,32], index: 0, kind: input, shape index: {}]
  %s1 = inlined_call_operand.vmem [shape: bf16[2,8,32,24], index: 1, kind: input, shape index: {}]
  %s2 = inlined_call_operand.vmem [shape: f32[2,8,1,24], index: 2, kind: input, shape index: {}]
  %s3 = inlined_call_operand.vmem [shape: bf16[2,8,8,32], index: 3, kind: input, shape index: {}]
  %s4 = inlined_call_operand.vmem [shape: f32[2,1,32], index: 4, kind: input, shape index: {}]
  %s5 = inlined_call_operand.vmem [shape: f32[2,1,32], index: 5, kind: input, shape index: {}]
  %s6 = inlined_call_operand.vmem [shape: f32[2,1,32], index: 6, kind: input, shape index: {}]
  %s7 = inlined_call_operand.vmem [shape: f32[2,1,32], index: 7, kind: input, shape index: {}]
  %s8 = inlined_call_operand.vmem [shape: f32[2,1,32], index: 8, kind: input, shape index: {}]
  %s9 = inlined_call_operand.vmem [shape: bf16[2,32,128], index: 9, kind: input, shape index: {}]
  %s10 = inlined_call_operand.vmem [shape: f32[2,1,128], index: 10, kind: input, shape index: {}]
  %s11 = inlined_call_operand.vmem [shape: bf16[2,128,32], index: 11, kind: input, shape index: {}]
  %s12 = inlined_call_operand.vmem [shape: f32[2,1,32], index: 12, kind: input, shape index: {}]
  %s13 = inlined_call_operand.vmem [shape: f32[8,32,3], index: 13, kind: input, shape index: {}]
  %s14 = inlined_call_operand.vmem [shape: f32[1,3], index: 14, kind: input, shape index: {}]
  %s15 = inlined_call_operand.vmem [shape: f32[16,32], index: 15, kind: output, shape index: {0}]
  %s16 = inlined_call_operand.hbm [shape: f32[2,3], index: 16, kind: output, shape index: {1}]
  %17 = xla_tuple %s15, %s16
  %s18 = sld [smem:[#allocation0]]
  $region78: #{tmae_forward.1} parent=0
    _
  %s20 = ssub.s32 1, %s18
  %s21 = scalar_select 0, %s20, %s18
  $region1: #{tmae_forward.1} parent=0
    #allocation2 [shape = 'u8[1024]{0}', space=vmem, size = 0x400, scoped, tag = 'output window, operand 1, single buffered']
    #allocation3 [shape = 's32[1]{0}', space=sflag, size = 0x4, scoped, tag = 'scoped memory for tmae_forward.1']
    %22 = vsyncpa [#allocation3], 0
    // Predicated region
    $region2: #{tmae_forward.1} parent=1 // pred_check
      _
    $region3: #{tmae_forward.1} parent=1 // pred_check_branch
      %24 = sbr.rel (0) target = $region5
    $region4: #{tmae_forward.1} parent=1 // pred_region
      _
    $region5: #{tmae_forward.1} parent=1 // pred_fallthru
      _
    // Predicated region
    $region6: #{tmae_forward.1} parent=1 // pred_check
      _
    $region7: #{tmae_forward.1} parent=1 // pred_check_branch
      %26 = sbr.rel (0) target = $region9
    $region8: #{tmae_forward.1} parent=1 // pred_region
      _
    $region9: #{tmae_forward.1} parent=1 // pred_fallthru
      _
    // Predicated region
    $region10: #{tmae_forward.1} parent=1 // pred_check
      _
    $region11: #{tmae_forward.1} parent=1 // pred_check_branch
      %28 = sbr.rel (0) target = $region13
    $region12: #{tmae_forward.1} parent=1 // pred_region
      _
    $region13: #{tmae_forward.1} parent=1 // pred_fallthru
      _
    // Predicated region
    $region14: #{tmae_forward.1} parent=1 // pred_check
      _
    $region15: #{tmae_forward.1} parent=1 // pred_check_branch
      %30 = sbr.rel (0) target = $region17
    $region16: #{tmae_forward.1} parent=1 // pred_region
      _
    $region17: #{tmae_forward.1} parent=1 // pred_fallthru
      _
    // Predicated region
    $region18: #{tmae_forward.1} parent=1 // pred_check
      _
    $region19: #{tmae_forward.1} parent=1 // pred_check_branch
      %32 = sbr.rel (0) target = $region21
    $region20: #{tmae_forward.1} parent=1 // pred_region
      _
    $region21: #{tmae_forward.1} parent=1 // pred_fallthru
      _
    // Predicated region
    $region22: #{tmae_forward.1} parent=1 // pred_check
      _
    $region23: #{tmae_forward.1} parent=1 // pred_check_branch
      %34 = sbr.rel (0) target = $region25
    $region24: #{tmae_forward.1} parent=1 // pred_region
      _
    $region25: #{tmae_forward.1} parent=1 // pred_fallthru
      _
    // Predicated region
    $region26: #{tmae_forward.1} parent=1 // pred_check
      _
    $region27: #{tmae_forward.1} parent=1 // pred_check_branch
      %36 = sbr.rel (0) target = $region29
    $region28: #{tmae_forward.1} parent=1 // pred_region
      _
    $region29: #{tmae_forward.1} parent=1 // pred_fallthru
      _
    // Predicated region
    $region30: #{tmae_forward.1} parent=1 // pred_check
      _
    $region31: #{tmae_forward.1} parent=1 // pred_check_branch
      %38 = sbr.rel (0) target = $region33
    $region32: #{tmae_forward.1} parent=1 // pred_region
      _
    $region33: #{tmae_forward.1} parent=1 // pred_fallthru
      _
    // Predicated region
    $region34: #{tmae_forward.1} parent=1 // pred_check
      _
    $region35: #{tmae_forward.1} parent=1 // pred_check_branch
      %40 = sbr.rel (0) target = $region37
    $region36: #{tmae_forward.1} parent=1 // pred_region
      _
    $region37: #{tmae_forward.1} parent=1 // pred_fallthru
      _
    // Predicated region
    $region38: #{tmae_forward.1} parent=1 // pred_check
      _
    $region39: #{tmae_forward.1} parent=1 // pred_check_branch
      %42 = sbr.rel (0) target = $region41
    $region40: #{tmae_forward.1} parent=1 // pred_region
      _
    $region41: #{tmae_forward.1} parent=1 // pred_fallthru
      _
    // Predicated region
    $region42: #{tmae_forward.1} parent=1 // pred_check
      _
    $region43: #{tmae_forward.1} parent=1 // pred_check_branch
      %44 = sbr.rel (0) target = $region45
    $region44: #{tmae_forward.1} parent=1 // pred_region
      _
    $region45: #{tmae_forward.1} parent=1 // pred_fallthru
      _
    // Predicated region
    $region46: #{tmae_forward.1} parent=1 // pred_check
      _
    $region47: #{tmae_forward.1} parent=1 // pred_check_branch
      %46 = sbr.rel (0) target = $region49
    $region48: #{tmae_forward.1} parent=1 // pred_region
      _
    $region49: #{tmae_forward.1} parent=1 // pred_fallthru
      _
    // Predicated region
    $region50: #{tmae_forward.1} parent=1 // pred_check
      _
    $region51: #{tmae_forward.1} parent=1 // pred_check_branch
      %48 = sbr.rel (0) target = $region53
    $region52: #{tmae_forward.1} parent=1 // pred_region
      _
    $region53: #{tmae_forward.1} parent=1 // pred_fallthru
      _
    // Predicated region
    $region54: #{tmae_forward.1} parent=1 // pred_check
      _
    $region55: #{tmae_forward.1} parent=1 // pred_check_branch
      %50 = sbr.rel (0) target = $region57
    $region56: #{tmae_forward.1} parent=1 // pred_region
      _
    $region57: #{tmae_forward.1} parent=1 // pred_fallthru
      _
    // Predicated region
    $region58: #{tmae_forward.1} parent=1 // pred_check
      _
    $region59: #{tmae_forward.1} parent=1 // pred_check_branch
      %52 = sbr.rel (0) target = $region61
    $region60: #{tmae_forward.1} parent=1 // pred_region
      _
    $region61: #{tmae_forward.1} parent=1 // pred_fallthru
      _
    %v54 = vld [vmem:[%s0] sm:$0xff]
    %v55 = vld [vmem:[%s0 + $0x8] sm:$0xff]
    %v56 = vpack.c.bf16 %v54, %v54
    %v57 = vpack.c.bf16 %v55, %v55
    %v58 = vld [vmem:[%s1] sm:$0xf]
    %v59 = vld [vmem:[%s1 + $0x4] sm:$0xf]
    %v60 = vld [vmem:[%s1 + $0x8] sm:$0xf]
    %v61 = vld [vmem:[%s1 + $0xc] sm:$0xf]
    %v62 = vld [vmem:[%s1 + $0x10] sm:$0xf]
    %v63 = vld [vmem:[%s1 + $0x14] sm:$0xf]
    %v64 = vld [vmem:[%s1 + $0x18] sm:$0xf]
    %v65 = vld [vmem:[%s1 + $0x1c] sm:$0xf]
    %v66 = vld [vmem:[%s1 + $0x20] sm:$0xf]
    %v67 = vld [vmem:[%s1 + $0x24] sm:$0xf]
    %v68 = vld [vmem:[%s1 + $0x28] sm:$0xf]
    %v69 = vld [vmem:[%s1 + $0x2c] sm:$0xf]
    %v70 = vld [vmem:[%s1 + $0x30] sm:$0xf]
    %v71 = vld [vmem:[%s1 + $0x34] sm:$0xf]
    %v72 = vld [vmem:[%s1 + $0x38] sm:$0xf]
    %v73 = vld [vmem:[%s1 + $0x3c] sm:$0xf]
    %v74 = vld [vmem:[%s1 + $0x40] sm:$0xf]
    %v75 = vld [vmem:[%s1 + $0x44] sm:$0xf]
    %v76 = vld [vmem:[%s1 + $0x48] sm:$0xf]
    %v77 = vld [vmem:[%s1 + $0x4c] sm:$0xf]
    %v78 = vld [vmem:[%s1 + $0x50] sm:$0xf]
    %v79 = vld [vmem:[%s1 + $0x54] sm:$0xf]
    %v80 = vld [vmem:[%s1 + $0x58] sm:$0xf]
    %v81 = vld [vmem:[%s1 + $0x5c] sm:$0xf]
    %v82 = vld [vmem:[%s1 + $0x60] sm:$0xf]
    %v83 = vld [vmem:[%s1 + $0x64] sm:$0xf]
    %v84 = vld [vmem:[%s1 + $0x68] sm:$0xf]
    %v85 = vld [vmem:[%s1 + $0x6c] sm:$0xf]
    %v86 = vld [vmem:[%s1 + $0x70] sm:$0xf]
    %v87 = vld [vmem:[%s1 + $0x74] sm:$0xf]
    %v88 = vld [vmem:[%s1 + $0x78] sm:$0xf]
    %v89 = vld [vmem:[%s1 + $0x7c] sm:$0xf]
    %v90 = vld [vmem:[%s2] sm:$0x1]
    %v91 = vld [vmem:[%s2 + $0x1] sm:$0x1]
    %v92 = vld [vmem:[%s2 + $0x2] sm:$0x1]
    %v93 = vld [vmem:[%s2 + $0x3] sm:$0x1]
    %v94 = vld [vmem:[%s2 + $0x4] sm:$0x1]
    %v95 = vld [vmem:[%s2 + $0x5] sm:$0x1]
    %v96 = vld [vmem:[%s2 + $0x6] sm:$0x1]
    %v97 = vld [vmem:[%s2 + $0x7] sm:$0x1]
    %v106 = vlaneseq
    %v107 = vshrl.u32 %v106, 7
    %v108 = vsub.s32 0, %v107
    %v109 = vrot.slane %v90, %v108
    %v110 = vlaneseq
    %v111 = vshrl.u32 %v110, 7
    %v112 = vsub.s32 0, %v111
    %v113 = vrot.slane %v91, %v112
    %v114 = vlaneseq
    %v115 = vshrl.u32 %v114, 7
    %v116 = vsub.s32 0, %v115
    %v117 = vrot.slane %v92, %v116
    %v118 = vlaneseq
    %v119 = vshrl.u32 %v118, 7
    %v120 = vsub.s32 0, %v119
    %v121 = vrot.slane %v93, %v120
    %v122 = vlaneseq
    %v123 = vshrl.u32 %v122, 7
    %v124 = vsub.s32 0, %v123
    %v125 = vrot.slane %v94, %v124
    %v126 = vlaneseq
    %v127 = vshrl.u32 %v126, 7
    %v128 = vsub.s32 0, %v127
    %v129 = vrot.slane %v95, %v128
    %v130 = vlaneseq
    %v131 = vshrl.u32 %v130, 7
    %v132 = vsub.s32 0, %v131
    %v133 = vrot.slane %v96, %v132
    %v134 = vlaneseq
    %v135 = vshrl.u32 %v134, 7
    %v136 = vsub.s32 0, %v135
    %v137 = vrot.slane %v97, %v136
    %v150 = vunpack.c.l.b16 %v58
    %v151 = vunpack.c.l.b16 %v59
    %v152 = vunpack.c.l.b16 %v60
    %v153 = vunpack.c.l.b16 %v61
    %v154 = vpack.c.b16 %v151, %v150
    %v155 = vpack.c.b16 %v153, %v152
    %vm158 = vcmask 261120
    %v160 = vsel %vm158, %v56, 0
    %162 = vmatprep.subr.bf16.mxu0 0
    %163 = vmatpush1.bf16.msra.mxu0 0
    %164 = vmatprep.subr.bf16.mxu0 0
    %165 = vmatpush1.bf16.msra.mxu0 0
    %166 = vmatprep.subr.bf16.mxu0 0
    %167 = vmatpush1.bf16.msra.mxu0 0
    %168 = vmatprep.subr.bf16.mxu0 0
    %169 = vmatpush1.bf16.msra.mxu0 0
    %170 = vmatprep.subr.bf16.mxu0 0
    %171 = vmatpush1.bf16.msra.mxu0 0
    %172 = vmatprep.subr.bf16.mxu0 0
    %173 = vmatpush1.bf16.msra.mxu0 0
    %174 = vmatprep.subr.bf16.mxu0 0
    %175 = vmatpush1.bf16.msra.mxu0 %v155
    %176 = vmatprep.subr.bf16.mxu0 0
    %177 = vmatpush1.bf16.msra.mxu0 %v154
    %178 = vmatprep.subr.bf16.mxu0 0
    %179 = vmatpush2.bf16.msra.mxu0 0
    %180 = vmatprep.subr.bf16.mxu0 0
    %181 = vmatpush2.bf16.msra.mxu0 0
    %182 = vmatprep.subr.bf16.mxu0 0
    %183 = vmatpush2.bf16.msra.mxu0 0
    %184 = vmatprep.subr.bf16.mxu0 0
    %185 = vmatpush2.bf16.msra.mxu0 0
    %186 = vmatprep.subr.bf16.mxu0 0
    %187 = vmatpush2.bf16.msra.mxu0 0
    %188 = vmatprep.subr.bf16.mxu0 0
    %189 = vmatpush2.bf16.msra.mxu0 0
    %190 = vmatprep.subr.bf16.mxu0 0
    %191 = vmatpush2.bf16.msra.mxu0 0
    %192 = vmatprep.subr.bf16.mxu0 0
    %193 = vmatpush2.bf16.msra.mxu0 0
    %194 = vmatprep.mubr.bf16.mxu0 0
    %195 = vmatmul.mubr.bf16.gmra.mxu0 %v160
    %v196 = vpop.f32.mrf.mxu0
    %v197 = vadd.f32 %v109, %v196
    %v198 = vpop.f32.mrf.mxu0
    %v199 = vpop.f32.mrf.mxu0
    %v200 = vpop.f32.mrf.mxu0
    %201 = vdwg.mxu0
    %v206 = vunpack.c.l.b16 %v62
    %v207 = vunpack.c.l.b16 %v63
    %v208 = vunpack.c.l.b16 %v64
    %v209 = vunpack.c.l.b16 %v65
    %v210 = vpack.c.b16 %v207, %v206
    %v211 = vpack.c.b16 %v209, %v208
    %214 = vmatprep.subr.bf16.mxu0 0
    %215 = vmatpush1.bf16.msra.mxu0 0
    %216 = vmatprep.subr.bf16.mxu0 0
    %217 = vmatpush1.bf16.msra.mxu0 0
    %218 = vmatprep.subr.bf16.mxu0 0
    %219 = vmatpush1.bf16.msra.mxu0 0
    %220 = vmatprep.subr.bf16.mxu0 0
    %221 = vmatpush1.bf16.msra.mxu0 0
    %222 = vmatprep.subr.bf16.mxu0 0
    %223 = vmatpush1.bf16.msra.mxu0 0
    %224 = vmatprep.subr.bf16.mxu0 0
    %225 = vmatpush1.bf16.msra.mxu0 0
    %226 = vmatprep.subr.bf16.mxu0 0
    %227 = vmatpush1.bf16.msra.mxu0 %v211
    %228 = vmatprep.subr.bf16.mxu0 0
    %229 = vmatpush1.bf16.msra.mxu0 %v210
    %230 = vmatprep.subr.bf16.mxu0 0
    %231 = vmatpush2.bf16.msra.mxu0 0
    %232 = vmatprep.subr.bf16.mxu0 0
    %233 = vmatpush2.bf16.msra.mxu0 0
    %234 = vmatprep.subr.bf16.mxu0 0
    %235 = vmatpush2.bf16.msra.mxu0 0
    %236 = vmatprep.subr.bf16.mxu0 0
    %237 = vmatpush2.bf16.msra.mxu0 0
    %238 = vmatprep.subr.bf16.mxu0 0
    %239 = vmatpush2.bf16.msra.mxu0 0
    %240 = vmatprep.subr.bf16.mxu0 0
    %241 = vmatpush2.bf16.msra.mxu0 0
    %242 = vmatprep.subr.bf16.mxu0 0
    %243 = vmatpush2.bf16.msra.mxu0 0
    %244 = vmatprep.subr.bf16.mxu0 0
    %245 = vmatpush2.bf16.msra.mxu0 0
    %246 = vmatprep.mubr.bf16.mxu0 0
    %247 = vmatmul.mubr.bf16.gmra.mxu0 %v160
    %v248 = vpop.f32.mrf.mxu0
    %v249 = vadd.f32 %v113, %v248
    %v250 = vpop.f32.mrf.mxu0
    %v251 = vpop.f32.mrf.mxu0
    %v252 = vpop.f32.mrf.mxu0
    %253 = vdwg.mxu0
    %v258 = vunpack.c.l.b16 %v66
    %v259 = vunpack.c.l.b16 %v67
    %v260 = vunpack.c.l.b16 %v68
    %v261 = vunpack.c.l.b16 %v69
    %v262 = vpack.c.b16 %v259, %v258
    %v263 = vpack.c.b16 %v261, %v260
    %266 = vmatprep.subr.bf16.mxu0 0
    %267 = vmatpush1.bf16.msra.mxu0 0
    %268 = vmatprep.subr.bf16.mxu0 0
    %269 = vmatpush1.bf16.msra.mxu0 0
    %270 = vmatprep.subr.bf16.mxu0 0
    %271 = vmatpush1.bf16.msra.mxu0 0
    %272 = vmatprep.subr.bf16.mxu0 0
    %273 = vmatpush1.bf16.msra.mxu0 0
    %274 = vmatprep.subr.bf16.mxu0 0
    %275 = vmatpush1.bf16.msra.mxu0 0
    %276 = vmatprep.subr.bf16.mxu0 0
    %277 = vmatpush1.bf16.msra.mxu0 0
    %278 = vmatprep.subr.bf16.mxu0 0
    %279 = vmatpush1.bf16.msra.mxu0 %v263
    %280 = vmatprep.subr.bf16.mxu0 0
    %281 = vmatpush1.bf16.msra.mxu0 %v262
    %282 = vmatprep.subr.bf16.mxu0 0
    %283 = vmatpush2.bf16.msra.mxu0 0
    %284 = vmatprep.subr.bf16.mxu0 0
    %285 = vmatpush2.bf16.msra.mxu0 0
    %286 = vmatprep.subr.bf16.mxu0 0
    %287 = vmatpush2.bf16.msra.mxu0 0
    %288 = vmatprep.subr.bf16.mxu0 0
    %289 = vmatpush2.bf16.msra.mxu0 0
    %290 = vmatprep.subr.bf16.mxu0 0
    %291 = vmatpush2.bf16.msra.mxu0 0
    %292 = vmatprep.subr.bf16.mxu0 0
    %293 = vmatpush2.bf16.msra.mxu0 0
    %294 = vmatprep.subr.bf16.mxu0 0
    %295 = vmatpush2.bf16.msra.mxu0 0
    %296 = vmatprep.subr.bf16.mxu0 0
    %297 = vmatpush2.bf16.msra.mxu0 0
    %298 = vmatprep.mubr.bf16.mxu0 0
    %299 = vmatmul.mubr.bf16.gmra.mxu0 %v160
    %v300 = vpop.f32.mrf.mxu0
    %v301 = vadd.f32 %v117, %v300
    %v302 = vpop.f32.mrf.mxu0
    %v303 = vpop.f32.mrf.mxu0
    %v304 = vpop.f32.mrf.mxu0
    %305 = vdwg.mxu0
    %v310 = vunpack.c.l.b16 %v70
    %v311 = vunpack.c.l.b16 %v71
    %v312 = vunpack.c.l.b16 %v72
    %v313 = vunpack.c.l.b16 %v73
    %v314 = vpack.c.b16 %v311, %v310
    %v315 = vpack.c.b16 %v313, %v312
    %318 = vmatprep.subr.bf16.mxu0 0
    %319 = vmatpush1.bf16.msra.mxu0 0
    %320 = vmatprep.subr.bf16.mxu0 0
    %321 = vmatpush1.bf16.msra.mxu0 0
    %322 = vmatprep.subr.bf16.mxu0 0
    %323 = vmatpush1.bf16.msra.mxu0 0
    %324 = vmatprep.subr.bf16.mxu0 0
    %325 = vmatpush1.bf16.msra.mxu0 0
    %326 = vmatprep.subr.bf16.mxu0 0
    %327 = vmatpush1.bf16.msra.mxu0 0
    %328 = vmatprep.subr.bf16.mxu0 0
    %329 = vmatpush1.bf16.msra.mxu0 0
    %330 = vmatprep.subr.bf16.mxu0 0
    %331 = vmatpush1.bf16.msra.mxu0 %v315
    %332 = vmatprep.subr.bf16.mxu0 0
    %333 = vmatpush1.bf16.msra.mxu0 %v314
    %334 = vmatprep.subr.bf16.mxu0 0
    %335 = vmatpush2.bf16.msra.mxu0 0
    %336 = vmatprep.subr.bf16.mxu0 0
    %337 = vmatpush2.bf16.msra.mxu0 0
    %338 = vmatprep.subr.bf16.mxu0 0
    %339 = vmatpush2.bf16.msra.mxu0 0
    %340 = vmatprep.subr.bf16.mxu0 0
    %341 = vmatpush2.bf16.msra.mxu0 0
    %342 = vmatprep.subr.bf16.mxu0 0
    %343 = vmatpush2.bf16.msra.mxu0 0
    %344 = vmatprep.subr.bf16.mxu0 0
    %345 = vmatpush2.bf16.msra.mxu0 0
    %346 = vmatprep.subr.bf16.mxu0 0
    %347 = vmatpush2.bf16.msra.mxu0 0
    %348 = vmatprep.subr.bf16.mxu0 0
    %349 = vmatpush2.bf16.msra.mxu0 0
    %350 = vmatprep.mubr.bf16.mxu0 0
    %351 = vmatmul.mubr.bf16.gmra.mxu0 %v160
    %v352 = vpop.f32.mrf.mxu0
    %v353 = vadd.f32 %v121, %v352
    %v354 = vpop.f32.mrf.mxu0
    %v355 = vpop.f32.mrf.mxu0
    %v356 = vpop.f32.mrf.mxu0
    %357 = vdwg.mxu0
    %v362 = vunpack.c.l.b16 %v74
    %v363 = vunpack.c.l.b16 %v75
    %v364 = vunpack.c.l.b16 %v76
    %v365 = vunpack.c.l.b16 %v77
    %v366 = vpack.c.b16 %v363, %v362
    %v367 = vpack.c.b16 %v365, %v364
    %v371 = vsel %vm158, %v57, 0
    %373 = vmatprep.subr.bf16.mxu0 0
    %374 = vmatpush1.bf16.msra.mxu0 0
    %375 = vmatprep.subr.bf16.mxu0 0
    %376 = vmatpush1.bf16.msra.mxu0 0
    %377 = vmatprep.subr.bf16.mxu0 0
    %378 = vmatpush1.bf16.msra.mxu0 0
    %379 = vmatprep.subr.bf16.mxu0 0
    %380 = vmatpush1.bf16.msra.mxu0 0
    %381 = vmatprep.subr.bf16.mxu0 0
    %382 = vmatpush1.bf16.msra.mxu0 0
    %383 = vmatprep.subr.bf16.mxu0 0
    %384 = vmatpush1.bf16.msra.mxu0 0
    %385 = vmatprep.subr.bf16.mxu0 0
    %386 = vmatpush1.bf16.msra.mxu0 %v367
    %387 = vmatprep.subr.bf16.mxu0 0
    %388 = vmatpush1.bf16.msra.mxu0 %v366
    %389 = vmatprep.subr.bf16.mxu0 0
    %390 = vmatpush2.bf16.msra.mxu0 0
    %391 = vmatprep.subr.bf16.mxu0 0
    %392 = vmatpush2.bf16.msra.mxu0 0
    %393 = vmatprep.subr.bf16.mxu0 0
    %394 = vmatpush2.bf16.msra.mxu0 0
    %395 = vmatprep.subr.bf16.mxu0 0
    %396 = vmatpush2.bf16.msra.mxu0 0
    %397 = vmatprep.subr.bf16.mxu0 0
    %398 = vmatpush2.bf16.msra.mxu0 0
    %399 = vmatprep.subr.bf16.mxu0 0
    %400 = vmatpush2.bf16.msra.mxu0 0
    %401 = vmatprep.subr.bf16.mxu0 0
    %402 = vmatpush2.bf16.msra.mxu0 0
    %403 = vmatprep.subr.bf16.mxu0 0
    %404 = vmatpush2.bf16.msra.mxu0 0
    %405 = vmatprep.mubr.bf16.mxu0 0
    %406 = vmatmul.mubr.bf16.gmra.mxu0 %v371
    %v407 = vpop.f32.mrf.mxu0
    %v408 = vadd.f32 %v125, %v407
    %v409 = vpop.f32.mrf.mxu0
    %v410 = vpop.f32.mrf.mxu0
    %v411 = vpop.f32.mrf.mxu0
    %412 = vdwg.mxu0
    %v417 = vunpack.c.l.b16 %v78
    %v418 = vunpack.c.l.b16 %v79
    %v419 = vunpack.c.l.b16 %v80
    %v420 = vunpack.c.l.b16 %v81
    %v421 = vpack.c.b16 %v418, %v417
    %v422 = vpack.c.b16 %v420, %v419
    %425 = vmatprep.subr.bf16.mxu0 0
    %426 = vmatpush1.bf16.msra.mxu0 0
    %427 = vmatprep.subr.bf16.mxu0 0
    %428 = vmatpush1.bf16.msra.mxu0 0
    %429 = vmatprep.subr.bf16.mxu0 0
    %430 = vmatpush1.bf16.msra.mxu0 0
    %431 = vmatprep.subr.bf16.mxu0 0
    %432 = vmatpush1.bf16.msra.mxu0 0
    %433 = vmatprep.subr.bf16.mxu0 0
    %434 = vmatpush1.bf16.msra.mxu0 0
    %435 = vmatprep.subr.bf16.mxu0 0
    %436 = vmatpush1.bf16.msra.mxu0 0
    %437 = vmatprep.subr.bf16.mxu0 0
    %438 = vmatpush1.bf16.msra.mxu0 %v422
    %439 = vmatprep.subr.bf16.mxu0 0
    %440 = vmatpush1.bf16.msra.mxu0 %v421
    %441 = vmatprep.subr.bf16.mxu0 0
    %442 = vmatpush2.bf16.msra.mxu0 0
    %443 = vmatprep.subr.bf16.mxu0 0
    %444 = vmatpush2.bf16.msra.mxu0 0
    %445 = vmatprep.subr.bf16.mxu0 0
    %446 = vmatpush2.bf16.msra.mxu0 0
    %447 = vmatprep.subr.bf16.mxu0 0
    %448 = vmatpush2.bf16.msra.mxu0 0
    %449 = vmatprep.subr.bf16.mxu0 0
    %450 = vmatpush2.bf16.msra.mxu0 0
    %451 = vmatprep.subr.bf16.mxu0 0
    %452 = vmatpush2.bf16.msra.mxu0 0
    %453 = vmatprep.subr.bf16.mxu0 0
    %454 = vmatpush2.bf16.msra.mxu0 0
    %455 = vmatprep.subr.bf16.mxu0 0
    %456 = vmatpush2.bf16.msra.mxu0 0
    %457 = vmatprep.mubr.bf16.mxu0 0
    %458 = vmatmul.mubr.bf16.gmra.mxu0 %v371
    %v459 = vpop.f32.mrf.mxu0
    %v460 = vadd.f32 %v129, %v459
    %v461 = vpop.f32.mrf.mxu0
    %v462 = vpop.f32.mrf.mxu0
    %v463 = vpop.f32.mrf.mxu0
    %464 = vdwg.mxu0
    %v469 = vunpack.c.l.b16 %v82
    %v470 = vunpack.c.l.b16 %v83
    %v471 = vunpack.c.l.b16 %v84
    %v472 = vunpack.c.l.b16 %v85
    %v473 = vpack.c.b16 %v470, %v469
    %v474 = vpack.c.b16 %v472, %v471
    %477 = vmatprep.subr.bf16.mxu0 0
    %478 = vmatpush1.bf16.msra.mxu0 0
    %479 = vmatprep.subr.bf16.mxu0 0
    %480 = vmatpush1.bf16.msra.mxu0 0
    %481 = vmatprep.subr.bf16.mxu0 0
    %482 = vmatpush1.bf16.msra.mxu0 0
    %483 = vmatprep.subr.bf16.mxu0 0
    %484 = vmatpush1.bf16.msra.mxu0 0
    %485 = vmatprep.subr.bf16.mxu0 0
    %486 = vmatpush1.bf16.msra.mxu0 0
    %487 = vmatprep.subr.bf16.mxu0 0
    %488 = vmatpush1.bf16.msra.mxu0 0
    %489 = vmatprep.subr.bf16.mxu0 0
    %490 = vmatpush1.bf16.msra.mxu0 %v474
    %491 = vmatprep.subr.bf16.mxu0 0
    %492 = vmatpush1.bf16.msra.mxu0 %v473
    %493 = vmatprep.subr.bf16.mxu0 0
    %494 = vmatpush2.bf16.msra.mxu0 0
    %495 = vmatprep.subr.bf16.mxu0 0
    %496 = vmatpush2.bf16.msra.mxu0 0
    %497 = vmatprep.subr.bf16.mxu0 0
    %498 = vmatpush2.bf16.msra.mxu0 0
    %499 = vmatprep.subr.bf16.mxu0 0
    %500 = vmatpush2.bf16.msra.mxu0 0
    %501 = vmatprep.subr.bf16.mxu0 0
    %502 = vmatpush2.bf16.msra.mxu0 0
    %503 = vmatprep.subr.bf16.mxu0 0
    %504 = vmatpush2.bf16.msra.mxu0 0
    %505 = vmatprep.subr.bf16.mxu0 0
    %506 = vmatpush2.bf16.msra.mxu0 0
    %507 = vmatprep.subr.bf16.mxu0 0
    %508 = vmatpush2.bf16.msra.mxu0 0
    %509 = vmatprep.mubr.bf16.mxu0 0
    %510 = vmatmul.mubr.bf16.gmra.mxu0 %v371
    %v511 = vpop.f32.mrf.mxu0
    %v512 = vadd.f32 %v133, %v511
    %v513 = vpop.f32.mrf.mxu0
    %v514 = vpop.f32.mrf.mxu0
    %v515 = vpop.f32.mrf.mxu0
    %516 = vdwg.mxu0
    %v521 = vunpack.c.l.b16 %v86
    %v522 = vunpack.c.l.b16 %v87
    %v523 = vunpack.c.l.b16 %v88
    %v524 = vunpack.c.l.b16 %v89
    %v525 = vpack.c.b16 %v522, %v521
    %v526 = vpack.c.b16 %v524, %v523
    %529 = vmatprep.subr.bf16.mxu0 0
    %530 = vmatpush1.bf16.msra.mxu0 0
    %531 = vmatprep.subr.bf16.mxu0 0
    %532 = vmatpush1.bf16.msra.mxu0 0
    %533 = vmatprep.subr.bf16.mxu0 0
    %534 = vmatpush1.bf16.msra.mxu0 0
    %535 = vmatprep.subr.bf16.mxu0 0
    %536 = vmatpush1.bf16.msra.mxu0 0
    %537 = vmatprep.subr.bf16.mxu0 0
    %538 = vmatpush1.bf16.msra.mxu0 0
    %539 = vmatprep.subr.bf16.mxu0 0
    %540 = vmatpush1.bf16.msra.mxu0 0
    %541 = vmatprep.subr.bf16.mxu0 0
    %542 = vmatpush1.bf16.msra.mxu0 %v526
    %543 = vmatprep.subr.bf16.mxu0 0
    %544 = vmatpush1.bf16.msra.mxu0 %v525
    %545 = vmatprep.subr.bf16.mxu0 0
    %546 = vmatpush2.bf16.msra.mxu0 0
    %547 = vmatprep.subr.bf16.mxu0 0
    %548 = vmatpush2.bf16.msra.mxu0 0
    %549 = vmatprep.subr.bf16.mxu0 0
    %550 = vmatpush2.bf16.msra.mxu0 0
    %551 = vmatprep.subr.bf16.mxu0 0
    %552 = vmatpush2.bf16.msra.mxu0 0
    %553 = vmatprep.subr.bf16.mxu0 0
    %554 = vmatpush2.bf16.msra.mxu0 0
    %555 = vmatprep.subr.bf16.mxu0 0
    %556 = vmatpush2.bf16.msra.mxu0 0
    %557 = vmatprep.subr.bf16.mxu0 0
    %558 = vmatpush2.bf16.msra.mxu0 0
    %559 = vmatprep.subr.bf16.mxu0 0
    %560 = vmatpush2.bf16.msra.mxu0 0
    %561 = vmatprep.mubr.bf16.mxu0 0
    %562 = vmatmul.mubr.bf16.gmra.mxu0 %v371
    %v563 = vpop.f32.mrf.mxu0
    %v564 = vadd.f32 %v137, %v563
    %v565 = vpop.f32.mrf.mxu0
    %v566 = vpop.f32.mrf.mxu0
    %v567 = vpop.f32.mrf.mxu0
    %568 = vdwg.mxu0
    %v569 = vpack.c.bf16 %v197, %v197
    %v570 = vpack.c.bf16 %v249, %v249
    %v571 = vpack.c.bf16 %v301, %v301
    %v572 = vpack.c.bf16 %v353, %v353
    %v573 = vpack.c.bf16 %v408, %v408
    %v574 = vpack.c.bf16 %v460, %v460
    %v575 = vpack.c.bf16 %v512, %v512
    %v576 = vpack.c.bf16 %v564, %v564
    %578 = vrot.lane.b32.xlu0 %v569, 120
    %v579 = vpop.permute.xlu0 %578
    %vm580 = vcmask 64512
    %v582 = vsel %vm580, %v569, 0
    %v585 = vsel %vm580, %v579, 0
    %587 = vmatprep.subr.bf16.mxu0 0
    %588 = vmatpush1.bf16.xpose.msra.mxu0 0
    %589 = vmatprep.subr.bf16.mxu0 0
    %590 = vmatpush1.bf16.xpose.msra.mxu0 0
    %591 = vmatprep.subr.bf16.mxu0 0
    %592 = vmatpush1.bf16.xpose.msra.mxu0 0
    %593 = vmatprep.subr.bf16.mxu0 0
    %594 = vmatpush1.bf16.xpose.msra.mxu0 0
    %595 = vmatprep.subr.bf16.mxu0 0
    %596 = vmatpush1.bf16.xpose.msra.mxu0 0
    %597 = vmatprep.subr.bf16.mxu0 0
    %598 = vmatpush1.bf16.xpose.msra.mxu0 0
    %599 = vmatprep.subr.bf16.mxu0 0
    %600 = vmatpush1.bf16.xpose.msra.mxu0 0
    %601 = vmatprep.subr.bf16.mxu0 0
    %602 = vmatpush1.bf16.xpose.msra.mxu0 %v585
    %603 = vmatprep.subr.bf16.mxu0 0
    %604 = vmatpush2.bf16.xpose.msra.mxu0 0
    %605 = vmatprep.subr.bf16.mxu0 0
    %606 = vmatpush2.bf16.xpose.msra.mxu0 0
    %607 = vmatprep.subr.bf16.mxu0 0
    %608 = vmatpush2.bf16.xpose.msra.mxu0 0
    %609 = vmatprep.subr.bf16.mxu0 0
    %610 = vmatpush2.bf16.xpose.msra.mxu0 0
    %611 = vmatprep.subr.bf16.mxu0 0
    %612 = vmatpush2.bf16.xpose.msra.mxu0 0
    %613 = vmatprep.subr.bf16.mxu0 0
    %614 = vmatpush2.bf16.xpose.msra.mxu0 0
    %615 = vmatprep.subr.bf16.mxu0 0
    %616 = vmatpush2.bf16.xpose.msra.mxu0 0
    %617 = vmatprep.subr.bf16.mxu0 0
    %618 = vmatpush2.bf16.xpose.msra.mxu0 0
    %619 = vmatprep.mubr.bf16.mxu0 0
    %620 = vmatmul.mubr.bf16.gmra.mxu0 %v582
    %v621 = vpop.f32.mrf.mxu0
    %v622 = vadd.f32 0.0, %v621
    %v623 = vpop.f32.mrf.mxu0
    %v624 = vpop.f32.mrf.mxu0
    %v625 = vpop.f32.mrf.mxu0
    %626 = vdwg.mxu0
    %628 = vrot.lane.b32.xlu0 %v570, 120
    %v629 = vpop.permute.xlu0 %628
    %v631 = vsel %vm580, %v570, 0
    %v634 = vsel %vm580, %v629, 0
    %636 = vmatprep.subr.bf16.mxu0 0
    %637 = vmatpush1.bf16.xpose.msra.mxu0 0
    %638 = vmatprep.subr.bf16.mxu0 0
    %639 = vmatpush1.bf16.xpose.msra.mxu0 0
    %640 = vmatprep.subr.bf16.mxu0 0
    %641 = vmatpush1.bf16.xpose.msra.mxu0 0
    %642 = vmatprep.subr.bf16.mxu0 0
    %643 = vmatpush1.bf16.xpose.msra.mxu0 0
    %644 = vmatprep.subr.bf16.mxu0 0
    %645 = vmatpush1.bf16.xpose.msra.mxu0 0
    %646 = vmatprep.subr.bf16.mxu0 0
    %647 = vmatpush1.bf16.xpose.msra.mxu0 0
    %648 = vmatprep.subr.bf16.mxu0 0
    %649 = vmatpush1.bf16.xpose.msra.mxu0 0
    %650 = vmatprep.subr.bf16.mxu0 0
    %651 = vmatpush1.bf16.xpose.msra.mxu0 %v634
    %652 = vmatprep.subr.bf16.mxu0 0
    %653 = vmatpush2.bf16.xpose.msra.mxu0 0
    %654 = vmatprep.subr.bf16.mxu0 0
    %655 = vmatpush2.bf16.xpose.msra.mxu0 0
    %656 = vmatprep.subr.bf16.mxu0 0
    %657 = vmatpush2.bf16.xpose.msra.mxu0 0
    %658 = vmatprep.subr.bf16.mxu0 0
    %659 = vmatpush2.bf16.xpose.msra.mxu0 0
    %660 = vmatprep.subr.bf16.mxu0 0
    %661 = vmatpush2.bf16.xpose.msra.mxu0 0
    %662 = vmatprep.subr.bf16.mxu0 0
    %663 = vmatpush2.bf16.xpose.msra.mxu0 0
    %664 = vmatprep.subr.bf16.mxu0 0
    %665 = vmatpush2.bf16.xpose.msra.mxu0 0
    %666 = vmatprep.subr.bf16.mxu0 0
    %667 = vmatpush2.bf16.xpose.msra.mxu0 0
    %668 = vmatprep.mubr.bf16.mxu0 0
    %669 = vmatmul.mubr.bf16.gmra.mxu0 %v631
    %v670 = vpop.f32.mrf.mxu0
    %v671 = vadd.f32 0.0, %v670
    %v672 = vpop.f32.mrf.mxu0
    %v673 = vpop.f32.mrf.mxu0
    %v674 = vpop.f32.mrf.mxu0
    %675 = vdwg.mxu0
    %677 = vrot.lane.b32.xlu0 %v571, 120
    %v678 = vpop.permute.xlu0 %677
    %v680 = vsel %vm580, %v571, 0
    %v683 = vsel %vm580, %v678, 0
    %685 = vmatprep.subr.bf16.mxu0 0
    %686 = vmatpush1.bf16.xpose.msra.mxu0 0
    %687 = vmatprep.subr.bf16.mxu0 0
    %688 = vmatpush1.bf16.xpose.msra.mxu0 0
    %689 = vmatprep.subr.bf16.mxu0 0
    %690 = vmatpush1.bf16.xpose.msra.mxu0 0
    %691 = vmatprep.subr.bf16.mxu0 0
    %692 = vmatpush1.bf16.xpose.msra.mxu0 0
    %693 = vmatprep.subr.bf16.mxu0 0
    %694 = vmatpush1.bf16.xpose.msra.mxu0 0
    %695 = vmatprep.subr.bf16.mxu0 0
    %696 = vmatpush1.bf16.xpose.msra.mxu0 0
    %697 = vmatprep.subr.bf16.mxu0 0
    %698 = vmatpush1.bf16.xpose.msra.mxu0 0
    %699 = vmatprep.subr.bf16.mxu0 0
    %700 = vmatpush1.bf16.xpose.msra.mxu0 %v683
    %701 = vmatprep.subr.bf16.mxu0 0
    %702 = vmatpush2.bf16.xpose.msra.mxu0 0
    %703 = vmatprep.subr.bf16.mxu0 0
    %704 = vmatpush2.bf16.xpose.msra.mxu0 0
    %705 = vmatprep.subr.bf16.mxu0 0
    %706 = vmatpush2.bf16.xpose.msra.mxu0 0
    %707 = vmatprep.subr.bf16.mxu0 0
    %708 = vmatpush2.bf16.xpose.msra.mxu0 0
    %709 = vmatprep.subr.bf16.mxu0 0
    %710 = vmatpush2.bf16.xpose.msra.mxu0 0
    %711 = vmatprep.subr.bf16.mxu0 0
    %712 = vmatpush2.bf16.xpose.msra.mxu0 0
    %713 = vmatprep.subr.bf16.mxu0 0
    %714 = vmatpush2.bf16.xpose.msra.mxu0 0
    %715 = vmatprep.subr.bf16.mxu0 0
    %716 = vmatpush2.bf16.xpose.msra.mxu0 0
    %717 = vmatprep.mubr.bf16.mxu0 0
    %718 = vmatmul.mubr.bf16.gmra.mxu0 %v680
    %v719 = vpop.f32.mrf.mxu0
    %v720 = vadd.f32 0.0, %v719
    %v721 = vpop.f32.mrf.mxu0
    %v722 = vpop.f32.mrf.mxu0
    %v723 = vpop.f32.mrf.mxu0
    %724 = vdwg.mxu0
    %726 = vrot.lane.b32.xlu0 %v572, 120
    %v727 = vpop.permute.xlu0 %726
    %v729 = vsel %vm580, %v572, 0
    %v732 = vsel %vm580, %v727, 0
    %734 = vmatprep.subr.bf16.mxu0 0
    %735 = vmatpush1.bf16.xpose.msra.mxu0 0
    %736 = vmatprep.subr.bf16.mxu0 0
    %737 = vmatpush1.bf16.xpose.msra.mxu0 0
    %738 = vmatprep.subr.bf16.mxu0 0
    %739 = vmatpush1.bf16.xpose.msra.mxu0 0
    %740 = vmatprep.subr.bf16.mxu0 0
    %741 = vmatpush1.bf16.xpose.msra.mxu0 0
    %742 = vmatprep.subr.bf16.mxu0 0
    %743 = vmatpush1.bf16.xpose.msra.mxu0 0
    %744 = vmatprep.subr.bf16.mxu0 0
    %745 = vmatpush1.bf16.xpose.msra.mxu0 0
    %746 = vmatprep.subr.bf16.mxu0 0
    %747 = vmatpush1.bf16.xpose.msra.mxu0 0
    %748 = vmatprep.subr.bf16.mxu0 0
    %749 = vmatpush1.bf16.xpose.msra.mxu0 %v732
    %750 = vmatprep.subr.bf16.mxu0 0
    %751 = vmatpush2.bf16.xpose.msra.mxu0 0
    %752 = vmatprep.subr.bf16.mxu0 0
    %753 = vmatpush2.bf16.xpose.msra.mxu0 0
    %754 = vmatprep.subr.bf16.mxu0 0
    %755 = vmatpush2.bf16.xpose.msra.mxu0 0
    %756 = vmatprep.subr.bf16.mxu0 0
    %757 = vmatpush2.bf16.xpose.msra.mxu0 0
    %758 = vmatprep.subr.bf16.mxu0 0
    %759 = vmatpush2.bf16.xpose.msra.mxu0 0
    %760 = vmatprep.subr.bf16.mxu0 0
    %761 = vmatpush2.bf16.xpose.msra.mxu0 0
    %762 = vmatprep.subr.bf16.mxu0 0
    %763 = vmatpush2.bf16.xpose.msra.mxu0 0
    %764 = vmatprep.subr.bf16.mxu0 0
    %765 = vmatpush2.bf16.xpose.msra.mxu0 0
    %766 = vmatprep.mubr.bf16.mxu0 0
    %767 = vmatmul.mubr.bf16.gmra.mxu0 %v729
    %v768 = vpop.f32.mrf.mxu0
    %v769 = vadd.f32 0.0, %v768
    %v770 = vpop.f32.mrf.mxu0
    %v771 = vpop.f32.mrf.mxu0
    %v772 = vpop.f32.mrf.mxu0
    %773 = vdwg.mxu0
    %775 = vrot.lane.b32.xlu0 %v573, 120
    %v776 = vpop.permute.xlu0 %775
    %v778 = vsel %vm580, %v573, 0
    %v781 = vsel %vm580, %v776, 0
    %783 = vmatprep.subr.bf16.mxu0 0
    %784 = vmatpush1.bf16.xpose.msra.mxu0 0
    %785 = vmatprep.subr.bf16.mxu0 0
    %786 = vmatpush1.bf16.xpose.msra.mxu0 0
    %787 = vmatprep.subr.bf16.mxu0 0
    %788 = vmatpush1.bf16.xpose.msra.mxu0 0
    %789 = vmatprep.subr.bf16.mxu0 0
    %790 = vmatpush1.bf16.xpose.msra.mxu0 0
    %791 = vmatprep.subr.bf16.mxu0 0
    %792 = vmatpush1.bf16.xpose.msra.mxu0 0
    %793 = vmatprep.subr.bf16.mxu0 0
    %794 = vmatpush1.bf16.xpose.msra.mxu0 0
    %795 = vmatprep.subr.bf16.mxu0 0
    %796 = vmatpush1.bf16.xpose.msra.mxu0 0
    %797 = vmatprep.subr.bf16.mxu0 0
    %798 = vmatpush1.bf16.xpose.msra.mxu0 %v781
    %799 = vmatprep.subr.bf16.mxu0 0
    %800 = vmatpush2.bf16.xpose.msra.mxu0 0
    %801 = vmatprep.subr.bf16.mxu0 0
    %802 = vmatpush2.bf16.xpose.msra.mxu0 0
    %803 = vmatprep.subr.bf16.mxu0 0
    %804 = vmatpush2.bf16.xpose.msra.mxu0 0
    %805 = vmatprep.subr.bf16.mxu0 0
    %806 = vmatpush2.bf16.xpose.msra.mxu0 0
    %807 = vmatprep.subr.bf16.mxu0 0
    %808 = vmatpush2.bf16.xpose.msra.mxu0 0
    %809 = vmatprep.subr.bf16.mxu0 0
    %810 = vmatpush2.bf16.xpose.msra.mxu0 0
    %811 = vmatprep.subr.bf16.mxu0 0
    %812 = vmatpush2.bf16.xpose.msra.mxu0 0
    %813 = vmatprep.subr.bf16.mxu0 0
    %814 = vmatpush2.bf16.xpose.msra.mxu0 0
    %815 = vmatprep.mubr.bf16.mxu0 0
    %816 = vmatmul.mubr.bf16.gmra.mxu0 %v778
    %v817 = vpop.f32.mrf.mxu0
    %v818 = vadd.f32 0.0, %v817
    %v819 = vpop.f32.mrf.mxu0
    %v820 = vpop.f32.mrf.mxu0
    %v821 = vpop.f32.mrf.mxu0
    %822 = vdwg.mxu0
    %824 = vrot.lane.b32.xlu0 %v574, 120
    %v825 = vpop.permute.xlu0 %824
    %v827 = vsel %vm580, %v574, 0
    %v830 = vsel %vm580, %v825, 0
    %832 = vmatprep.subr.bf16.mxu0 0
    %833 = vmatpush1.bf16.xpose.msra.mxu0 0
    %834 = vmatprep.subr.bf16.mxu0 0
    %835 = vmatpush1.bf16.xpose.msra.mxu0 0
    %836 = vmatprep.subr.bf16.mxu0 0
    %837 = vmatpush1.bf16.xpose.msra.mxu0 0
    %838 = vmatprep.subr.bf16.mxu0 0
    %839 = vmatpush1.bf16.xpose.msra.mxu0 0
    %840 = vmatprep.subr.bf16.mxu0 0
    %841 = vmatpush1.bf16.xpose.msra.mxu0 0
    %842 = vmatprep.subr.bf16.mxu0 0
    %843 = vmatpush1.bf16.xpose.msra.mxu0 0
    %844 = vmatprep.subr.bf16.mxu0 0
    %845 = vmatpush1.bf16.xpose.msra.mxu0 0
    %846 = vmatprep.subr.bf16.mxu0 0
    %847 = vmatpush1.bf16.xpose.msra.mxu0 %v830
    %848 = vmatprep.subr.bf16.mxu0 0
    %849 = vmatpush2.bf16.xpose.msra.mxu0 0
    %850 = vmatprep.subr.bf16.mxu0 0
    %851 = vmatpush2.bf16.xpose.msra.mxu0 0
    %852 = vmatprep.subr.bf16.mxu0 0
    %853 = vmatpush2.bf16.xpose.msra.mxu0 0
    %854 = vmatprep.subr.bf16.mxu0 0
    %855 = vmatpush2.bf16.xpose.msra.mxu0 0
    %856 = vmatprep.subr.bf16.mxu0 0
    %857 = vmatpush2.bf16.xpose.msra.mxu0 0
    %858 = vmatprep.subr.bf16.mxu0 0
    %859 = vmatpush2.bf16.xpose.msra.mxu0 0
    %860 = vmatprep.subr.bf16.mxu0 0
    %861 = vmatpush2.bf16.xpose.msra.mxu0 0
    %862 = vmatprep.subr.bf16.mxu0 0
    %863 = vmatpush2.bf16.xpose.msra.mxu0 0
    %864 = vmatprep.mubr.bf16.mxu0 0
    %865 = vmatmul.mubr.bf16.gmra.mxu0 %v827
    %v866 = vpop.f32.mrf.mxu0
    %v867 = vadd.f32 0.0, %v866
    %v868 = vpop.f32.mrf.mxu0
    %v869 = vpop.f32.mrf.mxu0
    %v870 = vpop.f32.mrf.mxu0
    %871 = vdwg.mxu0
    %873 = vrot.lane.b32.xlu0 %v575, 120
    %v874 = vpop.permute.xlu0 %873
    %v876 = vsel %vm580, %v575, 0
    %v879 = vsel %vm580, %v874, 0
    %881 = vmatprep.subr.bf16.mxu0 0
    %882 = vmatpush1.bf16.xpose.msra.mxu0 0
    %883 = vmatprep.subr.bf16.mxu0 0
    %884 = vmatpush1.bf16.xpose.msra.mxu0 0
    %885 = vmatprep.subr.bf16.mxu0 0
    %886 = vmatpush1.bf16.xpose.msra.mxu0 0
    %887 = vmatprep.subr.bf16.mxu0 0
    %888 = vmatpush1.bf16.xpose.msra.mxu0 0
    %889 = vmatprep.subr.bf16.mxu0 0
    %890 = vmatpush1.bf16.xpose.msra.mxu0 0
    %891 = vmatprep.subr.bf16.mxu0 0
    %892 = vmatpush1.bf16.xpose.msra.mxu0 0
    %893 = vmatprep.subr.bf16.mxu0 0
    %894 = vmatpush1.bf16.xpose.msra.mxu0 0
    %895 = vmatprep.subr.bf16.mxu0 0
    %896 = vmatpush1.bf16.xpose.msra.mxu0 %v879
    %897 = vmatprep.subr.bf16.mxu0 0
    %898 = vmatpush2.bf16.xpose.msra.mxu0 0
    %899 = vmatprep.subr.bf16.mxu0 0
    %900 = vmatpush2.bf16.xpose.msra.mxu0 0
    %901 = vmatprep.subr.bf16.mxu0 0
    %902 = vmatpush2.bf16.xpose.msra.mxu0 0
    %903 = vmatprep.subr.bf16.mxu0 0
    %904 = vmatpush2.bf16.xpose.msra.mxu0 0
    %905 = vmatprep.subr.bf16.mxu0 0
    %906 = vmatpush2.bf16.xpose.msra.mxu0 0
    %907 = vmatprep.subr.bf16.mxu0 0
    %908 = vmatpush2.bf16.xpose.msra.mxu0 0
    %909 = vmatprep.subr.bf16.mxu0 0
    %910 = vmatpush2.bf16.xpose.msra.mxu0 0
    %911 = vmatprep.subr.bf16.mxu0 0
    %912 = vmatpush2.bf16.xpose.msra.mxu0 0
    %913 = vmatprep.mubr.bf16.mxu0 0
    %914 = vmatmul.mubr.bf16.gmra.mxu0 %v876
    %v915 = vpop.f32.mrf.mxu0
    %v916 = vadd.f32 0.0, %v915
    %v917 = vpop.f32.mrf.mxu0
    %v918 = vpop.f32.mrf.mxu0
    %v919 = vpop.f32.mrf.mxu0
    %920 = vdwg.mxu0
    %922 = vrot.lane.b32.xlu0 %v576, 120
    %v923 = vpop.permute.xlu0 %922
    %v925 = vsel %vm580, %v576, 0
    %v928 = vsel %vm580, %v923, 0
    %930 = vmatprep.subr.bf16.mxu0 0
    %931 = vmatpush1.bf16.xpose.msra.mxu0 0
    %932 = vmatprep.subr.bf16.mxu0 0
    %933 = vmatpush1.bf16.xpose.msra.mxu0 0
    %934 = vmatprep.subr.bf16.mxu0 0
    %935 = vmatpush1.bf16.xpose.msra.mxu0 0
    %936 = vmatprep.subr.bf16.mxu0 0
    %937 = vmatpush1.bf16.xpose.msra.mxu0 0
    %938 = vmatprep.subr.bf16.mxu0 0
    %939 = vmatpush1.bf16.xpose.msra.mxu0 0
    %940 = vmatprep.subr.bf16.mxu0 0
    %941 = vmatpush1.bf16.xpose.msra.mxu0 0
    %942 = vmatprep.subr.bf16.mxu0 0
    %943 = vmatpush1.bf16.xpose.msra.mxu0 0
    %944 = vmatprep.subr.bf16.mxu0 0
    %945 = vmatpush1.bf16.xpose.msra.mxu0 %v928
    %946 = vmatprep.subr.bf16.mxu0 0
    %947 = vmatpush2.bf16.xpose.msra.mxu0 0
    %948 = vmatprep.subr.bf16.mxu0 0
    %949 = vmatpush2.bf16.xpose.msra.mxu0 0
    %950 = vmatprep.subr.bf16.mxu0 0
    %951 = vmatpush2.bf16.xpose.msra.mxu0 0
    %952 = vmatprep.subr.bf16.mxu0 0
    %953 = vmatpush2.bf16.xpose.msra.mxu0 0
    %954 = vmatprep.subr.bf16.mxu0 0
    %955 = vmatpush2.bf16.xpose.msra.mxu0 0
    %956 = vmatprep.subr.bf16.mxu0 0
    %957 = vmatpush2.bf16.xpose.msra.mxu0 0
    %958 = vmatprep.subr.bf16.mxu0 0
    %959 = vmatpush2.bf16.xpose.msra.mxu0 0
    %960 = vmatprep.subr.bf16.mxu0 0
    %961 = vmatpush2.bf16.xpose.msra.mxu0 0
    %962 = vmatprep.mubr.bf16.mxu0 0
    %963 = vmatmul.mubr.bf16.gmra.mxu0 %v925
    %v964 = vpop.f32.mrf.mxu0
    %v965 = vadd.f32 0.0, %v964
    %v966 = vpop.f32.mrf.mxu0
    %v967 = vpop.f32.mrf.mxu0
    %v968 = vpop.f32.mrf.mxu0
    %969 = vdwg.mxu0
    %v970 = vmul.f32 %v622, 0.35355338
    %v971 = vmul.f32 %v671, 0.35355338
    %v972 = vmul.f32 %v720, 0.35355338
    %v973 = vmul.f32 %v769, 0.35355338
    %v974 = vmul.f32 %v818, 0.35355338
    %v975 = vmul.f32 %v867, 0.35355338
    %v976 = vmul.f32 %v916, 0.35355338
    %v977 = vmul.f32 %v965, 0.35355338
    %v978 = vsel %vm580, %v970, -inf
    %979 = vmax.xlane.f32.xlu0 %v978
    %v980 = vpop.xlane.xlu0 %979
    %v981 = vsel %vm580, %v971, -inf
    %982 = vmax.xlane.f32.xlu0 %v981
    %v983 = vpop.xlane.xlu0 %982
    %v984 = vsel %vm580, %v972, -inf
    %985 = vmax.xlane.f32.xlu0 %v984
    %v986 = vpop.xlane.xlu0 %985
    %v987 = vsel %vm580, %v973, -inf
    %988 = vmax.xlane.f32.xlu0 %v987
    %v989 = vpop.xlane.xlu0 %988
    %v990 = vsel %vm580, %v974, -inf
    %991 = vmax.xlane.f32.xlu0 %v990
    %v992 = vpop.xlane.xlu0 %991
    %v993 = vsel %vm580, %v975, -inf
    %994 = vmax.xlane.f32.xlu0 %v993
    %v995 = vpop.xlane.xlu0 %994
    %v996 = vsel %vm580, %v976, -inf
    %997 = vmax.xlane.f32.xlu0 %v996
    %v998 = vpop.xlane.xlu0 %997
    %v999 = vsel %vm580, %v977, -inf
    %1000 = vmax.xlane.f32.xlu0 %v999
    %v1001 = vpop.xlane.xlu0 %1000
    %v1002 = vsub.f32 %v970, %v980
    %v1003 = vsub.f32 %v971, %v983
    %v1004 = vsub.f32 %v972, %v986
    %v1005 = vsub.f32 %v973, %v989
    %v1006 = vsub.f32 %v974, %v992
    %v1007 = vsub.f32 %v975, %v995
    %v1008 = vsub.f32 %v976, %v998
    %v1009 = vsub.f32 %v977, %v1001
    %v1010 = vmul.f32 %v1002, 1.442695
    %v1011 = vpow.pop %v1010
    %v1012 = vmul.f32 %v1003, 1.442695
    %v1013 = vpow.pop %v1012
    %v1014 = vmul.f32 %v1004, 1.442695
    %v1015 = vpow.pop %v1014
    %v1016 = vmul.f32 %v1005, 1.442695
    %v1017 = vpow.pop %v1016
    %v1018 = vmul.f32 %v1006, 1.442695
    %v1019 = vpow.pop %v1018
    %v1020 = vmul.f32 %v1007, 1.442695
    %v1021 = vpow.pop %v1020
    %v1022 = vmul.f32 %v1008, 1.442695
    %v1023 = vpow.pop %v1022
    %v1024 = vmul.f32 %v1009, 1.442695
    %v1025 = vpow.pop %v1024
    %v1026 = vsel %vm580, %v1011, 0.0
    %1027 = vadd.xlane.f32.xlu0 %v1026
    %v1028 = vpop.xlane.xlu0 %1027
    %v1029 = vsel %vm580, %v1013, 0.0
    %1030 = vadd.xlane.f32.xlu0 %v1029
    %v1031 = vpop.xlane.xlu0 %1030
    %v1032 = vsel %vm580, %v1015, 0.0
    %1033 = vadd.xlane.f32.xlu0 %v1032
    %v1034 = vpop.xlane.xlu0 %1033
    %v1035 = vsel %vm580, %v1017, 0.0
    %1036 = vadd.xlane.f32.xlu0 %v1035
    %v1037 = vpop.xlane.xlu0 %1036
    %v1038 = vsel %vm580, %v1019, 0.0
    %1039 = vadd.xlane.f32.xlu0 %v1038
    %v1040 = vpop.xlane.xlu0 %1039
    %v1041 = vsel %vm580, %v1021, 0.0
    %1042 = vadd.xlane.f32.xlu0 %v1041
    %v1043 = vpop.xlane.xlu0 %1042
    %v1044 = vsel %vm580, %v1023, 0.0
    %1045 = vadd.xlane.f32.xlu0 %v1044
    %v1046 = vpop.xlane.xlu0 %1045
    %v1047 = vsel %vm580, %v1025, 0.0
    %1048 = vadd.xlane.f32.xlu0 %v1047
    %v1049 = vpop.xlane.xlu0 %1048
    %v1050 = vrcp.pop %v1028
    %v1051 = vrcp.pop %v1031
    %v1052 = vrcp.pop %v1034
    %v1053 = vrcp.pop %v1037
    %v1054 = vrcp.pop %v1040
    %v1055 = vrcp.pop %v1043
    %v1056 = vrcp.pop %v1046
    %v1057 = vrcp.pop %v1049
    %v1058 = vmul.f32 %v1011, %v1050
    %v1059 = vmul.f32 %v1013, %v1051
    %v1060 = vmul.f32 %v1015, %v1052
    %v1061 = vmul.f32 %v1017, %v1053
    %v1062 = vmul.f32 %v1019, %v1054
    %v1063 = vmul.f32 %v1021, %v1055
    %v1064 = vmul.f32 %v1023, %v1056
    %v1065 = vmul.f32 %v1025, %v1057
    %v1066 = vpack.c.bf16 %v1058, %v1058
    %v1067 = vpack.c.bf16 %v1059, %v1059
    %v1068 = vpack.c.bf16 %v1060, %v1060
    %v1069 = vpack.c.bf16 %v1061, %v1061
    %v1070 = vpack.c.bf16 %v1062, %v1062
    %v1071 = vpack.c.bf16 %v1063, %v1063
    %v1072 = vpack.c.bf16 %v1064, %v1064
    %v1073 = vpack.c.bf16 %v1065, %v1065
    %1074 = vrot.lane.b32.xlu0 %v569, 112
    %v1075 = vpop.permute.xlu0 %1074
    %v1077 = vsel %vm580, %v1066, 0
    %vm1079 = vcmask 1043456
    %v1081 = vsel %vm1079, %v1075, 0
    %1083 = vmatprep.subr.bf16.mxu0 0
    %1084 = vmatpush1.bf16.msra.mxu0 0
    %1085 = vmatprep.subr.bf16.mxu0 0
    %1086 = vmatpush1.bf16.msra.mxu0 0
    %1087 = vmatprep.subr.bf16.mxu0 0
    %1088 = vmatpush1.bf16.msra.mxu0 0
    %1089 = vmatprep.subr.bf16.mxu0 0
    %1090 = vmatpush1.bf16.msra.mxu0 0
    %1091 = vmatprep.subr.bf16.mxu0 0
    %1092 = vmatpush1.bf16.msra.mxu0 0
    %1093 = vmatprep.subr.bf16.mxu0 0
    %1094 = vmatpush1.bf16.msra.mxu0 0
    %1095 = vmatprep.subr.bf16.mxu0 0
    %1096 = vmatpush1.bf16.msra.mxu0 0
    %1097 = vmatprep.subr.bf16.mxu0 0
    %1098 = vmatpush1.bf16.msra.mxu0 %v1081
    %1099 = vmatprep.subr.bf16.mxu0 0
    %1100 = vmatpush2.bf16.msra.mxu0 0
    %1101 = vmatprep.subr.bf16.mxu0 0
    %1102 = vmatpush2.bf16.msra.mxu0 0
    %1103 = vmatprep.subr.bf16.mxu0 0
    %1104 = vmatpush2.bf16.msra.mxu0 0
    %1105 = vmatprep.subr.bf16.mxu0 0
    %1106 = vmatpush2.bf16.msra.mxu0 0
    %1107 = vmatprep.subr.bf16.mxu0 0
    %1108 = vmatpush2.bf16.msra.mxu0 0
    %1109 = vmatprep.subr.bf16.mxu0 0
    %1110 = vmatpush2.bf16.msra.mxu0 0
    %1111 = vmatprep.subr.bf16.mxu0 0
    %1112 = vmatpush2.bf16.msra.mxu0 0
    %1113 = vmatprep.subr.bf16.mxu0 0
    %1114 = vmatpush2.bf16.msra.mxu0 0
    %1115 = vmatprep.mubr.bf16.mxu0 0
    %1116 = vmatmul.mubr.bf16.gmra.mxu0 %v1077
    %v1117 = vpop.f32.mrf.mxu0
    %v1118 = vadd.f32 0.0, %v1117
    %v1119 = vpop.f32.mrf.mxu0
    %v1120 = vpop.f32.mrf.mxu0
    %v1121 = vpop.f32.mrf.mxu0
    %1122 = vdwg.mxu0
    %1123 = vrot.lane.b32.xlu0 %v570, 112
    %v1124 = vpop.permute.xlu0 %1123
    %v1126 = vsel %vm580, %v1067, 0
    %v1129 = vsel %vm1079, %v1124, 0
    %1131 = vmatprep.subr.bf16.mxu0 0
    %1132 = vmatpush1.bf16.msra.mxu0 0
    %1133 = vmatprep.subr.bf16.mxu0 0
    %1134 = vmatpush1.bf16.msra.mxu0 0
    %1135 = vmatprep.subr.bf16.mxu0 0
    %1136 = vmatpush1.bf16.msra.mxu0 0
    %1137 = vmatprep.subr.bf16.mxu0 0
    %1138 = vmatpush1.bf16.msra.mxu0 0
    %1139 = vmatprep.subr.bf16.mxu0 0
    %1140 = vmatpush1.bf16.msra.mxu0 0
    %1141 = vmatprep.subr.bf16.mxu0 0
    %1142 = vmatpush1.bf16.msra.mxu0 0
    %1143 = vmatprep.subr.bf16.mxu0 0
    %1144 = vmatpush1.bf16.msra.mxu0 0
    %1145 = vmatprep.subr.bf16.mxu0 0
    %1146 = vmatpush1.bf16.msra.mxu0 %v1129
    %1147 = vmatprep.subr.bf16.mxu0 0
    %1148 = vmatpush2.bf16.msra.mxu0 0
    %1149 = vmatprep.subr.bf16.mxu0 0
    %1150 = vmatpush2.bf16.msra.mxu0 0
    %1151 = vmatprep.subr.bf16.mxu0 0
    %1152 = vmatpush2.bf16.msra.mxu0 0
    %1153 = vmatprep.subr.bf16.mxu0 0
    %1154 = vmatpush2.bf16.msra.mxu0 0
    %1155 = vmatprep.subr.bf16.mxu0 0
    %1156 = vmatpush2.bf16.msra.mxu0 0
    %1157 = vmatprep.subr.bf16.mxu0 0
    %1158 = vmatpush2.bf16.msra.mxu0 0
    %1159 = vmatprep.subr.bf16.mxu0 0
    %1160 = vmatpush2.bf16.msra.mxu0 0
    %1161 = vmatprep.subr.bf16.mxu0 0
    %1162 = vmatpush2.bf16.msra.mxu0 0
    %1163 = vmatprep.mubr.bf16.mxu0 0
    %1164 = vmatmul.mubr.bf16.gmra.mxu0 %v1126
    %v1165 = vpop.f32.mrf.mxu0
    %v1166 = vadd.f32 0.0, %v1165
    %v1167 = vpop.f32.mrf.mxu0
    %v1168 = vpop.f32.mrf.mxu0
    %v1169 = vpop.f32.mrf.mxu0
    %1170 = vdwg.mxu0
    %1171 = vrot.lane.b32.xlu0 %v571, 112
    %v1172 = vpop.permute.xlu0 %1171
    %v1174 = vsel %vm580, %v1068, 0
    %v1177 = vsel %vm1079, %v1172, 0
    %1179 = vmatprep.subr.bf16.mxu0 0
    %1180 = vmatpush1.bf16.msra.mxu0 0
    %1181 = vmatprep.subr.bf16.mxu0 0
    %1182 = vmatpush1.bf16.msra.mxu0 0
    %1183 = vmatprep.subr.bf16.mxu0 0
    %1184 = vmatpush1.bf16.msra.mxu0 0
    %1185 = vmatprep.subr.bf16.mxu0 0
    %1186 = vmatpush1.bf16.msra.mxu0 0
    %1187 = vmatprep.subr.bf16.mxu0 0
    %1188 = vmatpush1.bf16.msra.mxu0 0
    %1189 = vmatprep.subr.bf16.mxu0 0
    %1190 = vmatpush1.bf16.msra.mxu0 0
    %1191 = vmatprep.subr.bf16.mxu0 0
    %1192 = vmatpush1.bf16.msra.mxu0 0
    %1193 = vmatprep.subr.bf16.mxu0 0
    %1194 = vmatpush1.bf16.msra.mxu0 %v1177
    %1195 = vmatprep.subr.bf16.mxu0 0
    %1196 = vmatpush2.bf16.msra.mxu0 0
    %1197 = vmatprep.subr.bf16.mxu0 0
    %1198 = vmatpush2.bf16.msra.mxu0 0
    %1199 = vmatprep.subr.bf16.mxu0 0
    %1200 = vmatpush2.bf16.msra.mxu0 0
    %1201 = vmatprep.subr.bf16.mxu0 0
    %1202 = vmatpush2.bf16.msra.mxu0 0
    %1203 = vmatprep.subr.bf16.mxu0 0
    %1204 = vmatpush2.bf16.msra.mxu0 0
    %1205 = vmatprep.subr.bf16.mxu0 0
    %1206 = vmatpush2.bf16.msra.mxu0 0
    %1207 = vmatprep.subr.bf16.mxu0 0
    %1208 = vmatpush2.bf16.msra.mxu0 0
    %1209 = vmatprep.subr.bf16.mxu0 0
    %1210 = vmatpush2.bf16.msra.mxu0 0
    %1211 = vmatprep.mubr.bf16.mxu0 0
    %1212 = vmatmul.mubr.bf16.gmra.mxu0 %v1174
    %v1213 = vpop.f32.mrf.mxu0
    %v1214 = vadd.f32 0.0, %v1213
    %v1215 = vpop.f32.mrf.mxu0
    %v1216 = vpop.f32.mrf.mxu0
    %v1217 = vpop.f32.mrf.mxu0
    %1218 = vdwg.mxu0
    %1219 = vrot.lane.b32.xlu0 %v572, 112
    %v1220 = vpop.permute.xlu0 %1219
    %v1222 = vsel %vm580, %v1069, 0
    %v1225 = vsel %vm1079, %v1220, 0
    %1227 = vmatprep.subr.bf16.mxu0 0
    %1228 = vmatpush1.bf16.msra.mxu0 0
    %1229 = vmatprep.subr.bf16.mxu0 0
    %1230 = vmatpush1.bf16.msra.mxu0 0
    %1231 = vmatprep.subr.bf16.mxu0 0
    %1232 = vmatpush1.bf16.msra.mxu0 0
    %1233 = vmatprep.subr.bf16.mxu0 0
    %1234 = vmatpush1.bf16.msra.mxu0 0
    %1235 = vmatprep.subr.bf16.mxu0 0
    %1236 = vmatpush1.bf16.msra.mxu0 0
    %1237 = vmatprep.subr.bf16.mxu0 0
    %1238 = vmatpush1.bf16.msra.mxu0 0
    %1239 = vmatprep.subr.bf16.mxu0 0
    %1240 = vmatpush1.bf16.msra.mxu0 0
    %1241 = vmatprep.subr.bf16.mxu0 0
    %1242 = vmatpush1.bf16.msra.mxu0 %v1225
    %1243 = vmatprep.subr.bf16.mxu0 0
    %1244 = vmatpush2.bf16.msra.mxu0 0
    %1245 = vmatprep.subr.bf16.mxu0 0
    %1246 = vmatpush2.bf16.msra.mxu0 0
    %1247 = vmatprep.subr.bf16.mxu0 0
    %1248 = vmatpush2.bf16.msra.mxu0 0
    %1249 = vmatprep.subr.bf16.mxu0 0
    %1250 = vmatpush2.bf16.msra.mxu0 0
    %1251 = vmatprep.subr.bf16.mxu0 0
    %1252 = vmatpush2.bf16.msra.mxu0 0
    %1253 = vmatprep.subr.bf16.mxu0 0
    %1254 = vmatpush2.bf16.msra.mxu0 0
    %1255 = vmatprep.subr.bf16.mxu0 0
    %1256 = vmatpush2.bf16.msra.mxu0 0
    %1257 = vmatprep.subr.bf16.mxu0 0
    %1258 = vmatpush2.bf16.msra.mxu0 0
    %1259 = vmatprep.mubr.bf16.mxu0 0
    %1260 = vmatmul.mubr.bf16.gmra.mxu0 %v1222
    %v1261 = vpop.f32.mrf.mxu0
    %v1262 = vadd.f32 0.0, %v1261
    %v1263 = vpop.f32.mrf.mxu0
    %v1264 = vpop.f32.mrf.mxu0
    %v1265 = vpop.f32.mrf.mxu0
    %1266 = vdwg.mxu0
    %1267 = vrot.lane.b32.xlu0 %v573, 112
    %v1268 = vpop.permute.xlu0 %1267
    %v1270 = vsel %vm580, %v1070, 0
    %v1273 = vsel %vm1079, %v1268, 0
    %1275 = vmatprep.subr.bf16.mxu0 0
    %1276 = vmatpush1.bf16.msra.mxu0 0
    %1277 = vmatprep.subr.bf16.mxu0 0
    %1278 = vmatpush1.bf16.msra.mxu0 0
    %1279 = vmatprep.subr.bf16.mxu0 0
    %1280 = vmatpush1.bf16.msra.mxu0 0
    %1281 = vmatprep.subr.bf16.mxu0 0
    %1282 = vmatpush1.bf16.msra.mxu0 0
    %1283 = vmatprep.subr.bf16.mxu0 0
    %1284 = vmatpush1.bf16.msra.mxu0 0
    %1285 = vmatprep.subr.bf16.mxu0 0
    %1286 = vmatpush1.bf16.msra.mxu0 0
    %1287 = vmatprep.subr.bf16.mxu0 0
    %1288 = vmatpush1.bf16.msra.mxu0 0
    %1289 = vmatprep.subr.bf16.mxu0 0
    %1290 = vmatpush1.bf16.msra.mxu0 %v1273
    %1291 = vmatprep.subr.bf16.mxu0 0
    %1292 = vmatpush2.bf16.msra.mxu0 0
    %1293 = vmatprep.subr.bf16.mxu0 0
    %1294 = vmatpush2.bf16.msra.mxu0 0
    %1295 = vmatprep.subr.bf16.mxu0 0
    %1296 = vmatpush2.bf16.msra.mxu0 0
    %1297 = vmatprep.subr.bf16.mxu0 0
    %1298 = vmatpush2.bf16.msra.mxu0 0
    %1299 = vmatprep.subr.bf16.mxu0 0
    %1300 = vmatpush2.bf16.msra.mxu0 0
    %1301 = vmatprep.subr.bf16.mxu0 0
    %1302 = vmatpush2.bf16.msra.mxu0 0
    %1303 = vmatprep.subr.bf16.mxu0 0
    %1304 = vmatpush2.bf16.msra.mxu0 0
    %1305 = vmatprep.subr.bf16.mxu0 0
    %1306 = vmatpush2.bf16.msra.mxu0 0
    %1307 = vmatprep.mubr.bf16.mxu0 0
    %1308 = vmatmul.mubr.bf16.gmra.mxu0 %v1270
    %v1309 = vpop.f32.mrf.mxu0
    %v1310 = vadd.f32 0.0, %v1309
    %v1311 = vpop.f32.mrf.mxu0
    %v1312 = vpop.f32.mrf.mxu0
    %v1313 = vpop.f32.mrf.mxu0
    %1314 = vdwg.mxu0
    %1315 = vrot.lane.b32.xlu0 %v574, 112
    %v1316 = vpop.permute.xlu0 %1315
    %v1318 = vsel %vm580, %v1071, 0
    %v1321 = vsel %vm1079, %v1316, 0
    %1323 = vmatprep.subr.bf16.mxu0 0
    %1324 = vmatpush1.bf16.msra.mxu0 0
    %1325 = vmatprep.subr.bf16.mxu0 0
    %1326 = vmatpush1.bf16.msra.mxu0 0
    %1327 = vmatprep.subr.bf16.mxu0 0
    %1328 = vmatpush1.bf16.msra.mxu0 0
    %1329 = vmatprep.subr.bf16.mxu0 0
    %1330 = vmatpush1.bf16.msra.mxu0 0
    %1331 = vmatprep.subr.bf16.mxu0 0
    %1332 = vmatpush1.bf16.msra.mxu0 0
    %1333 = vmatprep.subr.bf16.mxu0 0
    %1334 = vmatpush1.bf16.msra.mxu0 0
    %1335 = vmatprep.subr.bf16.mxu0 0
    %1336 = vmatpush1.bf16.msra.mxu0 0
    %1337 = vmatprep.subr.bf16.mxu0 0
    %1338 = vmatpush1.bf16.msra.mxu0 %v1321
    %1339 = vmatprep.subr.bf16.mxu0 0
    %1340 = vmatpush2.bf16.msra.mxu0 0
    %1341 = vmatprep.subr.bf16.mxu0 0
    %1342 = vmatpush2.bf16.msra.mxu0 0
    %1343 = vmatprep.subr.bf16.mxu0 0
    %1344 = vmatpush2.bf16.msra.mxu0 0
    %1345 = vmatprep.subr.bf16.mxu0 0
    %1346 = vmatpush2.bf16.msra.mxu0 0
    %1347 = vmatprep.subr.bf16.mxu0 0
    %1348 = vmatpush2.bf16.msra.mxu0 0
    %1349 = vmatprep.subr.bf16.mxu0 0
    %1350 = vmatpush2.bf16.msra.mxu0 0
    %1351 = vmatprep.subr.bf16.mxu0 0
    %1352 = vmatpush2.bf16.msra.mxu0 0
    %1353 = vmatprep.subr.bf16.mxu0 0
    %1354 = vmatpush2.bf16.msra.mxu0 0
    %1355 = vmatprep.mubr.bf16.mxu0 0
    %1356 = vmatmul.mubr.bf16.gmra.mxu0 %v1318
    %v1357 = vpop.f32.mrf.mxu0
    %v1358 = vadd.f32 0.0, %v1357
    %v1359 = vpop.f32.mrf.mxu0
    %v1360 = vpop.f32.mrf.mxu0
    %v1361 = vpop.f32.mrf.mxu0
    %1362 = vdwg.mxu0
    %1363 = vrot.lane.b32.xlu0 %v575, 112
    %v1364 = vpop.permute.xlu0 %1363
    %v1366 = vsel %vm580, %v1072, 0
    %v1369 = vsel %vm1079, %v1364, 0
    %1371 = vmatprep.subr.bf16.mxu0 0
    %1372 = vmatpush1.bf16.msra.mxu0 0
    %1373 = vmatprep.subr.bf16.mxu0 0
    %1374 = vmatpush1.bf16.msra.mxu0 0
    %1375 = vmatprep.subr.bf16.mxu0 0
    %1376 = vmatpush1.bf16.msra.mxu0 0
    %1377 = vmatprep.subr.bf16.mxu0 0
    %1378 = vmatpush1.bf16.msra.mxu0 0
    %1379 = vmatprep.subr.bf16.mxu0 0
    %1380 = vmatpush1.bf16.msra.mxu0 0
    %1381 = vmatprep.subr.bf16.mxu0 0
    %1382 = vmatpush1.bf16.msra.mxu0 0
    %1383 = vmatprep.subr.bf16.mxu0 0
    %1384 = vmatpush1.bf16.msra.mxu0 0
    %1385 = vmatprep.subr.bf16.mxu0 0
    %1386 = vmatpush1.bf16.msra.mxu0 %v1369
    %1387 = vmatprep.subr.bf16.mxu0 0
    %1388 = vmatpush2.bf16.msra.mxu0 0
    %1389 = vmatprep.subr.bf16.mxu0 0
    %1390 = vmatpush2.bf16.msra.mxu0 0
    %1391 = vmatprep.subr.bf16.mxu0 0
    %1392 = vmatpush2.bf16.msra.mxu0 0
    %1393 = vmatprep.subr.bf16.mxu0 0
    %1394 = vmatpush2.bf16.msra.mxu0 0
    %1395 = vmatprep.subr.bf16.mxu0 0
    %1396 = vmatpush2.bf16.msra.mxu0 0
    %1397 = vmatprep.subr.bf16.mxu0 0
    %1398 = vmatpush2.bf16.msra.mxu0 0
    %1399 = vmatprep.subr.bf16.mxu0 0
    %1400 = vmatpush2.bf16.msra.mxu0 0
    %1401 = vmatprep.subr.bf16.mxu0 0
    %1402 = vmatpush2.bf16.msra.mxu0 0
    %1403 = vmatprep.mubr.bf16.mxu0 0
    %1404 = vmatmul.mubr.bf16.gmra.mxu0 %v1366
    %v1405 = vpop.f32.mrf.mxu0
    %v1406 = vadd.f32 0.0, %v1405
    %v1407 = vpop.f32.mrf.mxu0
    %v1408 = vpop.f32.mrf.mxu0
    %v1409 = vpop.f32.mrf.mxu0
    %1410 = vdwg.mxu0
    %1411 = vrot.lane.b32.xlu0 %v576, 112
    %v1412 = vpop.permute.xlu0 %1411
    %v1414 = vsel %vm580, %v1073, 0
    %v1417 = vsel %vm1079, %v1412, 0
    %1419 = vmatprep.subr.bf16.mxu0 0
    %1420 = vmatpush1.bf16.msra.mxu0 0
    %1421 = vmatprep.subr.bf16.mxu0 0
    %1422 = vmatpush1.bf16.msra.mxu0 0
    %1423 = vmatprep.subr.bf16.mxu0 0
    %1424 = vmatpush1.bf16.msra.mxu0 0
    %1425 = vmatprep.subr.bf16.mxu0 0
    %1426 = vmatpush1.bf16.msra.mxu0 0
    %1427 = vmatprep.subr.bf16.mxu0 0
    %1428 = vmatpush1.bf16.msra.mxu0 0
    %1429 = vmatprep.subr.bf16.mxu0 0
    %1430 = vmatpush1.bf16.msra.mxu0 0
    %1431 = vmatprep.subr.bf16.mxu0 0
    %1432 = vmatpush1.bf16.msra.mxu0 0
    %1433 = vmatprep.subr.bf16.mxu0 0
    %1434 = vmatpush1.bf16.msra.mxu0 %v1417
    %1435 = vmatprep.subr.bf16.mxu0 0
    %1436 = vmatpush2.bf16.msra.mxu0 0
    %1437 = vmatprep.subr.bf16.mxu0 0
    %1438 = vmatpush2.bf16.msra.mxu0 0
    %1439 = vmatprep.subr.bf16.mxu0 0
    %1440 = vmatpush2.bf16.msra.mxu0 0
    %1441 = vmatprep.subr.bf16.mxu0 0
    %1442 = vmatpush2.bf16.msra.mxu0 0
    %1443 = vmatprep.subr.bf16.mxu0 0
    %1444 = vmatpush2.bf16.msra.mxu0 0
    %1445 = vmatprep.subr.bf16.mxu0 0
    %1446 = vmatpush2.bf16.msra.mxu0 0
    %1447 = vmatprep.subr.bf16.mxu0 0
    %1448 = vmatpush2.bf16.msra.mxu0 0
    %1449 = vmatprep.subr.bf16.mxu0 0
    %1450 = vmatpush2.bf16.msra.mxu0 0
    %1451 = vmatprep.mubr.bf16.mxu0 0
    %1452 = vmatmul.mubr.bf16.gmra.mxu0 %v1414
    %v1453 = vpop.f32.mrf.mxu0
    %v1454 = vadd.f32 0.0, %v1453
    %v1455 = vpop.f32.mrf.mxu0
    %v1456 = vpop.f32.mrf.mxu0
    %v1457 = vpop.f32.mrf.mxu0
    %1458 = vdwg.mxu0
    %v1459 = vpack.c.bf16 %v1118, %v1118
    %v1460 = vpack.c.bf16 %v1166, %v1166
    %v1461 = vpack.c.bf16 %v1214, %v1214
    %v1462 = vpack.c.bf16 %v1262, %v1262
    %v1463 = vpack.c.bf16 %v1310, %v1310
    %v1464 = vpack.c.bf16 %v1358, %v1358
    %v1465 = vpack.c.bf16 %v1406, %v1406
    %v1466 = vpack.c.bf16 %v1454, %v1454
    %v1467 = vld [vmem:[%s3] sm:$0xf]
    %v1468 = vld [vmem:[%s3 + $0x4] sm:$0xf]
    %v1469 = vld [vmem:[%s3 + $0x8] sm:$0xf]
    %v1470 = vld [vmem:[%s3 + $0xc] sm:$0xf]
    %v1471 = vld [vmem:[%s3 + $0x10] sm:$0xf]
    %v1472 = vld [vmem:[%s3 + $0x14] sm:$0xf]
    %v1473 = vld [vmem:[%s3 + $0x18] sm:$0xf]
    %v1474 = vld [vmem:[%s3 + $0x1c] sm:$0xf]
    %v1476 = vsel %vm580, %v1459, 0
    %v1479 = vsel %vm1079, %v1467, 0
    %1481 = vmatprep.subr.bf16.mxu0 0
    %1482 = vmatpush1.bf16.msra.mxu0 0
    %1483 = vmatprep.subr.bf16.mxu0 0
    %1484 = vmatpush1.bf16.msra.mxu0 0
    %1485 = vmatprep.subr.bf16.mxu0 0
    %1486 = vmatpush1.bf16.msra.mxu0 0
    %1487 = vmatprep.subr.bf16.mxu0 0
    %1488 = vmatpush1.bf16.msra.mxu0 0
    %1489 = vmatprep.subr.bf16.mxu0 0
    %1490 = vmatpush1.bf16.msra.mxu0 0
    %1491 = vmatprep.subr.bf16.mxu0 0
    %1492 = vmatpush1.bf16.msra.mxu0 0
    %1493 = vmatprep.subr.bf16.mxu0 0
    %1494 = vmatpush1.bf16.msra.mxu0 0
    %1495 = vmatprep.subr.bf16.mxu0 0
    %1496 = vmatpush1.bf16.msra.mxu0 %v1479
    %1497 = vmatprep.subr.bf16.mxu0 0
    %1498 = vmatpush2.bf16.msra.mxu0 0
    %1499 = vmatprep.subr.bf16.mxu0 0
    %1500 = vmatpush2.bf16.msra.mxu0 0
    %1501 = vmatprep.subr.bf16.mxu0 0
    %1502 = vmatpush2.bf16.msra.mxu0 0
    %1503 = vmatprep.subr.bf16.mxu0 0
    %1504 = vmatpush2.bf16.msra.mxu0 0
    %1505 = vmatprep.subr.bf16.mxu0 0
    %1506 = vmatpush2.bf16.msra.mxu0 0
    %1507 = vmatprep.subr.bf16.mxu0 0
    %1508 = vmatpush2.bf16.msra.mxu0 0
    %1509 = vmatprep.subr.bf16.mxu0 0
    %1510 = vmatpush2.bf16.msra.mxu0 0
    %1511 = vmatprep.subr.bf16.mxu0 0
    %1512 = vmatpush2.bf16.msra.mxu0 0
    %1513 = vmatprep.mubr.bf16.mxu0 0
    %1514 = vmatmul.mubr.bf16.gmra.mxu0 %v1476
    %v1515 = vpop.f32.mrf.mxu0
    %v1516 = vadd.f32 0.0, %v1515
    %v1517 = vpop.f32.mrf.mxu0
    %v1518 = vpop.f32.mrf.mxu0
    %v1519 = vpop.f32.mrf.mxu0
    %1520 = vdwg.mxu0
    %v1522 = vsel %vm580, %v1460, 0
    %v1525 = vsel %vm1079, %v1468, 0
    %1527 = vmatprep.subr.bf16.mxu0 0
    %1528 = vmatpush1.bf16.msra.mxu0 0
    %1529 = vmatprep.subr.bf16.mxu0 0
    %1530 = vmatpush1.bf16.msra.mxu0 0
    %1531 = vmatprep.subr.bf16.mxu0 0
    %1532 = vmatpush1.bf16.msra.mxu0 0
    %1533 = vmatprep.subr.bf16.mxu0 0
    %1534 = vmatpush1.bf16.msra.mxu0 0
    %1535 = vmatprep.subr.bf16.mxu0 0
    %1536 = vmatpush1.bf16.msra.mxu0 0
    %1537 = vmatprep.subr.bf16.mxu0 0
    %1538 = vmatpush1.bf16.msra.mxu0 0
    %1539 = vmatprep.subr.bf16.mxu0 0
    %1540 = vmatpush1.bf16.msra.mxu0 0
    %1541 = vmatprep.subr.bf16.mxu0 0
    %1542 = vmatpush1.bf16.msra.mxu0 %v1525
    %1543 = vmatprep.subr.bf16.mxu0 0
    %1544 = vmatpush2.bf16.msra.mxu0 0
    %1545 = vmatprep.subr.bf16.mxu0 0
    %1546 = vmatpush2.bf16.msra.mxu0 0
    %1547 = vmatprep.subr.bf16.mxu0 0
    %1548 = vmatpush2.bf16.msra.mxu0 0
    %1549 = vmatprep.subr.bf16.mxu0 0
    %1550 = vmatpush2.bf16.msra.mxu0 0
    %1551 = vmatprep.subr.bf16.mxu0 0
    %1552 = vmatpush2.bf16.msra.mxu0 0
    %1553 = vmatprep.subr.bf16.mxu0 0
    %1554 = vmatpush2.bf16.msra.mxu0 0
    %1555 = vmatprep.subr.bf16.mxu0 0
    %1556 = vmatpush2.bf16.msra.mxu0 0
    %1557 = vmatprep.subr.bf16.mxu0 0
    %1558 = vmatpush2.bf16.msra.mxu0 0
    %1559 = vmatprep.mubr.bf16.mxu0 0
    %1560 = vmatmul.mubr.bf16.gmra.mxu0 %v1522
    %v1561 = vpop.f32.mrf.mxu0
    %v1562 = vadd.f32 0.0, %v1561
    %v1563 = vpop.f32.mrf.mxu0
    %v1564 = vpop.f32.mrf.mxu0
    %v1565 = vpop.f32.mrf.mxu0
    %1566 = vdwg.mxu0
    %v1568 = vsel %vm580, %v1461, 0
    %v1571 = vsel %vm1079, %v1469, 0
    %1573 = vmatprep.subr.bf16.mxu0 0
    %1574 = vmatpush1.bf16.msra.mxu0 0
    %1575 = vmatprep.subr.bf16.mxu0 0
    %1576 = vmatpush1.bf16.msra.mxu0 0
    %1577 = vmatprep.subr.bf16.mxu0 0
    %1578 = vmatpush1.bf16.msra.mxu0 0
    %1579 = vmatprep.subr.bf16.mxu0 0
    %1580 = vmatpush1.bf16.msra.mxu0 0
    %1581 = vmatprep.subr.bf16.mxu0 0
    %1582 = vmatpush1.bf16.msra.mxu0 0
    %1583 = vmatprep.subr.bf16.mxu0 0
    %1584 = vmatpush1.bf16.msra.mxu0 0
    %1585 = vmatprep.subr.bf16.mxu0 0
    %1586 = vmatpush1.bf16.msra.mxu0 0
    %1587 = vmatprep.subr.bf16.mxu0 0
    %1588 = vmatpush1.bf16.msra.mxu0 %v1571
    %1589 = vmatprep.subr.bf16.mxu0 0
    %1590 = vmatpush2.bf16.msra.mxu0 0
    %1591 = vmatprep.subr.bf16.mxu0 0
    %1592 = vmatpush2.bf16.msra.mxu0 0
    %1593 = vmatprep.subr.bf16.mxu0 0
    %1594 = vmatpush2.bf16.msra.mxu0 0
    %1595 = vmatprep.subr.bf16.mxu0 0
    %1596 = vmatpush2.bf16.msra.mxu0 0
    %1597 = vmatprep.subr.bf16.mxu0 0
    %1598 = vmatpush2.bf16.msra.mxu0 0
    %1599 = vmatprep.subr.bf16.mxu0 0
    %1600 = vmatpush2.bf16.msra.mxu0 0
    %1601 = vmatprep.subr.bf16.mxu0 0
    %1602 = vmatpush2.bf16.msra.mxu0 0
    %1603 = vmatprep.subr.bf16.mxu0 0
    %1604 = vmatpush2.bf16.msra.mxu0 0
    %1605 = vmatprep.mubr.bf16.mxu0 0
    %1606 = vmatmul.mubr.bf16.gmra.mxu0 %v1568
    %v1607 = vpop.f32.mrf.mxu0
    %v1608 = vadd.f32 0.0, %v1607
    %v1609 = vpop.f32.mrf.mxu0
    %v1610 = vpop.f32.mrf.mxu0
    %v1611 = vpop.f32.mrf.mxu0
    %1612 = vdwg.mxu0
    %v1614 = vsel %vm580, %v1462, 0
    %v1617 = vsel %vm1079, %v1470, 0
    %1619 = vmatprep.subr.bf16.mxu0 0
    %1620 = vmatpush1.bf16.msra.mxu0 0
    %1621 = vmatprep.subr.bf16.mxu0 0
    %1622 = vmatpush1.bf16.msra.mxu0 0
    %1623 = vmatprep.subr.bf16.mxu0 0
    %1624 = vmatpush1.bf16.msra.mxu0 0
    %1625 = vmatprep.subr.bf16.mxu0 0
    %1626 = vmatpush1.bf16.msra.mxu0 0
    %1627 = vmatprep.subr.bf16.mxu0 0
    %1628 = vmatpush1.bf16.msra.mxu0 0
    %1629 = vmatprep.subr.bf16.mxu0 0
    %1630 = vmatpush1.bf16.msra.mxu0 0
    %1631 = vmatprep.subr.bf16.mxu0 0
    %1632 = vmatpush1.bf16.msra.mxu0 0
    %1633 = vmatprep.subr.bf16.mxu0 0
    %1634 = vmatpush1.bf16.msra.mxu0 %v1617
    %1635 = vmatprep.subr.bf16.mxu0 0
    %1636 = vmatpush2.bf16.msra.mxu0 0
    %1637 = vmatprep.subr.bf16.mxu0 0
    %1638 = vmatpush2.bf16.msra.mxu0 0
    %1639 = vmatprep.subr.bf16.mxu0 0
    %1640 = vmatpush2.bf16.msra.mxu0 0
    %1641 = vmatprep.subr.bf16.mxu0 0
    %1642 = vmatpush2.bf16.msra.mxu0 0
    %1643 = vmatprep.subr.bf16.mxu0 0
    %1644 = vmatpush2.bf16.msra.mxu0 0
    %1645 = vmatprep.subr.bf16.mxu0 0
    %1646 = vmatpush2.bf16.msra.mxu0 0
    %1647 = vmatprep.subr.bf16.mxu0 0
    %1648 = vmatpush2.bf16.msra.mxu0 0
    %1649 = vmatprep.subr.bf16.mxu0 0
    %1650 = vmatpush2.bf16.msra.mxu0 0
    %1651 = vmatprep.mubr.bf16.mxu0 0
    %1652 = vmatmul.mubr.bf16.gmra.mxu0 %v1614
    %v1653 = vpop.f32.mrf.mxu0
    %v1654 = vadd.f32 0.0, %v1653
    %v1655 = vpop.f32.mrf.mxu0
    %v1656 = vpop.f32.mrf.mxu0
    %v1657 = vpop.f32.mrf.mxu0
    %1658 = vdwg.mxu0
    %v1660 = vsel %vm580, %v1463, 0
    %v1663 = vsel %vm1079, %v1471, 0
    %1665 = vmatprep.subr.bf16.mxu0 0
    %1666 = vmatpush1.bf16.msra.mxu0 0
    %1667 = vmatprep.subr.bf16.mxu0 0
    %1668 = vmatpush1.bf16.msra.mxu0 0
    %1669 = vmatprep.subr.bf16.mxu0 0
    %1670 = vmatpush1.bf16.msra.mxu0 0
    %1671 = vmatprep.subr.bf16.mxu0 0
    %1672 = vmatpush1.bf16.msra.mxu0 0
    %1673 = vmatprep.subr.bf16.mxu0 0
    %1674 = vmatpush1.bf16.msra.mxu0 0
    %1675 = vmatprep.subr.bf16.mxu0 0
    %1676 = vmatpush1.bf16.msra.mxu0 0
    %1677 = vmatprep.subr.bf16.mxu0 0
    %1678 = vmatpush1.bf16.msra.mxu0 0
    %1679 = vmatprep.subr.bf16.mxu0 0
    %1680 = vmatpush1.bf16.msra.mxu0 %v1663
    %1681 = vmatprep.subr.bf16.mxu0 0
    %1682 = vmatpush2.bf16.msra.mxu0 0
    %1683 = vmatprep.subr.bf16.mxu0 0
    %1684 = vmatpush2.bf16.msra.mxu0 0
    %1685 = vmatprep.subr.bf16.mxu0 0
    %1686 = vmatpush2.bf16.msra.mxu0 0
    %1687 = vmatprep.subr.bf16.mxu0 0
    %1688 = vmatpush2.bf16.msra.mxu0 0
    %1689 = vmatprep.subr.bf16.mxu0 0
    %1690 = vmatpush2.bf16.msra.mxu0 0
    %1691 = vmatprep.subr.bf16.mxu0 0
    %1692 = vmatpush2.bf16.msra.mxu0 0
    %1693 = vmatprep.subr.bf16.mxu0 0
    %1694 = vmatpush2.bf16.msra.mxu0 0
    %1695 = vmatprep.subr.bf16.mxu0 0
    %1696 = vmatpush2.bf16.msra.mxu0 0
    %1697 = vmatprep.mubr.bf16.mxu0 0
    %1698 = vmatmul.mubr.bf16.gmra.mxu0 %v1660
    %v1699 = vpop.f32.mrf.mxu0
    %v1700 = vadd.f32 0.0, %v1699
    %v1701 = vpop.f32.mrf.mxu0
    %v1702 = vpop.f32.mrf.mxu0
    %v1703 = vpop.f32.mrf.mxu0
    %1704 = vdwg.mxu0
    %v1706 = vsel %vm580, %v1464, 0
    %v1709 = vsel %vm1079, %v1472, 0
    %1711 = vmatprep.subr.bf16.mxu0 0
    %1712 = vmatpush1.bf16.msra.mxu0 0
    %1713 = vmatprep.subr.bf16.mxu0 0
    %1714 = vmatpush1.bf16.msra.mxu0 0
    %1715 = vmatprep.subr.bf16.mxu0 0
    %1716 = vmatpush1.bf16.msra.mxu0 0
    %1717 = vmatprep.subr.bf16.mxu0 0
    %1718 = vmatpush1.bf16.msra.mxu0 0
    %1719 = vmatprep.subr.bf16.mxu0 0
    %1720 = vmatpush1.bf16.msra.mxu0 0
    %1721 = vmatprep.subr.bf16.mxu0 0
    %1722 = vmatpush1.bf16.msra.mxu0 0
    %1723 = vmatprep.subr.bf16.mxu0 0
    %1724 = vmatpush1.bf16.msra.mxu0 0
    %1725 = vmatprep.subr.bf16.mxu0 0
    %1726 = vmatpush1.bf16.msra.mxu0 %v1709
    %1727 = vmatprep.subr.bf16.mxu0 0
    %1728 = vmatpush2.bf16.msra.mxu0 0
    %1729 = vmatprep.subr.bf16.mxu0 0
    %1730 = vmatpush2.bf16.msra.mxu0 0
    %1731 = vmatprep.subr.bf16.mxu0 0
    %1732 = vmatpush2.bf16.msra.mxu0 0
    %1733 = vmatprep.subr.bf16.mxu0 0
    %1734 = vmatpush2.bf16.msra.mxu0 0
    %1735 = vmatprep.subr.bf16.mxu0 0
    %1736 = vmatpush2.bf16.msra.mxu0 0
    %1737 = vmatprep.subr.bf16.mxu0 0
    %1738 = vmatpush2.bf16.msra.mxu0 0
    %1739 = vmatprep.subr.bf16.mxu0 0
    %1740 = vmatpush2.bf16.msra.mxu0 0
    %1741 = vmatprep.subr.bf16.mxu0 0
    %1742 = vmatpush2.bf16.msra.mxu0 0
    %1743 = vmatprep.mubr.bf16.mxu0 0
    %1744 = vmatmul.mubr.bf16.gmra.mxu0 %v1706
    %v1745 = vpop.f32.mrf.mxu0
    %v1746 = vadd.f32 0.0, %v1745
    %v1747 = vpop.f32.mrf.mxu0
    %v1748 = vpop.f32.mrf.mxu0
    %v1749 = vpop.f32.mrf.mxu0
    %1750 = vdwg.mxu0
    %v1752 = vsel %vm580, %v1465, 0
    %v1755 = vsel %vm1079, %v1473, 0
    %1757 = vmatprep.subr.bf16.mxu0 0
    %1758 = vmatpush1.bf16.msra.mxu0 0
    %1759 = vmatprep.subr.bf16.mxu0 0
    %1760 = vmatpush1.bf16.msra.mxu0 0
    %1761 = vmatprep.subr.bf16.mxu0 0
    %1762 = vmatpush1.bf16.msra.mxu0 0
    %1763 = vmatprep.subr.bf16.mxu0 0
    %1764 = vmatpush1.bf16.msra.mxu0 0
    %1765 = vmatprep.subr.bf16.mxu0 0
    %1766 = vmatpush1.bf16.msra.mxu0 0
    %1767 = vmatprep.subr.bf16.mxu0 0
    %1768 = vmatpush1.bf16.msra.mxu0 0
    %1769 = vmatprep.subr.bf16.mxu0 0
    %1770 = vmatpush1.bf16.msra.mxu0 0
    %1771 = vmatprep.subr.bf16.mxu0 0
    %1772 = vmatpush1.bf16.msra.mxu0 %v1755
    %1773 = vmatprep.subr.bf16.mxu0 0
    %1774 = vmatpush2.bf16.msra.mxu0 0
    %1775 = vmatprep.subr.bf16.mxu0 0
    %1776 = vmatpush2.bf16.msra.mxu0 0
    %1777 = vmatprep.subr.bf16.mxu0 0
    %1778 = vmatpush2.bf16.msra.mxu0 0
    %1779 = vmatprep.subr.bf16.mxu0 0
    %1780 = vmatpush2.bf16.msra.mxu0 0
    %1781 = vmatprep.subr.bf16.mxu0 0
    %1782 = vmatpush2.bf16.msra.mxu0 0
    %1783 = vmatprep.subr.bf16.mxu0 0
    %1784 = vmatpush2.bf16.msra.mxu0 0
    %1785 = vmatprep.subr.bf16.mxu0 0
    %1786 = vmatpush2.bf16.msra.mxu0 0
    %1787 = vmatprep.subr.bf16.mxu0 0
    %1788 = vmatpush2.bf16.msra.mxu0 0
    %1789 = vmatprep.mubr.bf16.mxu0 0
    %1790 = vmatmul.mubr.bf16.gmra.mxu0 %v1752
    %v1791 = vpop.f32.mrf.mxu0
    %v1792 = vadd.f32 0.0, %v1791
    %v1793 = vpop.f32.mrf.mxu0
    %v1794 = vpop.f32.mrf.mxu0
    %v1795 = vpop.f32.mrf.mxu0
    %1796 = vdwg.mxu0
    %v1798 = vsel %vm580, %v1466, 0
    %v1801 = vsel %vm1079, %v1474, 0
    %1803 = vmatprep.subr.bf16.mxu0 0
    %1804 = vmatpush1.bf16.msra.mxu0 0
    %1805 = vmatprep.subr.bf16.mxu0 0
    %1806 = vmatpush1.bf16.msra.mxu0 0
    %1807 = vmatprep.subr.bf16.mxu0 0
    %1808 = vmatpush1.bf16.msra.mxu0 0
    %1809 = vmatprep.subr.bf16.mxu0 0
    %1810 = vmatpush1.bf16.msra.mxu0 0
    %1811 = vmatprep.subr.bf16.mxu0 0
    %1812 = vmatpush1.bf16.msra.mxu0 0
    %1813 = vmatprep.subr.bf16.mxu0 0
    %1814 = vmatpush1.bf16.msra.mxu0 0
    %1815 = vmatprep.subr.bf16.mxu0 0
    %1816 = vmatpush1.bf16.msra.mxu0 0
    %1817 = vmatprep.subr.bf16.mxu0 0
    %1818 = vmatpush1.bf16.msra.mxu0 %v1801
    %1819 = vmatprep.subr.bf16.mxu0 0
    %1820 = vmatpush2.bf16.msra.mxu0 0
    %1821 = vmatprep.subr.bf16.mxu0 0
    %1822 = vmatpush2.bf16.msra.mxu0 0
    %1823 = vmatprep.subr.bf16.mxu0 0
    %1824 = vmatpush2.bf16.msra.mxu0 0
    %1825 = vmatprep.subr.bf16.mxu0 0
    %1826 = vmatpush2.bf16.msra.mxu0 0
    %1827 = vmatprep.subr.bf16.mxu0 0
    %1828 = vmatpush2.bf16.msra.mxu0 0
    %1829 = vmatprep.subr.bf16.mxu0 0
    %1830 = vmatpush2.bf16.msra.mxu0 0
    %1831 = vmatprep.subr.bf16.mxu0 0
    %1832 = vmatpush2.bf16.msra.mxu0 0
    %1833 = vmatprep.subr.bf16.mxu0 0
    %1834 = vmatpush2.bf16.msra.mxu0 0
    %1835 = vmatprep.mubr.bf16.mxu0 0
    %1836 = vmatmul.mubr.bf16.gmra.mxu0 %v1798
    %v1837 = vpop.f32.mrf.mxu0
    %v1838 = vadd.f32 0.0, %v1837
    %v1839 = vpop.f32.mrf.mxu0
    %v1840 = vpop.f32.mrf.mxu0
    %v1841 = vpop.f32.mrf.mxu0
    %1842 = vdwg.mxu0
    %v1843 = vadd.f32 %v1516, %v1562
    %v1844 = vadd.f32 %v1700, %v1746
    %v1845 = vadd.f32 %v1843, %v1608
    %v1846 = vadd.f32 %v1844, %v1792
    %v1847 = vadd.f32 %v1845, %v1654
    %v1848 = vadd.f32 %v1846, %v1838
    %v1849 = vld [vmem:[%s4] sm:$0x1]
    %v1851 = vlaneseq
    %v1852 = vshrl.u32 %v1851, 7
    %v1853 = vsub.s32 0, %v1852
    %v1854 = vrot.slane %v1849, %v1853
    %v1856 = vadd.f32 %v1847, %v1854
    %v1857 = vadd.f32 %v1848, %v1854
    %v1858 = vadd.f32 %v54, %v1856
    %v1859 = vadd.f32 %v55, %v1857
    %v1860 = vld [vmem:[%s5] sm:$0x1]
    %v1861 = vld [vmem:[%s6] sm:$0x1]
    %v1862 = vsel %vm158, %v1858, 0.0
    %1863 = vadd.xlane.f32.xlu0 %v1862
    %v1864 = vpop.xlane.xlu0 %1863
    %v1865 = vsel %vm158, %v1859, 0.0
    %1866 = vadd.xlane.f32.xlu0 %v1865
    %v1867 = vpop.xlane.xlu0 %1866
    %v1868 = vrcp.pop 32.0
    %v1869 = vmul.f32 %v1864, %v1868
    %v1870 = vmul.f32 %v1867, %v1868
    %v1871 = vsub.f32 %v1858, %v1869
    %v1872 = vsub.f32 %v1859, %v1870
    %v1873 = vmul.f32 %v1871, %v1871
    %v1874 = vmul.f32 %v1872, %v1872
    %v1875 = vsel %vm158, %v1873, 0.0
    %1876 = vadd.xlane.f32.xlu0 %v1875
    %v1877 = vpop.xlane.xlu0 %1876
    %v1878 = vsel %vm158, %v1874, 0.0
    %1879 = vadd.xlane.f32.xlu0 %v1878
    %v1880 = vpop.xlane.xlu0 %1879
    %v1881 = vmul.f32 %v1877, %v1868
    %v1882 = vmul.f32 %v1880, %v1868
    %v1883 = vadd.f32 %v1881, 1e-05
    %v1884 = vadd.f32 %v1882, 1e-05
    %v1885 = vrsqrt.pop %v1883
    %v1886 = vrsqrt.pop %v1884
    %v1887 = vmul.f32 %v1871, %v1885
    %v1888 = vmul.f32 %v1872, %v1886
    %v1890 = vlaneseq
    %v1891 = vshrl.u32 %v1890, 7
    %v1892 = vsub.s32 0, %v1891
    %v1893 = vrot.slane %v1860, %v1892
    %v1895 = vmul.f32 %v1887, %v1893
    %v1896 = vmul.f32 %v1888, %v1893
    %v1898 = vlaneseq
    %v1899 = vshrl.u32 %v1898, 7
    %v1900 = vsub.s32 0, %v1899
    %v1901 = vrot.slane %v1861, %v1900
    %v1903 = vadd.f32 %v1895, %v1901
    %v1904 = vadd.f32 %v1896, %v1901
    %v1905 = vpack.c.bf16 %v1904, %v1903
    %v1906 = vld [vmem:[%s9] sm:$0xf]
    %v1907 = vld [vmem:[%s9 + $0x4] sm:$0xf]
    %v1908 = vld [vmem:[%s9 + $0x8] sm:$0xf]
    %v1909 = vld [vmem:[%s9 + $0xc] sm:$0xf]
    %v1910 = vld [vmem:[%s10] sm:$0x1]
    %v1912 = vlaneseq
    %v1913 = vshrl.u32 %v1912, 7
    %v1914 = vsub.s32 0, %v1913
    %v1915 = vrot.slane %v1910, %v1914
    %v1921 = vunpack.c.l.b16 %v1906
    %v1922 = vunpack.c.l.b16 %v1907
    %v1923 = vunpack.c.l.b16 %v1908
    %v1924 = vunpack.c.l.b16 %v1909
    %v1925 = vpack.c.b16 %v1922, %v1921
    %v1926 = vpack.c.b16 %v1924, %v1923
    %v1930 = vsel %vm158, %v1905, 0
    %1932 = vmatprep.subr.bf16.mxu0 0
    %1933 = vmatpush1.bf16.msra.mxu0 0
    %1934 = vmatprep.subr.bf16.mxu0 0
    %1935 = vmatpush1.bf16.msra.mxu0 0
    %1936 = vmatprep.subr.bf16.mxu0 0
    %1937 = vmatpush1.bf16.msra.mxu0 0
    %1938 = vmatprep.subr.bf16.mxu0 0
    %1939 = vmatpush1.bf16.msra.mxu0 0
    %1940 = vmatprep.subr.bf16.mxu0 0
    %1941 = vmatpush1.bf16.msra.mxu0 0
    %1942 = vmatprep.subr.bf16.mxu0 0
    %1943 = vmatpush1.bf16.msra.mxu0 0
    %1944 = vmatprep.subr.bf16.mxu0 0
    %1945 = vmatpush1.bf16.msra.mxu0 %v1926
    %1946 = vmatprep.subr.bf16.mxu0 0
    %1947 = vmatpush1.bf16.msra.mxu0 %v1925
    %1948 = vmatprep.subr.bf16.mxu0 0
    %1949 = vmatpush2.bf16.msra.mxu0 0
    %1950 = vmatprep.subr.bf16.mxu0 0
    %1951 = vmatpush2.bf16.msra.mxu0 0
    %1952 = vmatprep.subr.bf16.mxu0 0
    %1953 = vmatpush2.bf16.msra.mxu0 0
    %1954 = vmatprep.subr.bf16.mxu0 0
    %1955 = vmatpush2.bf16.msra.mxu0 0
    %1956 = vmatprep.subr.bf16.mxu0 0
    %1957 = vmatpush2.bf16.msra.mxu0 0
    %1958 = vmatprep.subr.bf16.mxu0 0
    %1959 = vmatpush2.bf16.msra.mxu0 0
    %1960 = vmatprep.subr.bf16.mxu0 0
    %1961 = vmatpush2.bf16.msra.mxu0 0
    %1962 = vmatprep.subr.bf16.mxu0 0
    %1963 = vmatpush2.bf16.msra.mxu0 0
    %1964 = vmatprep.mubr.bf16.mxu0 0
    %1965 = vmatmul.mubr.bf16.gmra.mxu0 %v1930
    %v1966 = vpop.f32.mrf.mxu0
    %v1967 = vadd.f32 %v1915, %v1966
    %v1968 = vpop.f32.mrf.mxu0
    %v1969 = vpop.f32.mrf.mxu0
    %v1970 = vadd.f32 %v1915, %v1969
    %v1971 = vpop.f32.mrf.mxu0
    %1972 = vdwg.mxu0
    %v1973 = vmax.f32 %v1967, 0.0
    %v1974 = vmax.f32 %v1970, 0.0
    %v1975 = vpack.c.bf16 %v1974, %v1973
    %v1976 = vld [vmem:[%s11] sm:$0xf]
    %v1977 = vld [vmem:[%s11 + $0x4] sm:$0xf]
    %v1978 = vld [vmem:[%s11 + $0x8] sm:$0xf]
    %v1979 = vld [vmem:[%s11 + $0xc] sm:$0xf]
    %v1980 = vld [vmem:[%s11 + $0x10] sm:$0xf]
    %v1981 = vld [vmem:[%s11 + $0x14] sm:$0xf]
    %v1982 = vld [vmem:[%s11 + $0x18] sm:$0xf]
    %v1983 = vld [vmem:[%s11 + $0x1c] sm:$0xf]
    %v1984 = vld [vmem:[%s11 + $0x20] sm:$0xf]
    %v1985 = vld [vmem:[%s11 + $0x24] sm:$0xf]
    %v1986 = vld [vmem:[%s11 + $0x28] sm:$0xf]
    %v1987 = vld [vmem:[%s11 + $0x2c] sm:$0xf]
    %v1988 = vld [vmem:[%s11 + $0x30] sm:$0xf]
    %v1989 = vld [vmem:[%s11 + $0x34] sm:$0xf]
    %v1990 = vld [vmem:[%s11 + $0x38] sm:$0xf]
    %v1991 = vld [vmem:[%s11 + $0x3c] sm:$0xf]
    %v1992 = vld [vmem:[%s12] sm:$0x1]
    %v1994 = vlaneseq
    %v1995 = vshrl.u32 %v1994, 7
    %v1996 = vsub.s32 0, %v1995
    %v1997 = vrot.slane %v1992, %v1996
    %v2015 = vunpack.c.l.b16 %v1976
    %v2016 = vunpack.c.l.b16 %v1977
    %v2017 = vunpack.c.l.b16 %v1978
    %v2018 = vunpack.c.l.b16 %v1979
    %v2019 = vunpack.c.l.b16 %v1980
    %v2020 = vunpack.c.l.b16 %v1981
    %v2021 = vunpack.c.l.b16 %v1982
    %v2022 = vunpack.c.l.b16 %v1983
    %v2023 = vunpack.c.l.b16 %v1984
    %v2024 = vunpack.c.l.b16 %v1985
    %v2025 = vunpack.c.l.b16 %v1986
    %v2026 = vunpack.c.l.b16 %v1987
    %v2027 = vunpack.c.l.b16 %v1988
    %v2028 = vunpack.c.l.b16 %v1989
    %v2029 = vunpack.c.l.b16 %v1990
    %v2030 = vunpack.c.l.b16 %v1991
    %v2031 = vpack.c.b16 %v2016, %v2015
    %v2032 = vpack.c.b16 %v2018, %v2017
    %v2033 = vpack.c.b16 %v2020, %v2019
    %v2034 = vpack.c.b16 %v2022, %v2021
    %v2035 = vpack.c.b16 %v2024, %v2023
    %v2036 = vpack.c.b16 %v2026, %v2025
    %v2037 = vpack.c.b16 %v2028, %v2027
    %v2038 = vpack.c.b16 %v2030, %v2029
    %2047 = vmatprep.subr.bf16.mxu0 0
    %2048 = vmatpush1.bf16.msra.mxu0 %v2038
    %2049 = vmatprep.subr.bf16.mxu0 0
    %2050 = vmatpush1.bf16.msra.mxu0 %v2037
    %2051 = vmatprep.subr.bf16.mxu0 0
    %2052 = vmatpush1.bf16.msra.mxu0 %v2036
    %2053 = vmatprep.subr.bf16.mxu0 0
    %2054 = vmatpush1.bf16.msra.mxu0 %v2035
    %2055 = vmatprep.subr.bf16.mxu0 0
    %2056 = vmatpush1.bf16.msra.mxu0 %v2034
    %2057 = vmatprep.subr.bf16.mxu0 0
    %2058 = vmatpush1.bf16.msra.mxu0 %v2033
    %2059 = vmatprep.subr.bf16.mxu0 0
    %2060 = vmatpush1.bf16.msra.mxu0 %v2032
    %2061 = vmatprep.subr.bf16.mxu0 0
    %2062 = vmatpush1.bf16.msra.mxu0 %v2031
    %2063 = vmatprep.subr.bf16.mxu0 0
    %2064 = vmatpush2.bf16.msra.mxu0 0
    %2065 = vmatprep.subr.bf16.mxu0 0
    %2066 = vmatpush2.bf16.msra.mxu0 0
    %2067 = vmatprep.subr.bf16.mxu0 0
    %2068 = vmatpush2.bf16.msra.mxu0 0
    %2069 = vmatprep.subr.bf16.mxu0 0
    %2070 = vmatpush2.bf16.msra.mxu0 0
    %2071 = vmatprep.subr.bf16.mxu0 0
    %2072 = vmatpush2.bf16.msra.mxu0 0
    %2073 = vmatprep.subr.bf16.mxu0 0
    %2074 = vmatpush2.bf16.msra.mxu0 0
    %2075 = vmatprep.subr.bf16.mxu0 0
    %2076 = vmatpush2.bf16.msra.mxu0 0
    %2077 = vmatprep.subr.bf16.mxu0 0
    %2078 = vmatpush2.bf16.msra.mxu0 0
    %2079 = vmatprep.mubr.bf16.mxu0 0
    %2080 = vmatmul.mubr.bf16.gmra.mxu0 %v1975
    %v2081 = vpop.f32.mrf.mxu0
    %v2082 = vadd.f32 %v1997, %v2081
    %v2083 = vpop.f32.mrf.mxu0
    %v2084 = vpop.f32.mrf.mxu0
    %v2085 = vadd.f32 %v1997, %v2084
    %v2086 = vpop.f32.mrf.mxu0
    %2087 = vdwg.mxu0
    %v2088 = vadd.f32 %v1903, %v2082
    %v2089 = vadd.f32 %v1904, %v2085
    %v2090 = vld [vmem:[%s7] sm:$0x1]
    %v2091 = vld [vmem:[%s8] sm:$0x1]
    %v2092 = vsel %vm158, %v2088, 0.0
    %2093 = vadd.xlane.f32.xlu0 %v2092
    %v2094 = vpop.xlane.xlu0 %2093
    %v2095 = vsel %vm158, %v2089, 0.0
    %2096 = vadd.xlane.f32.xlu0 %v2095
    %v2097 = vpop.xlane.xlu0 %2096
    %v2098 = vmul.f32 %v2094, %v1868
    %v2099 = vmul.f32 %v2097, %v1868
    %v2100 = vsub.f32 %v2088, %v2098
    %v2101 = vsub.f32 %v2089, %v2099
    %v2102 = vmul.f32 %v2100, %v2100
    %v2103 = vmul.f32 %v2101, %v2101
    %v2104 = vsel %vm158, %v2102, 0.0
    %2105 = vadd.xlane.f32.xlu0 %v2104
    %v2106 = vpop.xlane.xlu0 %2105
    %v2107 = vsel %vm158, %v2103, 0.0
    %2108 = vadd.xlane.f32.xlu0 %v2107
    %v2109 = vpop.xlane.xlu0 %2108
    %v2110 = vmul.f32 %v2106, %v1868
    %v2111 = vmul.f32 %v2109, %v1868
    %v2112 = vadd.f32 %v2110, 1e-05
    %v2113 = vadd.f32 %v2111, 1e-05
    %v2114 = vrsqrt.pop %v2112
    %v2115 = vrsqrt.pop %v2113
    %v2116 = vmul.f32 %v2100, %v2114
    %v2117 = vmul.f32 %v2101, %v2115
    %v2119 = vlaneseq
    %v2120 = vshrl.u32 %v2119, 7
    %v2121 = vsub.s32 0, %v2120
    %v2122 = vrot.slane %v2090, %v2121
    %v2124 = vmul.f32 %v2116, %v2122
    %v2125 = vmul.f32 %v2117, %v2122
    %v2127 = vlaneseq
    %v2128 = vshrl.u32 %v2127, 7
    %v2129 = vsub.s32 0, %v2128
    %v2130 = vrot.slane %v2091, %v2129
    %v2132 = vadd.f32 %v2124, %v2130
    %v2133 = vadd.f32 %v2125, %v2130
    %v2134 = vpack.c.bf16 %v2132, %v2132
    %v2135 = vpack.c.bf16 %v2133, %v2133
    %s2136 = scalar_lea.vmem %s1, 128
    %v2137 = vld [vmem:[%s2136] sm:$0xf]
    %v2138 = vld [vmem:[%s2136 + $0x4] sm:$0xf]
    %v2139 = vld [vmem:[%s2136 + $0x8] sm:$0xf]
    %v2140 = vld [vmem:[%s2136 + $0xc] sm:$0xf]
    %v2141 = vld [vmem:[%s2136 + $0x10] sm:$0xf]
    %v2142 = vld [vmem:[%s2136 + $0x14] sm:$0xf]
    %v2143 = vld [vmem:[%s2136 + $0x18] sm:$0xf]
    %v2144 = vld [vmem:[%s2136 + $0x1c] sm:$0xf]
    %v2145 = vld [vmem:[%s2136 + $0x20] sm:$0xf]
    %v2146 = vld [vmem:[%s2136 + $0x24] sm:$0xf]
    %v2147 = vld [vmem:[%s2136 + $0x28] sm:$0xf]
    %v2148 = vld [vmem:[%s2136 + $0x2c] sm:$0xf]
    %v2149 = vld [vmem:[%s2136 + $0x30] sm:$0xf]
    %v2150 = vld [vmem:[%s2136 + $0x34] sm:$0xf]
    %v2151 = vld [vmem:[%s2136 + $0x38] sm:$0xf]
    %v2152 = vld [vmem:[%s2136 + $0x3c] sm:$0xf]
    %v2153 = vld [vmem:[%s2136 + $0x40] sm:$0xf]
    %v2154 = vld [vmem:[%s2136 + $0x44] sm:$0xf]
    %v2155 = vld [vmem:[%s2136 + $0x48] sm:$0xf]
    %v2156 = vld [vmem:[%s2136 + $0x4c] sm:$0xf]
    %v2157 = vld [vmem:[%s2136 + $0x50] sm:$0xf]
    %v2158 = vld [vmem:[%s2136 + $0x54] sm:$0xf]
    %v2159 = vld [vmem:[%s2136 + $0x58] sm:$0xf]
    %v2160 = vld [vmem:[%s2136 + $0x5c] sm:$0xf]
    %v2161 = vld [vmem:[%s2136 + $0x60] sm:$0xf]
    %v2162 = vld [vmem:[%s2136 + $0x64] sm:$0xf]
    %v2163 = vld [vmem:[%s2136 + $0x68] sm:$0xf]
    %v2164 = vld [vmem:[%s2136 + $0x6c] sm:$0xf]
    %v2165 = vld [vmem:[%s2136 + $0x70] sm:$0xf]
    %v2166 = vld [vmem:[%s2136 + $0x74] sm:$0xf]
    %v2167 = vld [vmem:[%s2136 + $0x78] sm:$0xf]
    %v2168 = vld [vmem:[%s2136 + $0x7c] sm:$0xf]
    %s2169 = scalar_lea.vmem %s2, 8
    %v2170 = vld [vmem:[%s2169] sm:$0x1]
    %v2171 = vld [vmem:[%s2169 + $0x1] sm:$0x1]
    %v2172 = vld [vmem:[%s2169 + $0x2] sm:$0x1]
    %v2173 = vld [vmem:[%s2169 + $0x3] sm:$0x1]
    %v2174 = vld [vmem:[%s2169 + $0x4] sm:$0x1]
    %v2175 = vld [vmem:[%s2169 + $0x5] sm:$0x1]
    %v2176 = vld [vmem:[%s2169 + $0x6] sm:$0x1]
    %v2177 = vld [vmem:[%s2169 + $0x7] sm:$0x1]
    %v2186 = vlaneseq
    %v2187 = vshrl.u32 %v2186, 7
    %v2188 = vsub.s32 0, %v2187
    %v2189 = vrot.slane %v2170, %v2188
    %v2190 = vlaneseq
    %v2191 = vshrl.u32 %v2190, 7
    %v2192 = vsub.s32 0, %v2191
    %v2193 = vrot.slane %v2171, %v2192
    %v2194 = vlaneseq
    %v2195 = vshrl.u32 %v2194, 7
    %v2196 = vsub.s32 0, %v2195
    %v2197 = vrot.slane %v2172, %v2196
    %v2198 = vlaneseq
    %v2199 = vshrl.u32 %v2198, 7
    %v2200 = vsub.s32 0, %v2199
    %v2201 = vrot.slane %v2173, %v2200
    %v2202 = vlaneseq
    %v2203 = vshrl.u32 %v2202, 7
    %v2204 = vsub.s32 0, %v2203
    %v2205 = vrot.slane %v2174, %v2204
    %v2206 = vlaneseq
    %v2207 = vshrl.u32 %v2206, 7
    %v2208 = vsub.s32 0, %v2207
    %v2209 = vrot.slane %v2175, %v2208
    %v2210 = vlaneseq
    %v2211 = vshrl.u32 %v2210, 7
    %v2212 = vsub.s32 0, %v2211
    %v2213 = vrot.slane %v2176, %v2212
    %v2214 = vlaneseq
    %v2215 = vshrl.u32 %v2214, 7
    %v2216 = vsub.s32 0, %v2215
    %v2217 = vrot.slane %v2177, %v2216
    %v2230 = vunpack.c.l.b16 %v2137
    %v2231 = vunpack.c.l.b16 %v2138
    %v2232 = vunpack.c.l.b16 %v2139
    %v2233 = vunpack.c.l.b16 %v2140
    %v2234 = vpack.c.b16 %v2231, %v2230
    %v2235 = vpack.c.b16 %v2233, %v2232
    %v2239 = vsel %vm158, %v2134, 0
    %2241 = vmatprep.subr.bf16.mxu0 0
    %2242 = vmatpush1.bf16.msra.mxu0 0
    %2243 = vmatprep.subr.bf16.mxu0 0
    %2244 = vmatpush1.bf16.msra.mxu0 0
    %2245 = vmatprep.subr.bf16.mxu0 0
    %2246 = vmatpush1.bf16.msra.mxu0 0
    %2247 = vmatprep.subr.bf16.mxu0 0
    %2248 = vmatpush1.bf16.msra.mxu0 0
    %2249 = vmatprep.subr.bf16.mxu0 0
    %2250 = vmatpush1.bf16.msra.mxu0 0
    %2251 = vmatprep.subr.bf16.mxu0 0
    %2252 = vmatpush1.bf16.msra.mxu0 0
    %2253 = vmatprep.subr.bf16.mxu0 0
    %2254 = vmatpush1.bf16.msra.mxu0 %v2235
    %2255 = vmatprep.subr.bf16.mxu0 0
    %2256 = vmatpush1.bf16.msra.mxu0 %v2234
    %2257 = vmatprep.subr.bf16.mxu0 0
    %2258 = vmatpush2.bf16.msra.mxu0 0
    %2259 = vmatprep.subr.bf16.mxu0 0
    %2260 = vmatpush2.bf16.msra.mxu0 0
    %2261 = vmatprep.subr.bf16.mxu0 0
    %2262 = vmatpush2.bf16.msra.mxu0 0
    %2263 = vmatprep.subr.bf16.mxu0 0
    %2264 = vmatpush2.bf16.msra.mxu0 0
    %2265 = vmatprep.subr.bf16.mxu0 0
    %2266 = vmatpush2.bf16.msra.mxu0 0
    %2267 = vmatprep.subr.bf16.mxu0 0
    %2268 = vmatpush2.bf16.msra.mxu0 0
    %2269 = vmatprep.subr.bf16.mxu0 0
    %2270 = vmatpush2.bf16.msra.mxu0 0
    %2271 = vmatprep.subr.bf16.mxu0 0
    %2272 = vmatpush2.bf16.msra.mxu0 0
    %2273 = vmatprep.mubr.bf16.mxu0 0
    %2274 = vmatmul.mubr.bf16.gmra.mxu0 %v2239
    %v2275 = vpop.f32.mrf.mxu0
    %v2276 = vadd.f32 %v2189, %v2275
    %v2277 = vpop.f32.mrf.mxu0
    %v2278 = vpop.f32.mrf.mxu0
    %v2279 = vpop.f32.mrf.mxu0
    %2280 = vdwg.mxu0
    %v2285 = vunpack.c.l.b16 %v2141
    %v2286 = vunpack.c.l.b16 %v2142
    %v2287 = vunpack.c.l.b16 %v2143
    %v2288 = vunpack.c.l.b16 %v2144
    %v2289 = vpack.c.b16 %v2286, %v2285
    %v2290 = vpack.c.b16 %v2288, %v2287
    %2293 = vmatprep.subr.bf16.mxu0 0
    %2294 = vmatpush1.bf16.msra.mxu0 0
    %2295 = vmatprep.subr.bf16.mxu0 0
    %2296 = vmatpush1.bf16.msra.mxu0 0
    %2297 = vmatprep.subr.bf16.mxu0 0
    %2298 = vmatpush1.bf16.msra.mxu0 0
    %2299 = vmatprep.subr.bf16.mxu0 0
    %2300 = vmatpush1.bf16.msra.mxu0 0
    %2301 = vmatprep.subr.bf16.mxu0 0
    %2302 = vmatpush1.bf16.msra.mxu0 0
    %2303 = vmatprep.subr.bf16.mxu0 0
    %2304 = vmatpush1.bf16.msra.mxu0 0
    %2305 = vmatprep.subr.bf16.mxu0 0
    %2306 = vmatpush1.bf16.msra.mxu0 %v2290
    %2307 = vmatprep.subr.bf16.mxu0 0
    %2308 = vmatpush1.bf16.msra.mxu0 %v2289
    %2309 = vmatprep.subr.bf16.mxu0 0
    %2310 = vmatpush2.bf16.msra.mxu0 0
    %2311 = vmatprep.subr.bf16.mxu0 0
    %2312 = vmatpush2.bf16.msra.mxu0 0
    %2313 = vmatprep.subr.bf16.mxu0 0
    %2314 = vmatpush2.bf16.msra.mxu0 0
    %2315 = vmatprep.subr.bf16.mxu0 0
    %2316 = vmatpush2.bf16.msra.mxu0 0
    %2317 = vmatprep.subr.bf16.mxu0 0
    %2318 = vmatpush2.bf16.msra.mxu0 0
    %2319 = vmatprep.subr.bf16.mxu0 0
    %2320 = vmatpush2.bf16.msra.mxu0 0
    %2321 = vmatprep.subr.bf16.mxu0 0
    %2322 = vmatpush2.bf16.msra.mxu0 0
    %2323 = vmatprep.subr.bf16.mxu0 0
    %2324 = vmatpush2.bf16.msra.mxu0 0
    %2325 = vmatprep.mubr.bf16.mxu0 0
    %2326 = vmatmul.mubr.bf16.gmra.mxu0 %v2239
    %v2327 = vpop.f32.mrf.mxu0
    %v2328 = vadd.f32 %v2193, %v2327
    %v2329 = vpop.f32.mrf.mxu0
    %v2330 = vpop.f32.mrf.mxu0
    %v2331 = vpop.f32.mrf.mxu0
    %2332 = vdwg.mxu0
    %v2337 = vunpack.c.l.b16 %v2145
    %v2338 = vunpack.c.l.b16 %v2146
    %v2339 = vunpack.c.l.b16 %v2147
    %v2340 = vunpack.c.l.b16 %v2148
    %v2341 = vpack.c.b16 %v2338, %v2337
    %v2342 = vpack.c.b16 %v2340, %v2339
    %2345 = vmatprep.subr.bf16.mxu0 0
    %2346 = vmatpush1.bf16.msra.mxu0 0
    %2347 = vmatprep.subr.bf16.mxu0 0
    %2348 = vmatpush1.bf16.msra.mxu0 0
    %2349 = vmatprep.subr.bf16.mxu0 0
    %2350 = vmatpush1.bf16.msra.mxu0 0
    %2351 = vmatprep.subr.bf16.mxu0 0
    %2352 = vmatpush1.bf16.msra.mxu0 0
    %2353 = vmatprep.subr.bf16.mxu0 0
    %2354 = vmatpush1.bf16.msra.mxu0 0
    %2355 = vmatprep.subr.bf16.mxu0 0
    %2356 = vmatpush1.bf16.msra.mxu0 0
    %2357 = vmatprep.subr.bf16.mxu0 0
    %2358 = vmatpush1.bf16.msra.mxu0 %v2342
    %2359 = vmatprep.subr.bf16.mxu0 0
    %2360 = vmatpush1.bf16.msra.mxu0 %v2341
    %2361 = vmatprep.subr.bf16.mxu0 0
    %2362 = vmatpush2.bf16.msra.mxu0 0
    %2363 = vmatprep.subr.bf16.mxu0 0
    %2364 = vmatpush2.bf16.msra.mxu0 0
    %2365 = vmatprep.subr.bf16.mxu0 0
    %2366 = vmatpush2.bf16.msra.mxu0 0
    %2367 = vmatprep.subr.bf16.mxu0 0
    %2368 = vmatpush2.bf16.msra.mxu0 0
    %2369 = vmatprep.subr.bf16.mxu0 0
    %2370 = vmatpush2.bf16.msra.mxu0 0
    %2371 = vmatprep.subr.bf16.mxu0 0
    %2372 = vmatpush2.bf16.msra.mxu0 0
    %2373 = vmatprep.subr.bf16.mxu0 0
    %2374 = vmatpush2.bf16.msra.mxu0 0
    %2375 = vmatprep.subr.bf16.mxu0 0
    %2376 = vmatpush2.bf16.msra.mxu0 0
    %2377 = vmatprep.mubr.bf16.mxu0 0
    %2378 = vmatmul.mubr.bf16.gmra.mxu0 %v2239
    %v2379 = vpop.f32.mrf.mxu0
    %v2380 = vadd.f32 %v2197, %v2379
    %v2381 = vpop.f32.mrf.mxu0
    %v2382 = vpop.f32.mrf.mxu0
    %v2383 = vpop.f32.mrf.mxu0
    %2384 = vdwg.mxu0
    %v2389 = vunpack.c.l.b16 %v2149
    %v2390 = vunpack.c.l.b16 %v2150
    %v2391 = vunpack.c.l.b16 %v2151
    %v2392 = vunpack.c.l.b16 %v2152
    %v2393 = vpack.c.b16 %v2390, %v2389
    %v2394 = vpack.c.b16 %v2392, %v2391
    %2397 = vmatprep.subr.bf16.mxu0 0
    %2398 = vmatpush1.bf16.msra.mxu0 0
    %2399 = vmatprep.subr.bf16.mxu0 0
    %2400 = vmatpush1.bf16.msra.mxu0 0
    %2401 = vmatprep.subr.bf16.mxu0 0
    %2402 = vmatpush1.bf16.msra.mxu0 0
    %2403 = vmatprep.subr.bf16.mxu0 0
    %2404 = vmatpush1.bf16.msra.mxu0 0
    %2405 = vmatprep.subr.bf16.mxu0 0
    %2406 = vmatpush1.bf16.msra.mxu0 0
    %2407 = vmatprep.subr.bf16.mxu0 0
    %2408 = vmatpush1.bf16.msra.mxu0 0
    %2409 = vmatprep.subr.bf16.mxu0 0
    %2410 = vmatpush1.bf16.msra.mxu0 %v2394
    %2411 = vmatprep.subr.bf16.mxu0 0
    %2412 = vmatpush1.bf16.msra.mxu0 %v2393
    %2413 = vmatprep.subr.bf16.mxu0 0
    %2414 = vmatpush2.bf16.msra.mxu0 0
    %2415 = vmatprep.subr.bf16.mxu0 0
    %2416 = vmatpush2.bf16.msra.mxu0 0
    %2417 = vmatprep.subr.bf16.mxu0 0
    %2418 = vmatpush2.bf16.msra.mxu0 0
    %2419 = vmatprep.subr.bf16.mxu0 0
    %2420 = vmatpush2.bf16.msra.mxu0 0
    %2421 = vmatprep.subr.bf16.mxu0 0
    %2422 = vmatpush2.bf16.msra.mxu0 0
    %2423 = vmatprep.subr.bf16.mxu0 0
    %2424 = vmatpush2.bf16.msra.mxu0 0
    %2425 = vmatprep.subr.bf16.mxu0 0
    %2426 = vmatpush2.bf16.msra.mxu0 0
    %2427 = vmatprep.subr.bf16.mxu0 0
    %2428 = vmatpush2.bf16.msra.mxu0 0
    %2429 = vmatprep.mubr.bf16.mxu0 0
    %2430 = vmatmul.mubr.bf16.gmra.mxu0 %v2239
    %v2431 = vpop.f32.mrf.mxu0
    %v2432 = vadd.f32 %v2201, %v2431
    %v2433 = vpop.f32.mrf.mxu0
    %v2434 = vpop.f32.mrf.mxu0
    %v2435 = vpop.f32.mrf.mxu0
    %2436 = vdwg.mxu0
    %v2441 = vunpack.c.l.b16 %v2153
    %v2442 = vunpack.c.l.b16 %v2154
    %v2443 = vunpack.c.l.b16 %v2155
    %v2444 = vunpack.c.l.b16 %v2156
    %v2445 = vpack.c.b16 %v2442, %v2441
    %v2446 = vpack.c.b16 %v2444, %v2443
    %v2450 = vsel %vm158, %v2135, 0
    %2452 = vmatprep.subr.bf16.mxu0 0
    %2453 = vmatpush1.bf16.msra.mxu0 0
    %2454 = vmatprep.subr.bf16.mxu0 0
    %2455 = vmatpush1.bf16.msra.mxu0 0
    %2456 = vmatprep.subr.bf16.mxu0 0
    %2457 = vmatpush1.bf16.msra.mxu0 0
    %2458 = vmatprep.subr.bf16.mxu0 0
    %2459 = vmatpush1.bf16.msra.mxu0 0
    %2460 = vmatprep.subr.bf16.mxu0 0
    %2461 = vmatpush1.bf16.msra.mxu0 0
    %2462 = vmatprep.subr.bf16.mxu0 0
    %2463 = vmatpush1.bf16.msra.mxu0 0
    %2464 = vmatprep.subr.bf16.mxu0 0
    %2465 = vmatpush1.bf16.msra.mxu0 %v2446
    %2466 = vmatprep.subr.bf16.mxu0 0
    %2467 = vmatpush1.bf16.msra.mxu0 %v2445
    %2468 = vmatprep.subr.bf16.mxu0 0
    %2469 = vmatpush2.bf16.msra.mxu0 0
    %2470 = vmatprep.subr.bf16.mxu0 0
    %2471 = vmatpush2.bf16.msra.mxu0 0
    %2472 = vmatprep.subr.bf16.mxu0 0
    %2473 = vmatpush2.bf16.msra.mxu0 0
    %2474 = vmatprep.subr.bf16.mxu0 0
    %2475 = vmatpush2.bf16.msra.mxu0 0
    %2476 = vmatprep.subr.bf16.mxu0 0
    %2477 = vmatpush2.bf16.msra.mxu0 0
    %2478 = vmatprep.subr.bf16.mxu0 0
    %2479 = vmatpush2.bf16.msra.mxu0 0
    %2480 = vmatprep.subr.bf16.mxu0 0
    %2481 = vmatpush2.bf16.msra.mxu0 0
    %2482 = vmatprep.subr.bf16.mxu0 0
    %2483 = vmatpush2.bf16.msra.mxu0 0
    %2484 = vmatprep.mubr.bf16.mxu0 0
    %2485 = vmatmul.mubr.bf16.gmra.mxu0 %v2450
    %v2486 = vpop.f32.mrf.mxu0
    %v2487 = vadd.f32 %v2205, %v2486
    %v2488 = vpop.f32.mrf.mxu0
    %v2489 = vpop.f32.mrf.mxu0
    %v2490 = vpop.f32.mrf.mxu0
    %2491 = vdwg.mxu0
    %v2496 = vunpack.c.l.b16 %v2157
    %v2497 = vunpack.c.l.b16 %v2158
    %v2498 = vunpack.c.l.b16 %v2159
    %v2499 = vunpack.c.l.b16 %v2160
    %v2500 = vpack.c.b16 %v2497, %v2496
    %v2501 = vpack.c.b16 %v2499, %v2498
    %2504 = vmatprep.subr.bf16.mxu0 0
    %2505 = vmatpush1.bf16.msra.mxu0 0
    %2506 = vmatprep.subr.bf16.mxu0 0
    %2507 = vmatpush1.bf16.msra.mxu0 0
    %2508 = vmatprep.subr.bf16.mxu0 0
    %2509 = vmatpush1.bf16.msra.mxu0 0
    %2510 = vmatprep.subr.bf16.mxu0 0
    %2511 = vmatpush1.bf16.msra.mxu0 0
    %2512 = vmatprep.subr.bf16.mxu0 0
    %2513 = vmatpush1.bf16.msra.mxu0 0
    %2514 = vmatprep.subr.bf16.mxu0 0
    %2515 = vmatpush1.bf16.msra.mxu0 0
    %2516 = vmatprep.subr.bf16.mxu0 0
    %2517 = vmatpush1.bf16.msra.mxu0 %v2501
    %2518 = vmatprep.subr.bf16.mxu0 0
    %2519 = vmatpush1.bf16.msra.mxu0 %v2500
    %2520 = vmatprep.subr.bf16.mxu0 0
    %2521 = vmatpush2.bf16.msra.mxu0 0
    %2522 = vmatprep.subr.bf16.mxu0 0
    %2523 = vmatpush2.bf16.msra.mxu0 0
    %2524 = vmatprep.subr.bf16.mxu0 0
    %2525 = vmatpush2.bf16.msra.mxu0 0
    %2526 = vmatprep.subr.bf16.mxu0 0
    %2527 = vmatpush2.bf16.msra.mxu0 0
    %2528 = vmatprep.subr.bf16.mxu0 0
    %2529 = vmatpush2.bf16.msra.mxu0 0
    %2530 = vmatprep.subr.bf16.mxu0 0
    %2531 = vmatpush2.bf16.msra.mxu0 0
    %2532 = vmatprep.subr.bf16.mxu0 0
    %2533 = vmatpush2.bf16.msra.mxu0 0
    %2534 = vmatprep.subr.bf16.mxu0 0
    %2535 = vmatpush2.bf16.msra.mxu0 0
    %2536 = vmatprep.mubr.bf16.mxu0 0
    %2537 = vmatmul.mubr.bf16.gmra.mxu0 %v2450
    %v2538 = vpop.f32.mrf.mxu0
    %v2539 = vadd.f32 %v2209, %v2538
    %v2540 = vpop.f32.mrf.mxu0
    %v2541 = vpop.f32.mrf.mxu0
    %v2542 = vpop.f32.mrf.mxu0
    %2543 = vdwg.mxu0
    %v2548 = vunpack.c.l.b16 %v2161
    %v2549 = vunpack.c.l.b16 %v2162
    %v2550 = vunpack.c.l.b16 %v2163
    %v2551 = vunpack.c.l.b16 %v2164
    %v2552 = vpack.c.b16 %v2549, %v2548
    %v2553 = vpack.c.b16 %v2551, %v2550
    %2556 = vmatprep.subr.bf16.mxu0 0
    %2557 = vmatpush1.bf16.msra.mxu0 0
    %2558 = vmatprep.subr.bf16.mxu0 0
    %2559 = vmatpush1.bf16.msra.mxu0 0
    %2560 = vmatprep.subr.bf16.mxu0 0
    %2561 = vmatpush1.bf16.msra.mxu0 0
    %2562 = vmatprep.subr.bf16.mxu0 0
    %2563 = vmatpush1.bf16.msra.mxu0 0
    %2564 = vmatprep.subr.bf16.mxu0 0
    %2565 = vmatpush1.bf16.msra.mxu0 0
    %2566 = vmatprep.subr.bf16.mxu0 0
    %2567 = vmatpush1.bf16.msra.mxu0 0
    %2568 = vmatprep.subr.bf16.mxu0 0
    %2569 = vmatpush1.bf16.msra.mxu0 %v2553
    %2570 = vmatprep.subr.bf16.mxu0 0
    %2571 = vmatpush1.bf16.msra.mxu0 %v2552
    %2572 = vmatprep.subr.bf16.mxu0 0
    %2573 = vmatpush2.bf16.msra.mxu0 0
    %2574 = vmatprep.subr.bf16.mxu0 0
    %2575 = vmatpush2.bf16.msra.mxu0 0
    %2576 = vmatprep.subr.bf16.mxu0 0
    %2577 = vmatpush2.bf16.msra.mxu0 0
    %2578 = vmatprep.subr.bf16.mxu0 0
    %2579 = vmatpush2.bf16.msra.mxu0 0
    %2580 = vmatprep.subr.bf16.mxu0 0
    %2581 = vmatpush2.bf16.msra.mxu0 0
    %2582 = vmatprep.subr.bf16.mxu0 0
    %2583 = vmatpush2.bf16.msra.mxu0 0
    %2584 = vmatprep.subr.bf16.mxu0 0
    %2585 = vmatpush2.bf16.msra.mxu0 0
    %2586 = vmatprep.subr.bf16.mxu0 0
    %2587 = vmatpush2.bf16.msra.mxu0 0
    %2588 = vmatprep.mubr.bf16.mxu0 0
    %2589 = vmatmul.mubr.bf16.gmra.mxu0 %v2450
    %v2590 = vpop.f32.mrf.mxu0
    %v2591 = vadd.f32 %v2213, %v2590
    %v2592 = vpop.f32.mrf.mxu0
    %v2593 = vpop.f32.mrf.mxu0
    %v2594 = vpop.f32.mrf.mxu0
    %2595 = vdwg.mxu0
    %v2600 = vunpack.c.l.b16 %v2165
    %v2601 = vunpack.c.l.b16 %v2166
    %v2602 = vunpack.c.l.b16 %v2167
    %v2603 = vunpack.c.l.b16 %v2168
    %v2604 = vpack.c.b16 %v2601, %v2600
    %v2605 = vpack.c.b16 %v2603, %v2602
    %2608 = vmatprep.subr.bf16.mxu0 0
    %2609 = vmatpush1.bf16.msra.mxu0 0
    %2610 = vmatprep.subr.bf16.mxu0 0
    %2611 = vmatpush1.bf16.msra.mxu0 0
    %2612 = vmatprep.subr.bf16.mxu0 0
    %2613 = vmatpush1.bf16.msra.mxu0 0
    %2614 = vmatprep.subr.bf16.mxu0 0
    %2615 = vmatpush1.bf16.msra.mxu0 0
    %2616 = vmatprep.subr.bf16.mxu0 0
    %2617 = vmatpush1.bf16.msra.mxu0 0
    %2618 = vmatprep.subr.bf16.mxu0 0
    %2619 = vmatpush1.bf16.msra.mxu0 0
    %2620 = vmatprep.subr.bf16.mxu0 0
    %2621 = vmatpush1.bf16.msra.mxu0 %v2605
    %2622 = vmatprep.subr.bf16.mxu0 0
    %2623 = vmatpush1.bf16.msra.mxu0 %v2604
    %2624 = vmatprep.subr.bf16.mxu0 0
    %2625 = vmatpush2.bf16.msra.mxu0 0
    %2626 = vmatprep.subr.bf16.mxu0 0
    %2627 = vmatpush2.bf16.msra.mxu0 0
    %2628 = vmatprep.subr.bf16.mxu0 0
    %2629 = vmatpush2.bf16.msra.mxu0 0
    %2630 = vmatprep.subr.bf16.mxu0 0
    %2631 = vmatpush2.bf16.msra.mxu0 0
    %2632 = vmatprep.subr.bf16.mxu0 0
    %2633 = vmatpush2.bf16.msra.mxu0 0
    %2634 = vmatprep.subr.bf16.mxu0 0
    %2635 = vmatpush2.bf16.msra.mxu0 0
    %2636 = vmatprep.subr.bf16.mxu0 0
    %2637 = vmatpush2.bf16.msra.mxu0 0
    %2638 = vmatprep.subr.bf16.mxu0 0
    %2639 = vmatpush2.bf16.msra.mxu0 0
    %2640 = vmatprep.mubr.bf16.mxu0 0
    %2641 = vmatmul.mubr.bf16.gmra.mxu0 %v2450
    %v2642 = vpop.f32.mrf.mxu0
    %v2643 = vadd.f32 %v2217, %v2642
    %v2644 = vpop.f32.mrf.mxu0
    %v2645 = vpop.f32.mrf.mxu0
    %v2646 = vpop.f32.mrf.mxu0
    %2647 = vdwg.mxu0
    %v2648 = vpack.c.bf16 %v2276, %v2276
    %v2649 = vpack.c.bf16 %v2328, %v2328
    %v2650 = vpack.c.bf16 %v2380, %v2380
    %v2651 = vpack.c.bf16 %v2432, %v2432
    %v2652 = vpack.c.bf16 %v2487, %v2487
    %v2653 = vpack.c.bf16 %v2539, %v2539
    %v2654 = vpack.c.bf16 %v2591, %v2591
    %v2655 = vpack.c.bf16 %v2643, %v2643
    %2657 = vrot.lane.b32.xlu0 %v2648, 120
    %v2658 = vpop.permute.xlu0 %2657
    %v2660 = vsel %vm580, %v2648, 0
    %v2663 = vsel %vm580, %v2658, 0
    %2665 = vmatprep.subr.bf16.mxu0 0
    %2666 = vmatpush1.bf16.xpose.msra.mxu0 0
    %2667 = vmatprep.subr.bf16.mxu0 0
    %2668 = vmatpush1.bf16.xpose.msra.mxu0 0
    %2669 = vmatprep.subr.bf16.mxu0 0
    %2670 = vmatpush1.bf16.xpose.msra.mxu0 0
    %2671 = vmatprep.subr.bf16.mxu0 0
    %2672 = vmatpush1.bf16.xpose.msra.mxu0 0
    %2673 = vmatprep.subr.bf16.mxu0 0
    %2674 = vmatpush1.bf16.xpose.msra.mxu0 0
    %2675 = vmatprep.subr.bf16.mxu0 0
    %2676 = vmatpush1.bf16.xpose.msra.mxu0 0
    %2677 = vmatprep.subr.bf16.mxu0 0
    %2678 = vmatpush1.bf16.xpose.msra.mxu0 0
    %2679 = vmatprep.subr.bf16.mxu0 0
    %2680 = vmatpush1.bf16.xpose.msra.mxu0 %v2663
    %2681 = vmatprep.subr.bf16.mxu0 0
    %2682 = vmatpush2.bf16.xpose.msra.mxu0 0
    %2683 = vmatprep.subr.bf16.mxu0 0
    %2684 = vmatpush2.bf16.xpose.msra.mxu0 0
    %2685 = vmatprep.subr.bf16.mxu0 0
    %2686 = vmatpush2.bf16.xpose.msra.mxu0 0
    %2687 = vmatprep.subr.bf16.mxu0 0
    %2688 = vmatpush2.bf16.xpose.msra.mxu0 0
    %2689 = vmatprep.subr.bf16.mxu0 0
    %2690 = vmatpush2.bf16.xpose.msra.mxu0 0
    %2691 = vmatprep.subr.bf16.mxu0 0
    %2692 = vmatpush2.bf16.xpose.msra.mxu0 0
    %2693 = vmatprep.subr.bf16.mxu0 0
    %2694 = vmatpush2.bf16.xpose.msra.mxu0 0
    %2695 = vmatprep.subr.bf16.mxu0 0
    %2696 = vmatpush2.bf16.xpose.msra.mxu0 0
    %2697 = vmatprep.mubr.bf16.mxu0 0
    %2698 = vmatmul.mubr.bf16.gmra.mxu0 %v2660
    %v2699 = vpop.f32.mrf.mxu0
    %v2700 = vadd.f32 0.0, %v2699
    %v2701 = vpop.f32.mrf.mxu0
    %v2702 = vpop.f32.mrf.mxu0
    %v2703 = vpop.f32.mrf.mxu0
    %2704 = vdwg.mxu0
    %2706 = vrot.lane.b32.xlu0 %v2649, 120
    %v2707 = vpop.permute.xlu0 %2706
    %v2709 = vsel %vm580, %v2649, 0
    %v2712 = vsel %vm580, %v2707, 0
    %2714 = vmatprep.subr.bf16.mxu0 0
    %2715 = vmatpush1.bf16.xpose.msra.mxu0 0
    %2716 = vmatprep.subr.bf16.mxu0 0
    %2717 = vmatpush1.bf16.xpose.msra.mxu0 0
    %2718 = vmatprep.subr.bf16.mxu0 0
    %2719 = vmatpush1.bf16.xpose.msra.mxu0 0
    %2720 = vmatprep.subr.bf16.mxu0 0
    %2721 = vmatpush1.bf16.xpose.msra.mxu0 0
    %2722 = vmatprep.subr.bf16.mxu0 0
    %2723 = vmatpush1.bf16.xpose.msra.mxu0 0
    %2724 = vmatprep.subr.bf16.mxu0 0
    %2725 = vmatpush1.bf16.xpose.msra.mxu0 0
    %2726 = vmatprep.subr.bf16.mxu0 0
    %2727 = vmatpush1.bf16.xpose.msra.mxu0 0
    %2728 = vmatprep.subr.bf16.mxu0 0
    %2729 = vmatpush1.bf16.xpose.msra.mxu0 %v2712
    %2730 = vmatprep.subr.bf16.mxu0 0
    %2731 = vmatpush2.bf16.xpose.msra.mxu0 0
    %2732 = vmatprep.subr.bf16.mxu0 0
    %2733 = vmatpush2.bf16.xpose.msra.mxu0 0
    %2734 = vmatprep.subr.bf16.mxu0 0
    %2735 = vmatpush2.bf16.xpose.msra.mxu0 0
    %2736 = vmatprep.subr.bf16.mxu0 0
    %2737 = vmatpush2.bf16.xpose.msra.mxu0 0
    %2738 = vmatprep.subr.bf16.mxu0 0
    %2739 = vmatpush2.bf16.xpose.msra.mxu0 0
    %2740 = vmatprep.subr.bf16.mxu0 0
    %2741 = vmatpush2.bf16.xpose.msra.mxu0 0
    %2742 = vmatprep.subr.bf16.mxu0 0
    %2743 = vmatpush2.bf16.xpose.msra.mxu0 0
    %2744 = vmatprep.subr.bf16.mxu0 0
    %2745 = vmatpush2.bf16.xpose.msra.mxu0 0
    %2746 = vmatprep.mubr.bf16.mxu0 0
    %2747 = vmatmul.mubr.bf16.gmra.mxu0 %v2709
    %v2748 = vpop.f32.mrf.mxu0
    %v2749 = vadd.f32 0.0, %v2748
    %v2750 = vpop.f32.mrf.mxu0
    %v2751 = vpop.f32.mrf.mxu0
    %v2752 = vpop.f32.mrf.mxu0
    %2753 = vdwg.mxu0
    %2755 = vrot.lane.b32.xlu0 %v2650, 120
    %v2756 = vpop.permute.xlu0 %2755
    %v2758 = vsel %vm580, %v2650, 0
    %v2761 = vsel %vm580, %v2756, 0
    %2763 = vmatprep.subr.bf16.mxu0 0
    %2764 = vmatpush1.bf16.xpose.msra.mxu0 0
    %2765 = vmatprep.subr.bf16.mxu0 0
    %2766 = vmatpush1.bf16.xpose.msra.mxu0 0
    %2767 = vmatprep.subr.bf16.mxu0 0
    %2768 = vmatpush1.bf16.xpose.msra.mxu0 0
    %2769 = vmatprep.subr.bf16.mxu0 0
    %2770 = vmatpush1.bf16.xpose.msra.mxu0 0
    %2771 = vmatprep.subr.bf16.mxu0 0
    %2772 = vmatpush1.bf16.xpose.msra.mxu0 0
    %2773 = vmatprep.subr.bf16.mxu0 0
    %2774 = vmatpush1.bf16.xpose.msra.mxu0 0
    %2775 = vmatprep.subr.bf16.mxu0 0
    %2776 = vmatpush1.bf16.xpose.msra.mxu0 0
    %2777 = vmatprep.subr.bf16.mxu0 0
    %2778 = vmatpush1.bf16.xpose.msra.mxu0 %v2761
    %2779 = vmatprep.subr.bf16.mxu0 0
    %2780 = vmatpush2.bf16.xpose.msra.mxu0 0
    %2781 = vmatprep.subr.bf16.mxu0 0
    %2782 = vmatpush2.bf16.xpose.msra.mxu0 0
    %2783 = vmatprep.subr.bf16.mxu0 0
    %2784 = vmatpush2.bf16.xpose.msra.mxu0 0
    %2785 = vmatprep.subr.bf16.mxu0 0
    %2786 = vmatpush2.bf16.xpose.msra.mxu0 0
    %2787 = vmatprep.subr.bf16.mxu0 0
    %2788 = vmatpush2.bf16.xpose.msra.mxu0 0
    %2789 = vmatprep.subr.bf16.mxu0 0
    %2790 = vmatpush2.bf16.xpose.msra.mxu0 0
    %2791 = vmatprep.subr.bf16.mxu0 0
    %2792 = vmatpush2.bf16.xpose.msra.mxu0 0
    %2793 = vmatprep.subr.bf16.mxu0 0
    %2794 = vmatpush2.bf16.xpose.msra.mxu0 0
    %2795 = vmatprep.mubr.bf16.mxu0 0
    %2796 = vmatmul.mubr.bf16.gmra.mxu0 %v2758
    %v2797 = vpop.f32.mrf.mxu0
    %v2798 = vadd.f32 0.0, %v2797
    %v2799 = vpop.f32.mrf.mxu0
    %v2800 = vpop.f32.mrf.mxu0
    %v2801 = vpop.f32.mrf.mxu0
    %2802 = vdwg.mxu0
    %2804 = vrot.lane.b32.xlu0 %v2651, 120
    %v2805 = vpop.permute.xlu0 %2804
    %v2807 = vsel %vm580, %v2651, 0
    %v2810 = vsel %vm580, %v2805, 0
    %2812 = vmatprep.subr.bf16.mxu0 0
    %2813 = vmatpush1.bf16.xpose.msra.mxu0 0
    %2814 = vmatprep.subr.bf16.mxu0 0
    %2815 = vmatpush1.bf16.xpose.msra.mxu0 0
    %2816 = vmatprep.subr.bf16.mxu0 0
    %2817 = vmatpush1.bf16.xpose.msra.mxu0 0
    %2818 = vmatprep.subr.bf16.mxu0 0
    %2819 = vmatpush1.bf16.xpose.msra.mxu0 0
    %2820 = vmatprep.subr.bf16.mxu0 0
    %2821 = vmatpush1.bf16.xpose.msra.mxu0 0
    %2822 = vmatprep.subr.bf16.mxu0 0
    %2823 = vmatpush1.bf16.xpose.msra.mxu0 0
    %2824 = vmatprep.subr.bf16.mxu0 0
    %2825 = vmatpush1.bf16.xpose.msra.mxu0 0
    %2826 = vmatprep.subr.bf16.mxu0 0
    %2827 = vmatpush1.bf16.xpose.msra.mxu0 %v2810
    %2828 = vmatprep.subr.bf16.mxu0 0
    %2829 = vmatpush2.bf16.xpose.msra.mxu0 0
    %2830 = vmatprep.subr.bf16.mxu0 0
    %2831 = vmatpush2.bf16.xpose.msra.mxu0 0
    %2832 = vmatprep.subr.bf16.mxu0 0
    %2833 = vmatpush2.bf16.xpose.msra.mxu0 0
    %2834 = vmatprep.subr.bf16.mxu0 0
    %2835 = vmatpush2.bf16.xpose.msra.mxu0 0
    %2836 = vmatprep.subr.bf16.mxu0 0
    %2837 = vmatpush2.bf16.xpose.msra.mxu0 0
    %2838 = vmatprep.subr.bf16.mxu0 0
    %2839 = vmatpush2.bf16.xpose.msra.mxu0 0
    %2840 = vmatprep.subr.bf16.mxu0 0
    %2841 = vmatpush2.bf16.xpose.msra.mxu0 0
    %2842 = vmatprep.subr.bf16.mxu0 0
    %2843 = vmatpush2.bf16.xpose.msra.mxu0 0
    %2844 = vmatprep.mubr.bf16.mxu0 0
    %2845 = vmatmul.mubr.bf16.gmra.mxu0 %v2807
    %v2846 = vpop.f32.mrf.mxu0
    %v2847 = vadd.f32 0.0, %v2846
    %v2848 = vpop.f32.mrf.mxu0
    %v2849 = vpop.f32.mrf.mxu0
    %v2850 = vpop.f32.mrf.mxu0
    %2851 = vdwg.mxu0
    %2853 = vrot.lane.b32.xlu0 %v2652, 120
    %v2854 = vpop.permute.xlu0 %2853
    %v2856 = vsel %vm580, %v2652, 0
    %v2859 = vsel %vm580, %v2854, 0
    %2861 = vmatprep.subr.bf16.mxu0 0
    %2862 = vmatpush1.bf16.xpose.msra.mxu0 0
    %2863 = vmatprep.subr.bf16.mxu0 0
    %2864 = vmatpush1.bf16.xpose.msra.mxu0 0
    %2865 = vmatprep.subr.bf16.mxu0 0
    %2866 = vmatpush1.bf16.xpose.msra.mxu0 0
    %2867 = vmatprep.subr.bf16.mxu0 0
    %2868 = vmatpush1.bf16.xpose.msra.mxu0 0
    %2869 = vmatprep.subr.bf16.mxu0 0
    %2870 = vmatpush1.bf16.xpose.msra.mxu0 0
    %2871 = vmatprep.subr.bf16.mxu0 0
    %2872 = vmatpush1.bf16.xpose.msra.mxu0 0
    %2873 = vmatprep.subr.bf16.mxu0 0
    %2874 = vmatpush1.bf16.xpose.msra.mxu0 0
    %2875 = vmatprep.subr.bf16.mxu0 0
    %2876 = vmatpush1.bf16.xpose.msra.mxu0 %v2859
    %2877 = vmatprep.subr.bf16.mxu0 0
    %2878 = vmatpush2.bf16.xpose.msra.mxu0 0
    %2879 = vmatprep.subr.bf16.mxu0 0
    %2880 = vmatpush2.bf16.xpose.msra.mxu0 0
    %2881 = vmatprep.subr.bf16.mxu0 0
    %2882 = vmatpush2.bf16.xpose.msra.mxu0 0
    %2883 = vmatprep.subr.bf16.mxu0 0
    %2884 = vmatpush2.bf16.xpose.msra.mxu0 0
    %2885 = vmatprep.subr.bf16.mxu0 0
    %2886 = vmatpush2.bf16.xpose.msra.mxu0 0
    %2887 = vmatprep.subr.bf16.mxu0 0
    %2888 = vmatpush2.bf16.xpose.msra.mxu0 0
    %2889 = vmatprep.subr.bf16.mxu0 0
    %2890 = vmatpush2.bf16.xpose.msra.mxu0 0
    %2891 = vmatprep.subr.bf16.mxu0 0
    %2892 = vmatpush2.bf16.xpose.msra.mxu0 0
    %2893 = vmatprep.mubr.bf16.mxu0 0
    %2894 = vmatmul.mubr.bf16.gmra.mxu0 %v2856
    %v2895 = vpop.f32.mrf.mxu0
    %v2896 = vadd.f32 0.0, %v2895
    %v2897 = vpop.f32.mrf.mxu0
    %v2898 = vpop.f32.mrf.mxu0
    %v2899 = vpop.f32.mrf.mxu0
    %2900 = vdwg.mxu0
    %2902 = vrot.lane.b32.xlu0 %v2653, 120
    %v2903 = vpop.permute.xlu0 %2902
    %v2905 = vsel %vm580, %v2653, 0
    %v2908 = vsel %vm580, %v2903, 0
    %2910 = vmatprep.subr.bf16.mxu0 0
    %2911 = vmatpush1.bf16.xpose.msra.mxu0 0
    %2912 = vmatprep.subr.bf16.mxu0 0
    %2913 = vmatpush1.bf16.xpose.msra.mxu0 0
    %2914 = vmatprep.subr.bf16.mxu0 0
    %2915 = vmatpush1.bf16.xpose.msra.mxu0 0
    %2916 = vmatprep.subr.bf16.mxu0 0
    %2917 = vmatpush1.bf16.xpose.msra.mxu0 0
    %2918 = vmatprep.subr.bf16.mxu0 0
    %2919 = vmatpush1.bf16.xpose.msra.mxu0 0
    %2920 = vmatprep.subr.bf16.mxu0 0
    %2921 = vmatpush1.bf16.xpose.msra.mxu0 0
    %2922 = vmatprep.subr.bf16.mxu0 0
    %2923 = vmatpush1.bf16.xpose.msra.mxu0 0
    %2924 = vmatprep.subr.bf16.mxu0 0
    %2925 = vmatpush1.bf16.xpose.msra.mxu0 %v2908
    %2926 = vmatprep.subr.bf16.mxu0 0
    %2927 = vmatpush2.bf16.xpose.msra.mxu0 0
    %2928 = vmatprep.subr.bf16.mxu0 0
    %2929 = vmatpush2.bf16.xpose.msra.mxu0 0
    %2930 = vmatprep.subr.bf16.mxu0 0
    %2931 = vmatpush2.bf16.xpose.msra.mxu0 0
    %2932 = vmatprep.subr.bf16.mxu0 0
    %2933 = vmatpush2.bf16.xpose.msra.mxu0 0
    %2934 = vmatprep.subr.bf16.mxu0 0
    %2935 = vmatpush2.bf16.xpose.msra.mxu0 0
    %2936 = vmatprep.subr.bf16.mxu0 0
    %2937 = vmatpush2.bf16.xpose.msra.mxu0 0
    %2938 = vmatprep.subr.bf16.mxu0 0
    %2939 = vmatpush2.bf16.xpose.msra.mxu0 0
    %2940 = vmatprep.subr.bf16.mxu0 0
    %2941 = vmatpush2.bf16.xpose.msra.mxu0 0
    %2942 = vmatprep.mubr.bf16.mxu0 0
    %2943 = vmatmul.mubr.bf16.gmra.mxu0 %v2905
    %v2944 = vpop.f32.mrf.mxu0
    %v2945 = vadd.f32 0.0, %v2944
    %v2946 = vpop.f32.mrf.mxu0
    %v2947 = vpop.f32.mrf.mxu0
    %v2948 = vpop.f32.mrf.mxu0
    %2949 = vdwg.mxu0
    %2951 = vrot.lane.b32.xlu0 %v2654, 120
    %v2952 = vpop.permute.xlu0 %2951
    %v2954 = vsel %vm580, %v2654, 0
    %v2957 = vsel %vm580, %v2952, 0
    %2959 = vmatprep.subr.bf16.mxu0 0
    %2960 = vmatpush1.bf16.xpose.msra.mxu0 0
    %2961 = vmatprep.subr.bf16.mxu0 0
    %2962 = vmatpush1.bf16.xpose.msra.mxu0 0
    %2963 = vmatprep.subr.bf16.mxu0 0
    %2964 = vmatpush1.bf16.xpose.msra.mxu0 0
    %2965 = vmatprep.subr.bf16.mxu0 0
    %2966 = vmatpush1.bf16.xpose.msra.mxu0 0
    %2967 = vmatprep.subr.bf16.mxu0 0
    %2968 = vmatpush1.bf16.xpose.msra.mxu0 0
    %2969 = vmatprep.subr.bf16.mxu0 0
    %2970 = vmatpush1.bf16.xpose.msra.mxu0 0
    %2971 = vmatprep.subr.bf16.mxu0 0
    %2972 = vmatpush1.bf16.xpose.msra.mxu0 0
    %2973 = vmatprep.subr.bf16.mxu0 0
    %2974 = vmatpush1.bf16.xpose.msra.mxu0 %v2957
    %2975 = vmatprep.subr.bf16.mxu0 0
    %2976 = vmatpush2.bf16.xpose.msra.mxu0 0
    %2977 = vmatprep.subr.bf16.mxu0 0
    %2978 = vmatpush2.bf16.xpose.msra.mxu0 0
    %2979 = vmatprep.subr.bf16.mxu0 0
    %2980 = vmatpush2.bf16.xpose.msra.mxu0 0
    %2981 = vmatprep.subr.bf16.mxu0 0
    %2982 = vmatpush2.bf16.xpose.msra.mxu0 0
    %2983 = vmatprep.subr.bf16.mxu0 0
    %2984 = vmatpush2.bf16.xpose.msra.mxu0 0
    %2985 = vmatprep.subr.bf16.mxu0 0
    %2986 = vmatpush2.bf16.xpose.msra.mxu0 0
    %2987 = vmatprep.subr.bf16.mxu0 0
    %2988 = vmatpush2.bf16.xpose.msra.mxu0 0
    %2989 = vmatprep.subr.bf16.mxu0 0
    %2990 = vmatpush2.bf16.xpose.msra.mxu0 0
    %2991 = vmatprep.mubr.bf16.mxu0 0
    %2992 = vmatmul.mubr.bf16.gmra.mxu0 %v2954
    %v2993 = vpop.f32.mrf.mxu0
    %v2994 = vadd.f32 0.0, %v2993
    %v2995 = vpop.f32.mrf.mxu0
    %v2996 = vpop.f32.mrf.mxu0
    %v2997 = vpop.f32.mrf.mxu0
    %2998 = vdwg.mxu0
    %3000 = vrot.lane.b32.xlu0 %v2655, 120
    %v3001 = vpop.permute.xlu0 %3000
    %v3003 = vsel %vm580, %v2655, 0
    %v3006 = vsel %vm580, %v3001, 0
    %3008 = vmatprep.subr.bf16.mxu0 0
    %3009 = vmatpush1.bf16.xpose.msra.mxu0 0
    %3010 = vmatprep.subr.bf16.mxu0 0
    %3011 = vmatpush1.bf16.xpose.msra.mxu0 0
    %3012 = vmatprep.subr.bf16.mxu0 0
    %3013 = vmatpush1.bf16.xpose.msra.mxu0 0
    %3014 = vmatprep.subr.bf16.mxu0 0
    %3015 = vmatpush1.bf16.xpose.msra.mxu0 0
    %3016 = vmatprep.subr.bf16.mxu0 0
    %3017 = vmatpush1.bf16.xpose.msra.mxu0 0
    %3018 = vmatprep.subr.bf16.mxu0 0
    %3019 = vmatpush1.bf16.xpose.msra.mxu0 0
    %3020 = vmatprep.subr.bf16.mxu0 0
    %3021 = vmatpush1.bf16.xpose.msra.mxu0 0
    %3022 = vmatprep.subr.bf16.mxu0 0
    %3023 = vmatpush1.bf16.xpose.msra.mxu0 %v3006
    %3024 = vmatprep.subr.bf16.mxu0 0
    %3025 = vmatpush2.bf16.xpose.msra.mxu0 0
    %3026 = vmatprep.subr.bf16.mxu0 0
    %3027 = vmatpush2.bf16.xpose.msra.mxu0 0
    %3028 = vmatprep.subr.bf16.mxu0 0
    %3029 = vmatpush2.bf16.xpose.msra.mxu0 0
    %3030 = vmatprep.subr.bf16.mxu0 0
    %3031 = vmatpush2.bf16.xpose.msra.mxu0 0
    %3032 = vmatprep.subr.bf16.mxu0 0
    %3033 = vmatpush2.bf16.xpose.msra.mxu0 0
    %3034 = vmatprep.subr.bf16.mxu0 0
    %3035 = vmatpush2.bf16.xpose.msra.mxu0 0
    %3036 = vmatprep.subr.bf16.mxu0 0
    %3037 = vmatpush2.bf16.xpose.msra.mxu0 0
    %3038 = vmatprep.subr.bf16.mxu0 0
    %3039 = vmatpush2.bf16.xpose.msra.mxu0 0
    %3040 = vmatprep.mubr.bf16.mxu0 0
    %3041 = vmatmul.mubr.bf16.gmra.mxu0 %v3003
    %v3042 = vpop.f32.mrf.mxu0
    %v3043 = vadd.f32 0.0, %v3042
    %v3044 = vpop.f32.mrf.mxu0
    %v3045 = vpop.f32.mrf.mxu0
    %v3046 = vpop.f32.mrf.mxu0
    %3047 = vdwg.mxu0
    %v3048 = vmul.f32 %v2700, 0.35355338
    %v3049 = vmul.f32 %v2749, 0.35355338
    %v3050 = vmul.f32 %v2798, 0.35355338
    %v3051 = vmul.f32 %v2847, 0.35355338
    %v3052 = vmul.f32 %v2896, 0.35355338
    %v3053 = vmul.f32 %v2945, 0.35355338
    %v3054 = vmul.f32 %v2994, 0.35355338
    %v3055 = vmul.f32 %v3043, 0.35355338
    %v3056 = vsel %vm580, %v3048, -inf
    %3057 = vmax.xlane.f32.xlu0 %v3056
    %v3058 = vpop.xlane.xlu0 %3057
    %v3059 = vsel %vm580, %v3049, -inf
    %3060 = vmax.xlane.f32.xlu0 %v3059
    %v3061 = vpop.xlane.xlu0 %3060
    %v3062 = vsel %vm580, %v3050, -inf
    %3063 = vmax.xlane.f32.xlu0 %v3062
    %v3064 = vpop.xlane.xlu0 %3063
    %v3065 = vsel %vm580, %v3051, -inf
    %3066 = vmax.xlane.f32.xlu0 %v3065
    %v3067 = vpop.xlane.xlu0 %3066
    %v3068 = vsel %vm580, %v3052, -inf
    %3069 = vmax.xlane.f32.xlu0 %v3068
    %v3070 = vpop.xlane.xlu0 %3069
    %v3071 = vsel %vm580, %v3053, -inf
    %3072 = vmax.xlane.f32.xlu0 %v3071
    %v3073 = vpop.xlane.xlu0 %3072
    %v3074 = vsel %vm580, %v3054, -inf
    %3075 = vmax.xlane.f32.xlu0 %v3074
    %v3076 = vpop.xlane.xlu0 %3075
    %v3077 = vsel %vm580, %v3055, -inf
    %3078 = vmax.xlane.f32.xlu0 %v3077
    %v3079 = vpop.xlane.xlu0 %3078
    %v3080 = vsub.f32 %v3048, %v3058
    %v3081 = vsub.f32 %v3049, %v3061
    %v3082 = vsub.f32 %v3050, %v3064
    %v3083 = vsub.f32 %v3051, %v3067
    %v3084 = vsub.f32 %v3052, %v3070
    %v3085 = vsub.f32 %v3053, %v3073
    %v3086 = vsub.f32 %v3054, %v3076
    %v3087 = vsub.f32 %v3055, %v3079
    %v3088 = vmul.f32 %v3080, 1.442695
    %v3089 = vpow.pop %v3088
    %v3090 = vmul.f32 %v3081, 1.442695
    %v3091 = vpow.pop %v3090
    %v3092 = vmul.f32 %v3082, 1.442695
    %v3093 = vpow.pop %v3092
    %v3094 = vmul.f32 %v3083, 1.442695
    %v3095 = vpow.pop %v3094
    %v3096 = vmul.f32 %v3084, 1.442695
    %v3097 = vpow.pop %v3096
    %v3098 = vmul.f32 %v3085, 1.442695
    %v3099 = vpow.pop %v3098
    %v3100 = vmul.f32 %v3086, 1.442695
    %v3101 = vpow.pop %v3100
    %v3102 = vmul.f32 %v3087, 1.442695
    %v3103 = vpow.pop %v3102
    %v3104 = vsel %vm580, %v3089, 0.0
    %3105 = vadd.xlane.f32.xlu0 %v3104
    %v3106 = vpop.xlane.xlu0 %3105
    %v3107 = vsel %vm580, %v3091, 0.0
    %3108 = vadd.xlane.f32.xlu0 %v3107
    %v3109 = vpop.xlane.xlu0 %3108
    %v3110 = vsel %vm580, %v3093, 0.0
    %3111 = vadd.xlane.f32.xlu0 %v3110
    %v3112 = vpop.xlane.xlu0 %3111
    %v3113 = vsel %vm580, %v3095, 0.0
    %3114 = vadd.xlane.f32.xlu0 %v3113
    %v3115 = vpop.xlane.xlu0 %3114
    %v3116 = vsel %vm580, %v3097, 0.0
    %3117 = vadd.xlane.f32.xlu0 %v3116
    %v3118 = vpop.xlane.xlu0 %3117
    %v3119 = vsel %vm580, %v3099, 0.0
    %3120 = vadd.xlane.f32.xlu0 %v3119
    %v3121 = vpop.xlane.xlu0 %3120
    %v3122 = vsel %vm580, %v3101, 0.0
    %3123 = vadd.xlane.f32.xlu0 %v3122
    %v3124 = vpop.xlane.xlu0 %3123
    %v3125 = vsel %vm580, %v3103, 0.0
    %3126 = vadd.xlane.f32.xlu0 %v3125
    %v3127 = vpop.xlane.xlu0 %3126
    %v3128 = vrcp.pop %v3106
    %v3129 = vrcp.pop %v3109
    %v3130 = vrcp.pop %v3112
    %v3131 = vrcp.pop %v3115
    %v3132 = vrcp.pop %v3118
    %v3133 = vrcp.pop %v3121
    %v3134 = vrcp.pop %v3124
    %v3135 = vrcp.pop %v3127
    %v3136 = vmul.f32 %v3089, %v3128
    %v3137 = vmul.f32 %v3091, %v3129
    %v3138 = vmul.f32 %v3093, %v3130
    %v3139 = vmul.f32 %v3095, %v3131
    %v3140 = vmul.f32 %v3097, %v3132
    %v3141 = vmul.f32 %v3099, %v3133
    %v3142 = vmul.f32 %v3101, %v3134
    %v3143 = vmul.f32 %v3103, %v3135
    %v3144 = vpack.c.bf16 %v3136, %v3136
    %v3145 = vpack.c.bf16 %v3137, %v3137
    %v3146 = vpack.c.bf16 %v3138, %v3138
    %v3147 = vpack.c.bf16 %v3139, %v3139
    %v3148 = vpack.c.bf16 %v3140, %v3140
    %v3149 = vpack.c.bf16 %v3141, %v3141
    %v3150 = vpack.c.bf16 %v3142, %v3142
    %v3151 = vpack.c.bf16 %v3143, %v3143
    %3152 = vrot.lane.b32.xlu0 %v2648, 112
    %v3153 = vpop.permute.xlu0 %3152
    %v3155 = vsel %vm580, %v3144, 0
    %v3158 = vsel %vm1079, %v3153, 0
    %3160 = vmatprep.subr.bf16.mxu0 0
    %3161 = vmatpush1.bf16.msra.mxu0 0
    %3162 = vmatprep.subr.bf16.mxu0 0
    %3163 = vmatpush1.bf16.msra.mxu0 0
    %3164 = vmatprep.subr.bf16.mxu0 0
    %3165 = vmatpush1.bf16.msra.mxu0 0
    %3166 = vmatprep.subr.bf16.mxu0 0
    %3167 = vmatpush1.bf16.msra.mxu0 0
    %3168 = vmatprep.subr.bf16.mxu0 0
    %3169 = vmatpush1.bf16.msra.mxu0 0
    %3170 = vmatprep.subr.bf16.mxu0 0
    %3171 = vmatpush1.bf16.msra.mxu0 0
    %3172 = vmatprep.subr.bf16.mxu0 0
    %3173 = vmatpush1.bf16.msra.mxu0 0
    %3174 = vmatprep.subr.bf16.mxu0 0
    %3175 = vmatpush1.bf16.msra.mxu0 %v3158
    %3176 = vmatprep.subr.bf16.mxu0 0
    %3177 = vmatpush2.bf16.msra.mxu0 0
    %3178 = vmatprep.subr.bf16.mxu0 0
    %3179 = vmatpush2.bf16.msra.mxu0 0
    %3180 = vmatprep.subr.bf16.mxu0 0
    %3181 = vmatpush2.bf16.msra.mxu0 0
    %3182 = vmatprep.subr.bf16.mxu0 0
    %3183 = vmatpush2.bf16.msra.mxu0 0
    %3184 = vmatprep.subr.bf16.mxu0 0
    %3185 = vmatpush2.bf16.msra.mxu0 0
    %3186 = vmatprep.subr.bf16.mxu0 0
    %3187 = vmatpush2.bf16.msra.mxu0 0
    %3188 = vmatprep.subr.bf16.mxu0 0
    %3189 = vmatpush2.bf16.msra.mxu0 0
    %3190 = vmatprep.subr.bf16.mxu0 0
    %3191 = vmatpush2.bf16.msra.mxu0 0
    %3192 = vmatprep.mubr.bf16.mxu0 0
    %3193 = vmatmul.mubr.bf16.gmra.mxu0 %v3155
    %v3194 = vpop.f32.mrf.mxu0
    %v3195 = vadd.f32 0.0, %v3194
    %v3196 = vpop.f32.mrf.mxu0
    %v3197 = vpop.f32.mrf.mxu0
    %v3198 = vpop.f32.mrf.mxu0
    %3199 = vdwg.mxu0
    %3200 = vrot.lane.b32.xlu0 %v2649, 112
    %v3201 = vpop.permute.xlu0 %3200
    %v3203 = vsel %vm580, %v3145, 0
    %v3206 = vsel %vm1079, %v3201, 0
    %3208 = vmatprep.subr.bf16.mxu0 0
    %3209 = vmatpush1.bf16.msra.mxu0 0
    %3210 = vmatprep.subr.bf16.mxu0 0
    %3211 = vmatpush1.bf16.msra.mxu0 0
    %3212 = vmatprep.subr.bf16.mxu0 0
    %3213 = vmatpush1.bf16.msra.mxu0 0
    %3214 = vmatprep.subr.bf16.mxu0 0
    %3215 = vmatpush1.bf16.msra.mxu0 0
    %3216 = vmatprep.subr.bf16.mxu0 0
    %3217 = vmatpush1.bf16.msra.mxu0 0
    %3218 = vmatprep.subr.bf16.mxu0 0
    %3219 = vmatpush1.bf16.msra.mxu0 0
    %3220 = vmatprep.subr.bf16.mxu0 0
    %3221 = vmatpush1.bf16.msra.mxu0 0
    %3222 = vmatprep.subr.bf16.mxu0 0
    %3223 = vmatpush1.bf16.msra.mxu0 %v3206
    %3224 = vmatprep.subr.bf16.mxu0 0
    %3225 = vmatpush2.bf16.msra.mxu0 0
    %3226 = vmatprep.subr.bf16.mxu0 0
    %3227 = vmatpush2.bf16.msra.mxu0 0
    %3228 = vmatprep.subr.bf16.mxu0 0
    %3229 = vmatpush2.bf16.msra.mxu0 0
    %3230 = vmatprep.subr.bf16.mxu0 0
    %3231 = vmatpush2.bf16.msra.mxu0 0
    %3232 = vmatprep.subr.bf16.mxu0 0
    %3233 = vmatpush2.bf16.msra.mxu0 0
    %3234 = vmatprep.subr.bf16.mxu0 0
    %3235 = vmatpush2.bf16.msra.mxu0 0
    %3236 = vmatprep.subr.bf16.mxu0 0
    %3237 = vmatpush2.bf16.msra.mxu0 0
    %3238 = vmatprep.subr.bf16.mxu0 0
    %3239 = vmatpush2.bf16.msra.mxu0 0
    %3240 = vmatprep.mubr.bf16.mxu0 0
    %3241 = vmatmul.mubr.bf16.gmra.mxu0 %v3203
    %v3242 = vpop.f32.mrf.mxu0
    %v3243 = vadd.f32 0.0, %v3242
    %v3244 = vpop.f32.mrf.mxu0
    %v3245 = vpop.f32.mrf.mxu0
    %v3246 = vpop.f32.mrf.mxu0
    %3247 = vdwg.mxu0
    %3248 = vrot.lane.b32.xlu0 %v2650, 112
    %v3249 = vpop.permute.xlu0 %3248
    %v3251 = vsel %vm580, %v3146, 0
    %v3254 = vsel %vm1079, %v3249, 0
    %3256 = vmatprep.subr.bf16.mxu0 0
    %3257 = vmatpush1.bf16.msra.mxu0 0
    %3258 = vmatprep.subr.bf16.mxu0 0
    %3259 = vmatpush1.bf16.msra.mxu0 0
    %3260 = vmatprep.subr.bf16.mxu0 0
    %3261 = vmatpush1.bf16.msra.mxu0 0
    %3262 = vmatprep.subr.bf16.mxu0 0
    %3263 = vmatpush1.bf16.msra.mxu0 0
    %3264 = vmatprep.subr.bf16.mxu0 0
    %3265 = vmatpush1.bf16.msra.mxu0 0
    %3266 = vmatprep.subr.bf16.mxu0 0
    %3267 = vmatpush1.bf16.msra.mxu0 0
    %3268 = vmatprep.subr.bf16.mxu0 0
    %3269 = vmatpush1.bf16.msra.mxu0 0
    %3270 = vmatprep.subr.bf16.mxu0 0
    %3271 = vmatpush1.bf16.msra.mxu0 %v3254
    %3272 = vmatprep.subr.bf16.mxu0 0
    %3273 = vmatpush2.bf16.msra.mxu0 0
    %3274 = vmatprep.subr.bf16.mxu0 0
    %3275 = vmatpush2.bf16.msra.mxu0 0
    %3276 = vmatprep.subr.bf16.mxu0 0
    %3277 = vmatpush2.bf16.msra.mxu0 0
    %3278 = vmatprep.subr.bf16.mxu0 0
    %3279 = vmatpush2.bf16.msra.mxu0 0
    %3280 = vmatprep.subr.bf16.mxu0 0
    %3281 = vmatpush2.bf16.msra.mxu0 0
    %3282 = vmatprep.subr.bf16.mxu0 0
    %3283 = vmatpush2.bf16.msra.mxu0 0
    %3284 = vmatprep.subr.bf16.mxu0 0
    %3285 = vmatpush2.bf16.msra.mxu0 0
    %3286 = vmatprep.subr.bf16.mxu0 0
    %3287 = vmatpush2.bf16.msra.mxu0 0
    %3288 = vmatprep.mubr.bf16.mxu0 0
    %3289 = vmatmul.mubr.bf16.gmra.mxu0 %v3251
    %v3290 = vpop.f32.mrf.mxu0
    %v3291 = vadd.f32 0.0, %v3290
    %v3292 = vpop.f32.mrf.mxu0
    %v3293 = vpop.f32.mrf.mxu0
    %v3294 = vpop.f32.mrf.mxu0
    %3295 = vdwg.mxu0
    %3296 = vrot.lane.b32.xlu0 %v2651, 112
    %v3297 = vpop.permute.xlu0 %3296
    %v3299 = vsel %vm580, %v3147, 0
    %v3302 = vsel %vm1079, %v3297, 0
    %3304 = vmatprep.subr.bf16.mxu0 0
    %3305 = vmatpush1.bf16.msra.mxu0 0
    %3306 = vmatprep.subr.bf16.mxu0 0
    %3307 = vmatpush1.bf16.msra.mxu0 0
    %3308 = vmatprep.subr.bf16.mxu0 0
    %3309 = vmatpush1.bf16.msra.mxu0 0
    %3310 = vmatprep.subr.bf16.mxu0 0
    %3311 = vmatpush1.bf16.msra.mxu0 0
    %3312 = vmatprep.subr.bf16.mxu0 0
    %3313 = vmatpush1.bf16.msra.mxu0 0
    %3314 = vmatprep.subr.bf16.mxu0 0
    %3315 = vmatpush1.bf16.msra.mxu0 0
    %3316 = vmatprep.subr.bf16.mxu0 0
    %3317 = vmatpush1.bf16.msra.mxu0 0
    %3318 = vmatprep.subr.bf16.mxu0 0
    %3319 = vmatpush1.bf16.msra.mxu0 %v3302
    %3320 = vmatprep.subr.bf16.mxu0 0
    %3321 = vmatpush2.bf16.msra.mxu0 0
    %3322 = vmatprep.subr.bf16.mxu0 0
    %3323 = vmatpush2.bf16.msra.mxu0 0
    %3324 = vmatprep.subr.bf16.mxu0 0
    %3325 = vmatpush2.bf16.msra.mxu0 0
    %3326 = vmatprep.subr.bf16.mxu0 0
    %3327 = vmatpush2.bf16.msra.mxu0 0
    %3328 = vmatprep.subr.bf16.mxu0 0
    %3329 = vmatpush2.bf16.msra.mxu0 0
    %3330 = vmatprep.subr.bf16.mxu0 0
    %3331 = vmatpush2.bf16.msra.mxu0 0
    %3332 = vmatprep.subr.bf16.mxu0 0
    %3333 = vmatpush2.bf16.msra.mxu0 0
    %3334 = vmatprep.subr.bf16.mxu0 0
    %3335 = vmatpush2.bf16.msra.mxu0 0
    %3336 = vmatprep.mubr.bf16.mxu0 0
    %3337 = vmatmul.mubr.bf16.gmra.mxu0 %v3299
    %v3338 = vpop.f32.mrf.mxu0
    %v3339 = vadd.f32 0.0, %v3338
    %v3340 = vpop.f32.mrf.mxu0
    %v3341 = vpop.f32.mrf.mxu0
    %v3342 = vpop.f32.mrf.mxu0
    %3343 = vdwg.mxu0
    %3344 = vrot.lane.b32.xlu0 %v2652, 112
    %v3345 = vpop.permute.xlu0 %3344
    %v3347 = vsel %vm580, %v3148, 0
    %v3350 = vsel %vm1079, %v3345, 0
    %3352 = vmatprep.subr.bf16.mxu0 0
    %3353 = vmatpush1.bf16.msra.mxu0 0
    %3354 = vmatprep.subr.bf16.mxu0 0
    %3355 = vmatpush1.bf16.msra.mxu0 0
    %3356 = vmatprep.subr.bf16.mxu0 0
    %3357 = vmatpush1.bf16.msra.mxu0 0
    %3358 = vmatprep.subr.bf16.mxu0 0
    %3359 = vmatpush1.bf16.msra.mxu0 0
    %3360 = vmatprep.subr.bf16.mxu0 0
    %3361 = vmatpush1.bf16.msra.mxu0 0
    %3362 = vmatprep.subr.bf16.mxu0 0
    %3363 = vmatpush1.bf16.msra.mxu0 0
    %3364 = vmatprep.subr.bf16.mxu0 0
    %3365 = vmatpush1.bf16.msra.mxu0 0
    %3366 = vmatprep.subr.bf16.mxu0 0
    %3367 = vmatpush1.bf16.msra.mxu0 %v3350
    %3368 = vmatprep.subr.bf16.mxu0 0
    %3369 = vmatpush2.bf16.msra.mxu0 0
    %3370 = vmatprep.subr.bf16.mxu0 0
    %3371 = vmatpush2.bf16.msra.mxu0 0
    %3372 = vmatprep.subr.bf16.mxu0 0
    %3373 = vmatpush2.bf16.msra.mxu0 0
    %3374 = vmatprep.subr.bf16.mxu0 0
    %3375 = vmatpush2.bf16.msra.mxu0 0
    %3376 = vmatprep.subr.bf16.mxu0 0
    %3377 = vmatpush2.bf16.msra.mxu0 0
    %3378 = vmatprep.subr.bf16.mxu0 0
    %3379 = vmatpush2.bf16.msra.mxu0 0
    %3380 = vmatprep.subr.bf16.mxu0 0
    %3381 = vmatpush2.bf16.msra.mxu0 0
    %3382 = vmatprep.subr.bf16.mxu0 0
    %3383 = vmatpush2.bf16.msra.mxu0 0
    %3384 = vmatprep.mubr.bf16.mxu0 0
    %3385 = vmatmul.mubr.bf16.gmra.mxu0 %v3347
    %v3386 = vpop.f32.mrf.mxu0
    %v3387 = vadd.f32 0.0, %v3386
    %v3388 = vpop.f32.mrf.mxu0
    %v3389 = vpop.f32.mrf.mxu0
    %v3390 = vpop.f32.mrf.mxu0
    %3391 = vdwg.mxu0
    %3392 = vrot.lane.b32.xlu0 %v2653, 112
    %v3393 = vpop.permute.xlu0 %3392
    %v3395 = vsel %vm580, %v3149, 0
    %v3398 = vsel %vm1079, %v3393, 0
    %3400 = vmatprep.subr.bf16.mxu0 0
    %3401 = vmatpush1.bf16.msra.mxu0 0
    %3402 = vmatprep.subr.bf16.mxu0 0
    %3403 = vmatpush1.bf16.msra.mxu0 0
    %3404 = vmatprep.subr.bf16.mxu0 0
    %3405 = vmatpush1.bf16.msra.mxu0 0
    %3406 = vmatprep.subr.bf16.mxu0 0
    %3407 = vmatpush1.bf16.msra.mxu0 0
    %3408 = vmatprep.subr.bf16.mxu0 0
    %3409 = vmatpush1.bf16.msra.mxu0 0
    %3410 = vmatprep.subr.bf16.mxu0 0
    %3411 = vmatpush1.bf16.msra.mxu0 0
    %3412 = vmatprep.subr.bf16.mxu0 0
    %3413 = vmatpush1.bf16.msra.mxu0 0
    %3414 = vmatprep.subr.bf16.mxu0 0
    %3415 = vmatpush1.bf16.msra.mxu0 %v3398
    %3416 = vmatprep.subr.bf16.mxu0 0
    %3417 = vmatpush2.bf16.msra.mxu0 0
    %3418 = vmatprep.subr.bf16.mxu0 0
    %3419 = vmatpush2.bf16.msra.mxu0 0
    %3420 = vmatprep.subr.bf16.mxu0 0
    %3421 = vmatpush2.bf16.msra.mxu0 0
    %3422 = vmatprep.subr.bf16.mxu0 0
    %3423 = vmatpush2.bf16.msra.mxu0 0
    %3424 = vmatprep.subr.bf16.mxu0 0
    %3425 = vmatpush2.bf16.msra.mxu0 0
    %3426 = vmatprep.subr.bf16.mxu0 0
    %3427 = vmatpush2.bf16.msra.mxu0 0
    %3428 = vmatprep.subr.bf16.mxu0 0
    %3429 = vmatpush2.bf16.msra.mxu0 0
    %3430 = vmatprep.subr.bf16.mxu0 0
    %3431 = vmatpush2.bf16.msra.mxu0 0
    %3432 = vmatprep.mubr.bf16.mxu0 0
    %3433 = vmatmul.mubr.bf16.gmra.mxu0 %v3395
    %v3434 = vpop.f32.mrf.mxu0
    %v3435 = vadd.f32 0.0, %v3434
    %v3436 = vpop.f32.mrf.mxu0
    %v3437 = vpop.f32.mrf.mxu0
    %v3438 = vpop.f32.mrf.mxu0
    %3439 = vdwg.mxu0
    %3440 = vrot.lane.b32.xlu0 %v2654, 112
    %v3441 = vpop.permute.xlu0 %3440
    %v3443 = vsel %vm580, %v3150, 0
    %v3446 = vsel %vm1079, %v3441, 0
    %3448 = vmatprep.subr.bf16.mxu0 0
    %3449 = vmatpush1.bf16.msra.mxu0 0
    %3450 = vmatprep.subr.bf16.mxu0 0
    %3451 = vmatpush1.bf16.msra.mxu0 0
    %3452 = vmatprep.subr.bf16.mxu0 0
    %3453 = vmatpush1.bf16.msra.mxu0 0
    %3454 = vmatprep.subr.bf16.mxu0 0
    %3455 = vmatpush1.bf16.msra.mxu0 0
    %3456 = vmatprep.subr.bf16.mxu0 0
    %3457 = vmatpush1.bf16.msra.mxu0 0
    %3458 = vmatprep.subr.bf16.mxu0 0
    %3459 = vmatpush1.bf16.msra.mxu0 0
    %3460 = vmatprep.subr.bf16.mxu0 0
    %3461 = vmatpush1.bf16.msra.mxu0 0
    %3462 = vmatprep.subr.bf16.mxu0 0
    %3463 = vmatpush1.bf16.msra.mxu0 %v3446
    %3464 = vmatprep.subr.bf16.mxu0 0
    %3465 = vmatpush2.bf16.msra.mxu0 0
    %3466 = vmatprep.subr.bf16.mxu0 0
    %3467 = vmatpush2.bf16.msra.mxu0 0
    %3468 = vmatprep.subr.bf16.mxu0 0
    %3469 = vmatpush2.bf16.msra.mxu0 0
    %3470 = vmatprep.subr.bf16.mxu0 0
    %3471 = vmatpush2.bf16.msra.mxu0 0
    %3472 = vmatprep.subr.bf16.mxu0 0
    %3473 = vmatpush2.bf16.msra.mxu0 0
    %3474 = vmatprep.subr.bf16.mxu0 0
    %3475 = vmatpush2.bf16.msra.mxu0 0
    %3476 = vmatprep.subr.bf16.mxu0 0
    %3477 = vmatpush2.bf16.msra.mxu0 0
    %3478 = vmatprep.subr.bf16.mxu0 0
    %3479 = vmatpush2.bf16.msra.mxu0 0
    %3480 = vmatprep.mubr.bf16.mxu0 0
    %3481 = vmatmul.mubr.bf16.gmra.mxu0 %v3443
    %v3482 = vpop.f32.mrf.mxu0
    %v3483 = vadd.f32 0.0, %v3482
    %v3484 = vpop.f32.mrf.mxu0
    %v3485 = vpop.f32.mrf.mxu0
    %v3486 = vpop.f32.mrf.mxu0
    %3487 = vdwg.mxu0
    %3488 = vrot.lane.b32.xlu0 %v2655, 112
    %v3489 = vpop.permute.xlu0 %3488
    %v3491 = vsel %vm580, %v3151, 0
    %v3494 = vsel %vm1079, %v3489, 0
    %3496 = vmatprep.subr.bf16.mxu0 0
    %3497 = vmatpush1.bf16.msra.mxu0 0
    %3498 = vmatprep.subr.bf16.mxu0 0
    %3499 = vmatpush1.bf16.msra.mxu0 0
    %3500 = vmatprep.subr.bf16.mxu0 0
    %3501 = vmatpush1.bf16.msra.mxu0 0
    %3502 = vmatprep.subr.bf16.mxu0 0
    %3503 = vmatpush1.bf16.msra.mxu0 0
    %3504 = vmatprep.subr.bf16.mxu0 0
    %3505 = vmatpush1.bf16.msra.mxu0 0
    %3506 = vmatprep.subr.bf16.mxu0 0
    %3507 = vmatpush1.bf16.msra.mxu0 0
    %3508 = vmatprep.subr.bf16.mxu0 0
    %3509 = vmatpush1.bf16.msra.mxu0 0
    %3510 = vmatprep.subr.bf16.mxu0 0
    %3511 = vmatpush1.bf16.msra.mxu0 %v3494
    %3512 = vmatprep.subr.bf16.mxu0 0
    %3513 = vmatpush2.bf16.msra.mxu0 0
    %3514 = vmatprep.subr.bf16.mxu0 0
    %3515 = vmatpush2.bf16.msra.mxu0 0
    %3516 = vmatprep.subr.bf16.mxu0 0
    %3517 = vmatpush2.bf16.msra.mxu0 0
    %3518 = vmatprep.subr.bf16.mxu0 0
    %3519 = vmatpush2.bf16.msra.mxu0 0
    %3520 = vmatprep.subr.bf16.mxu0 0
    %3521 = vmatpush2.bf16.msra.mxu0 0
    %3522 = vmatprep.subr.bf16.mxu0 0
    %3523 = vmatpush2.bf16.msra.mxu0 0
    %3524 = vmatprep.subr.bf16.mxu0 0
    %3525 = vmatpush2.bf16.msra.mxu0 0
    %3526 = vmatprep.subr.bf16.mxu0 0
    %3527 = vmatpush2.bf16.msra.mxu0 0
    %3528 = vmatprep.mubr.bf16.mxu0 0
    %3529 = vmatmul.mubr.bf16.gmra.mxu0 %v3491
    %v3530 = vpop.f32.mrf.mxu0
    %v3531 = vadd.f32 0.0, %v3530
    %v3532 = vpop.f32.mrf.mxu0
    %v3533 = vpop.f32.mrf.mxu0
    %v3534 = vpop.f32.mrf.mxu0
    %3535 = vdwg.mxu0
    %v3536 = vpack.c.bf16 %v3195, %v3195
    %v3537 = vpack.c.bf16 %v3243, %v3243
    %v3538 = vpack.c.bf16 %v3291, %v3291
    %v3539 = vpack.c.bf16 %v3339, %v3339
    %v3540 = vpack.c.bf16 %v3387, %v3387
    %v3541 = vpack.c.bf16 %v3435, %v3435
    %v3542 = vpack.c.bf16 %v3483, %v3483
    %v3543 = vpack.c.bf16 %v3531, %v3531
    %s3544 = scalar_lea.vmem %s3, 32
    %v3545 = vld [vmem:[%s3544] sm:$0xf]
    %v3546 = vld [vmem:[%s3544 + $0x4] sm:$0xf]
    %v3547 = vld [vmem:[%s3544 + $0x8] sm:$0xf]
    %v3548 = vld [vmem:[%s3544 + $0xc] sm:$0xf]
    %v3549 = vld [vmem:[%s3544 + $0x10] sm:$0xf]
    %v3550 = vld [vmem:[%s3544 + $0x14] sm:$0xf]
    %v3551 = vld [vmem:[%s3544 + $0x18] sm:$0xf]
    %v3552 = vld [vmem:[%s3544 + $0x1c] sm:$0xf]
    %v3554 = vsel %vm580, %v3536, 0
    %v3557 = vsel %vm1079, %v3545, 0
    %3559 = vmatprep.subr.bf16.mxu0 0
    %3560 = vmatpush1.bf16.msra.mxu0 0
    %3561 = vmatprep.subr.bf16.mxu0 0
    %3562 = vmatpush1.bf16.msra.mxu0 0
    %3563 = vmatprep.subr.bf16.mxu0 0
    %3564 = vmatpush1.bf16.msra.mxu0 0
    %3565 = vmatprep.subr.bf16.mxu0 0
    %3566 = vmatpush1.bf16.msra.mxu0 0
    %3567 = vmatprep.subr.bf16.mxu0 0
    %3568 = vmatpush1.bf16.msra.mxu0 0
    %3569 = vmatprep.subr.bf16.mxu0 0
    %3570 = vmatpush1.bf16.msra.mxu0 0
    %3571 = vmatprep.subr.bf16.mxu0 0
    %3572 = vmatpush1.bf16.msra.mxu0 0
    %3573 = vmatprep.subr.bf16.mxu0 0
    %3574 = vmatpush1.bf16.msra.mxu0 %v3557
    %3575 = vmatprep.subr.bf16.mxu0 0
    %3576 = vmatpush2.bf16.msra.mxu0 0
    %3577 = vmatprep.subr.bf16.mxu0 0
    %3578 = vmatpush2.bf16.msra.mxu0 0
    %3579 = vmatprep.subr.bf16.mxu0 0
    %3580 = vmatpush2.bf16.msra.mxu0 0
    %3581 = vmatprep.subr.bf16.mxu0 0
    %3582 = vmatpush2.bf16.msra.mxu0 0
    %3583 = vmatprep.subr.bf16.mxu0 0
    %3584 = vmatpush2.bf16.msra.mxu0 0
    %3585 = vmatprep.subr.bf16.mxu0 0
    %3586 = vmatpush2.bf16.msra.mxu0 0
    %3587 = vmatprep.subr.bf16.mxu0 0
    %3588 = vmatpush2.bf16.msra.mxu0 0
    %3589 = vmatprep.subr.bf16.mxu0 0
    %3590 = vmatpush2.bf16.msra.mxu0 0
    %3591 = vmatprep.mubr.bf16.mxu0 0
    %3592 = vmatmul.mubr.bf16.gmra.mxu0 %v3554
    %v3593 = vpop.f32.mrf.mxu0
    %v3594 = vadd.f32 0.0, %v3593
    %v3595 = vpop.f32.mrf.mxu0
    %v3596 = vpop.f32.mrf.mxu0
    %v3597 = vpop.f32.mrf.mxu0
    %3598 = vdwg.mxu0
    %v3600 = vsel %vm580, %v3537, 0
    %v3603 = vsel %vm1079, %v3546, 0
    %3605 = vmatprep.subr.bf16.mxu0 0
    %3606 = vmatpush1.bf16.msra.mxu0 0
    %3607 = vmatprep.subr.bf16.mxu0 0
    %3608 = vmatpush1.bf16.msra.mxu0 0
    %3609 = vmatprep.subr.bf16.mxu0 0
    %3610 = vmatpush1.bf16.msra.mxu0 0
    %3611 = vmatprep.subr.bf16.mxu0 0
    %3612 = vmatpush1.bf16.msra.mxu0 0
    %3613 = vmatprep.subr.bf16.mxu0 0
    %3614 = vmatpush1.bf16.msra.mxu0 0
    %3615 = vmatprep.subr.bf16.mxu0 0
    %3616 = vmatpush1.bf16.msra.mxu0 0
    %3617 = vmatprep.subr.bf16.mxu0 0
    %3618 = vmatpush1.bf16.msra.mxu0 0
    %3619 = vmatprep.subr.bf16.mxu0 0
    %3620 = vmatpush1.bf16.msra.mxu0 %v3603
    %3621 = vmatprep.subr.bf16.mxu0 0
    %3622 = vmatpush2.bf16.msra.mxu0 0
    %3623 = vmatprep.subr.bf16.mxu0 0
    %3624 = vmatpush2.bf16.msra.mxu0 0
    %3625 = vmatprep.subr.bf16.mxu0 0
    %3626 = vmatpush2.bf16.msra.mxu0 0
    %3627 = vmatprep.subr.bf16.mxu0 0
    %3628 = vmatpush2.bf16.msra.mxu0 0
    %3629 = vmatprep.subr.bf16.mxu0 0
    %3630 = vmatpush2.bf16.msra.mxu0 0
    %3631 = vmatprep.subr.bf16.mxu0 0
    %3632 = vmatpush2.bf16.msra.mxu0 0
    %3633 = vmatprep.subr.bf16.mxu0 0
    %3634 = vmatpush2.bf16.msra.mxu0 0
    %3635 = vmatprep.subr.bf16.mxu0 0
    %3636 = vmatpush2.bf16.msra.mxu0 0
    %3637 = vmatprep.mubr.bf16.mxu0 0
    %3638 = vmatmul.mubr.bf16.gmra.mxu0 %v3600
    %v3639 = vpop.f32.mrf.mxu0
    %v3640 = vadd.f32 0.0, %v3639
    %v3641 = vpop.f32.mrf.mxu0
    %v3642 = vpop.f32.mrf.mxu0
    %v3643 = vpop.f32.mrf.mxu0
    %3644 = vdwg.mxu0
    %v3646 = vsel %vm580, %v3538, 0
    %v3649 = vsel %vm1079, %v3547, 0
    %3651 = vmatprep.subr.bf16.mxu0 0
    %3652 = vmatpush1.bf16.msra.mxu0 0
    %3653 = vmatprep.subr.bf16.mxu0 0
    %3654 = vmatpush1.bf16.msra.mxu0 0
    %3655 = vmatprep.subr.bf16.mxu0 0
    %3656 = vmatpush1.bf16.msra.mxu0 0
    %3657 = vmatprep.subr.bf16.mxu0 0
    %3658 = vmatpush1.bf16.msra.mxu0 0
    %3659 = vmatprep.subr.bf16.mxu0 0
    %3660 = vmatpush1.bf16.msra.mxu0 0
    %3661 = vmatprep.subr.bf16.mxu0 0
    %3662 = vmatpush1.bf16.msra.mxu0 0
    %3663 = vmatprep.subr.bf16.mxu0 0
    %3664 = vmatpush1.bf16.msra.mxu0 0
    %3665 = vmatprep.subr.bf16.mxu0 0
    %3666 = vmatpush1.bf16.msra.mxu0 %v3649
    %3667 = vmatprep.subr.bf16.mxu0 0
    %3668 = vmatpush2.bf16.msra.mxu0 0
    %3669 = vmatprep.subr.bf16.mxu0 0
    %3670 = vmatpush2.bf16.msra.mxu0 0
    %3671 = vmatprep.subr.bf16.mxu0 0
    %3672 = vmatpush2.bf16.msra.mxu0 0
    %3673 = vmatprep.subr.bf16.mxu0 0
    %3674 = vmatpush2.bf16.msra.mxu0 0
    %3675 = vmatprep.subr.bf16.mxu0 0
    %3676 = vmatpush2.bf16.msra.mxu0 0
    %3677 = vmatprep.subr.bf16.mxu0 0
    %3678 = vmatpush2.bf16.msra.mxu0 0
    %3679 = vmatprep.subr.bf16.mxu0 0
    %3680 = vmatpush2.bf16.msra.mxu0 0
    %3681 = vmatprep.subr.bf16.mxu0 0
    %3682 = vmatpush2.bf16.msra.mxu0 0
    %3683 = vmatprep.mubr.bf16.mxu0 0
    %3684 = vmatmul.mubr.bf16.gmra.mxu0 %v3646
    %v3685 = vpop.f32.mrf.mxu0
    %v3686 = vadd.f32 0.0, %v3685
    %v3687 = vpop.f32.mrf.mxu0
    %v3688 = vpop.f32.mrf.mxu0
    %v3689 = vpop.f32.mrf.mxu0
    %3690 = vdwg.mxu0
    %v3692 = vsel %vm580, %v3539, 0
    %v3695 = vsel %vm1079, %v3548, 0
    %3697 = vmatprep.subr.bf16.mxu0 0
    %3698 = vmatpush1.bf16.msra.mxu0 0
    %3699 = vmatprep.subr.bf16.mxu0 0
    %3700 = vmatpush1.bf16.msra.mxu0 0
    %3701 = vmatprep.subr.bf16.mxu0 0
    %3702 = vmatpush1.bf16.msra.mxu0 0
    %3703 = vmatprep.subr.bf16.mxu0 0
    %3704 = vmatpush1.bf16.msra.mxu0 0
    %3705 = vmatprep.subr.bf16.mxu0 0
    %3706 = vmatpush1.bf16.msra.mxu0 0
    %3707 = vmatprep.subr.bf16.mxu0 0
    %3708 = vmatpush1.bf16.msra.mxu0 0
    %3709 = vmatprep.subr.bf16.mxu0 0
    %3710 = vmatpush1.bf16.msra.mxu0 0
    %3711 = vmatprep.subr.bf16.mxu0 0
    %3712 = vmatpush1.bf16.msra.mxu0 %v3695
    %3713 = vmatprep.subr.bf16.mxu0 0
    %3714 = vmatpush2.bf16.msra.mxu0 0
    %3715 = vmatprep.subr.bf16.mxu0 0
    %3716 = vmatpush2.bf16.msra.mxu0 0
    %3717 = vmatprep.subr.bf16.mxu0 0
    %3718 = vmatpush2.bf16.msra.mxu0 0
    %3719 = vmatprep.subr.bf16.mxu0 0
    %3720 = vmatpush2.bf16.msra.mxu0 0
    %3721 = vmatprep.subr.bf16.mxu0 0
    %3722 = vmatpush2.bf16.msra.mxu0 0
    %3723 = vmatprep.subr.bf16.mxu0 0
    %3724 = vmatpush2.bf16.msra.mxu0 0
    %3725 = vmatprep.subr.bf16.mxu0 0
    %3726 = vmatpush2.bf16.msra.mxu0 0
    %3727 = vmatprep.subr.bf16.mxu0 0
    %3728 = vmatpush2.bf16.msra.mxu0 0
    %3729 = vmatprep.mubr.bf16.mxu0 0
    %3730 = vmatmul.mubr.bf16.gmra.mxu0 %v3692
    %v3731 = vpop.f32.mrf.mxu0
    %v3732 = vadd.f32 0.0, %v3731
    %v3733 = vpop.f32.mrf.mxu0
    %v3734 = vpop.f32.mrf.mxu0
    %v3735 = vpop.f32.mrf.mxu0
    %3736 = vdwg.mxu0
    %v3738 = vsel %vm580, %v3540, 0
    %v3741 = vsel %vm1079, %v3549, 0
    %3743 = vmatprep.subr.bf16.mxu0 0
    %3744 = vmatpush1.bf16.msra.mxu0 0
    %3745 = vmatprep.subr.bf16.mxu0 0
    %3746 = vmatpush1.bf16.msra.mxu0 0
    %3747 = vmatprep.subr.bf16.mxu0 0
    %3748 = vmatpush1.bf16.msra.mxu0 0
    %3749 = vmatprep.subr.bf16.mxu0 0
    %3750 = vmatpush1.bf16.msra.mxu0 0
    %3751 = vmatprep.subr.bf16.mxu0 0
    %3752 = vmatpush1.bf16.msra.mxu0 0
    %3753 = vmatprep.subr.bf16.mxu0 0
    %3754 = vmatpush1.bf16.msra.mxu0 0
    %3755 = vmatprep.subr.bf16.mxu0 0
    %3756 = vmatpush1.bf16.msra.mxu0 0
    %3757 = vmatprep.subr.bf16.mxu0 0
    %3758 = vmatpush1.bf16.msra.mxu0 %v3741
    %3759 = vmatprep.subr.bf16.mxu0 0
    %3760 = vmatpush2.bf16.msra.mxu0 0
    %3761 = vmatprep.subr.bf16.mxu0 0
    %3762 = vmatpush2.bf16.msra.mxu0 0
    %3763 = vmatprep.subr.bf16.mxu0 0
    %3764 = vmatpush2.bf16.msra.mxu0 0
    %3765 = vmatprep.subr.bf16.mxu0 0
    %3766 = vmatpush2.bf16.msra.mxu0 0
    %3767 = vmatprep.subr.bf16.mxu0 0
    %3768 = vmatpush2.bf16.msra.mxu0 0
    %3769 = vmatprep.subr.bf16.mxu0 0
    %3770 = vmatpush2.bf16.msra.mxu0 0
    %3771 = vmatprep.subr.bf16.mxu0 0
    %3772 = vmatpush2.bf16.msra.mxu0 0
    %3773 = vmatprep.subr.bf16.mxu0 0
    %3774 = vmatpush2.bf16.msra.mxu0 0
    %3775 = vmatprep.mubr.bf16.mxu0 0
    %3776 = vmatmul.mubr.bf16.gmra.mxu0 %v3738
    %v3777 = vpop.f32.mrf.mxu0
    %v3778 = vadd.f32 0.0, %v3777
    %v3779 = vpop.f32.mrf.mxu0
    %v3780 = vpop.f32.mrf.mxu0
    %v3781 = vpop.f32.mrf.mxu0
    %3782 = vdwg.mxu0
    %v3784 = vsel %vm580, %v3541, 0
    %v3787 = vsel %vm1079, %v3550, 0
    %3789 = vmatprep.subr.bf16.mxu0 0
    %3790 = vmatpush1.bf16.msra.mxu0 0
    %3791 = vmatprep.subr.bf16.mxu0 0
    %3792 = vmatpush1.bf16.msra.mxu0 0
    %3793 = vmatprep.subr.bf16.mxu0 0
    %3794 = vmatpush1.bf16.msra.mxu0 0
    %3795 = vmatprep.subr.bf16.mxu0 0
    %3796 = vmatpush1.bf16.msra.mxu0 0
    %3797 = vmatprep.subr.bf16.mxu0 0
    %3798 = vmatpush1.bf16.msra.mxu0 0
    %3799 = vmatprep.subr.bf16.mxu0 0
    %3800 = vmatpush1.bf16.msra.mxu0 0
    %3801 = vmatprep.subr.bf16.mxu0 0
    %3802 = vmatpush1.bf16.msra.mxu0 0
    %3803 = vmatprep.subr.bf16.mxu0 0
    %3804 = vmatpush1.bf16.msra.mxu0 %v3787
    %3805 = vmatprep.subr.bf16.mxu0 0
    %3806 = vmatpush2.bf16.msra.mxu0 0
    %3807 = vmatprep.subr.bf16.mxu0 0
    %3808 = vmatpush2.bf16.msra.mxu0 0
    %3809 = vmatprep.subr.bf16.mxu0 0
    %3810 = vmatpush2.bf16.msra.mxu0 0
    %3811 = vmatprep.subr.bf16.mxu0 0
    %3812 = vmatpush2.bf16.msra.mxu0 0
    %3813 = vmatprep.subr.bf16.mxu0 0
    %3814 = vmatpush2.bf16.msra.mxu0 0
    %3815 = vmatprep.subr.bf16.mxu0 0
    %3816 = vmatpush2.bf16.msra.mxu0 0
    %3817 = vmatprep.subr.bf16.mxu0 0
    %3818 = vmatpush2.bf16.msra.mxu0 0
    %3819 = vmatprep.subr.bf16.mxu0 0
    %3820 = vmatpush2.bf16.msra.mxu0 0
    %3821 = vmatprep.mubr.bf16.mxu0 0
    %3822 = vmatmul.mubr.bf16.gmra.mxu0 %v3784
    %v3823 = vpop.f32.mrf.mxu0
    %v3824 = vadd.f32 0.0, %v3823
    %v3825 = vpop.f32.mrf.mxu0
    %v3826 = vpop.f32.mrf.mxu0
    %v3827 = vpop.f32.mrf.mxu0
    %3828 = vdwg.mxu0
    %v3830 = vsel %vm580, %v3542, 0
    %v3833 = vsel %vm1079, %v3551, 0
    %3835 = vmatprep.subr.bf16.mxu0 0
    %3836 = vmatpush1.bf16.msra.mxu0 0
    %3837 = vmatprep.subr.bf16.mxu0 0
    %3838 = vmatpush1.bf16.msra.mxu0 0
    %3839 = vmatprep.subr.bf16.mxu0 0
    %3840 = vmatpush1.bf16.msra.mxu0 0
    %3841 = vmatprep.subr.bf16.mxu0 0
    %3842 = vmatpush1.bf16.msra.mxu0 0
    %3843 = vmatprep.subr.bf16.mxu0 0
    %3844 = vmatpush1.bf16.msra.mxu0 0
    %3845 = vmatprep.subr.bf16.mxu0 0
    %3846 = vmatpush1.bf16.msra.mxu0 0
    %3847 = vmatprep.subr.bf16.mxu0 0
    %3848 = vmatpush1.bf16.msra.mxu0 0
    %3849 = vmatprep.subr.bf16.mxu0 0
    %3850 = vmatpush1.bf16.msra.mxu0 %v3833
    %3851 = vmatprep.subr.bf16.mxu0 0
    %3852 = vmatpush2.bf16.msra.mxu0 0
    %3853 = vmatprep.subr.bf16.mxu0 0
    %3854 = vmatpush2.bf16.msra.mxu0 0
    %3855 = vmatprep.subr.bf16.mxu0 0
    %3856 = vmatpush2.bf16.msra.mxu0 0
    %3857 = vmatprep.subr.bf16.mxu0 0
    %3858 = vmatpush2.bf16.msra.mxu0 0
    %3859 = vmatprep.subr.bf16.mxu0 0
    %3860 = vmatpush2.bf16.msra.mxu0 0
    %3861 = vmatprep.subr.bf16.mxu0 0
    %3862 = vmatpush2.bf16.msra.mxu0 0
    %3863 = vmatprep.subr.bf16.mxu0 0
    %3864 = vmatpush2.bf16.msra.mxu0 0
    %3865 = vmatprep.subr.bf16.mxu0 0
    %3866 = vmatpush2.bf16.msra.mxu0 0
    %3867 = vmatprep.mubr.bf16.mxu0 0
    %3868 = vmatmul.mubr.bf16.gmra.mxu0 %v3830
    %v3869 = vpop.f32.mrf.mxu0
    %v3870 = vadd.f32 0.0, %v3869
    %v3871 = vpop.f32.mrf.mxu0
    %v3872 = vpop.f32.mrf.mxu0
    %v3873 = vpop.f32.mrf.mxu0
    %3874 = vdwg.mxu0
    %v3876 = vsel %vm580, %v3543, 0
    %v3879 = vsel %vm1079, %v3552, 0
    %3881 = vmatprep.subr.bf16.mxu0 0
    %3882 = vmatpush1.bf16.msra.mxu0 0
    %3883 = vmatprep.subr.bf16.mxu0 0
    %3884 = vmatpush1.bf16.msra.mxu0 0
    %3885 = vmatprep.subr.bf16.mxu0 0
    %3886 = vmatpush1.bf16.msra.mxu0 0
    %3887 = vmatprep.subr.bf16.mxu0 0
    %3888 = vmatpush1.bf16.msra.mxu0 0
    %3889 = vmatprep.subr.bf16.mxu0 0
    %3890 = vmatpush1.bf16.msra.mxu0 0
    %3891 = vmatprep.subr.bf16.mxu0 0
    %3892 = vmatpush1.bf16.msra.mxu0 0
    %3893 = vmatprep.subr.bf16.mxu0 0
    %3894 = vmatpush1.bf16.msra.mxu0 0
    %3895 = vmatprep.subr.bf16.mxu0 0
    %3896 = vmatpush1.bf16.msra.mxu0 %v3879
    %3897 = vmatprep.subr.bf16.mxu0 0
    %3898 = vmatpush2.bf16.msra.mxu0 0
    %3899 = vmatprep.subr.bf16.mxu0 0
    %3900 = vmatpush2.bf16.msra.mxu0 0
    %3901 = vmatprep.subr.bf16.mxu0 0
    %3902 = vmatpush2.bf16.msra.mxu0 0
    %3903 = vmatprep.subr.bf16.mxu0 0
    %3904 = vmatpush2.bf16.msra.mxu0 0
    %3905 = vmatprep.subr.bf16.mxu0 0
    %3906 = vmatpush2.bf16.msra.mxu0 0
    %3907 = vmatprep.subr.bf16.mxu0 0
    %3908 = vmatpush2.bf16.msra.mxu0 0
    %3909 = vmatprep.subr.bf16.mxu0 0
    %3910 = vmatpush2.bf16.msra.mxu0 0
    %3911 = vmatprep.subr.bf16.mxu0 0
    %3912 = vmatpush2.bf16.msra.mxu0 0
    %3913 = vmatprep.mubr.bf16.mxu0 0
    %3914 = vmatmul.mubr.bf16.gmra.mxu0 %v3876
    %v3915 = vpop.f32.mrf.mxu0
    %v3916 = vadd.f32 0.0, %v3915
    %v3917 = vpop.f32.mrf.mxu0
    %v3918 = vpop.f32.mrf.mxu0
    %v3919 = vpop.f32.mrf.mxu0
    %3920 = vdwg.mxu0
    %v3921 = vadd.f32 %v3594, %v3640
    %v3922 = vadd.f32 %v3778, %v3824
    %v3923 = vadd.f32 %v3921, %v3686
    %v3924 = vadd.f32 %v3922, %v3870
    %v3925 = vadd.f32 %v3923, %v3732
    %v3926 = vadd.f32 %v3924, %v3916
    %s3927 = scalar_lea.vmem %s4, 1
    %v3928 = vld [vmem:[%s3927] sm:$0x1]
    %v3930 = vlaneseq
    %v3931 = vshrl.u32 %v3930, 7
    %v3932 = vsub.s32 0, %v3931
    %v3933 = vrot.slane %v3928, %v3932
    %v3935 = vadd.f32 %v3925, %v3933
    %v3936 = vadd.f32 %v3926, %v3933
    %v3937 = vadd.f32 %v2132, %v3935
    %v3938 = vadd.f32 %v2133, %v3936
    %s3939 = scalar_lea.vmem %s5, 1
    %v3940 = vld [vmem:[%s3939] sm:$0x1]
    %s3941 = scalar_lea.vmem %s6, 1
    %v3942 = vld [vmem:[%s3941] sm:$0x1]
    %v3943 = vsel %vm158, %v3937, 0.0
    %3944 = vadd.xlane.f32.xlu0 %v3943
    %v3945 = vpop.xlane.xlu0 %3944
    %v3946 = vsel %vm158, %v3938, 0.0
    %3947 = vadd.xlane.f32.xlu0 %v3946
    %v3948 = vpop.xlane.xlu0 %3947
    %v3949 = vmul.f32 %v3945, %v1868
    %v3950 = vmul.f32 %v3948, %v1868
    %v3951 = vsub.f32 %v3937, %v3949
    %v3952 = vsub.f32 %v3938, %v3950
    %v3953 = vmul.f32 %v3951, %v3951
    %v3954 = vmul.f32 %v3952, %v3952
    %v3955 = vsel %vm158, %v3953, 0.0
    %3956 = vadd.xlane.f32.xlu0 %v3955
    %v3957 = vpop.xlane.xlu0 %3956
    %v3958 = vsel %vm158, %v3954, 0.0
    %3959 = vadd.xlane.f32.xlu0 %v3958
    %v3960 = vpop.xlane.xlu0 %3959
    %v3961 = vmul.f32 %v3957, %v1868
    %v3962 = vmul.f32 %v3960, %v1868
    %v3963 = vadd.f32 %v3961, 1e-05
    %v3964 = vadd.f32 %v3962, 1e-05
    %v3965 = vrsqrt.pop %v3963
    %v3966 = vrsqrt.pop %v3964
    %v3967 = vmul.f32 %v3951, %v3965
    %v3968 = vmul.f32 %v3952, %v3966
    %v3970 = vlaneseq
    %v3971 = vshrl.u32 %v3970, 7
    %v3972 = vsub.s32 0, %v3971
    %v3973 = vrot.slane %v3940, %v3972
    %v3975 = vmul.f32 %v3967, %v3973
    %v3976 = vmul.f32 %v3968, %v3973
    %v3978 = vlaneseq
    %v3979 = vshrl.u32 %v3978, 7
    %v3980 = vsub.s32 0, %v3979
    %v3981 = vrot.slane %v3942, %v3980
    %v3983 = vadd.f32 %v3975, %v3981
    %v3984 = vadd.f32 %v3976, %v3981
    %v3985 = vpack.c.bf16 %v3984, %v3983
    %s3986 = scalar_lea.vmem %s9, 16
    %v3987 = vld [vmem:[%s3986] sm:$0xf]
    %v3988 = vld [vmem:[%s3986 + $0x4] sm:$0xf]
    %v3989 = vld [vmem:[%s3986 + $0x8] sm:$0xf]
    %v3990 = vld [vmem:[%s3986 + $0xc] sm:$0xf]
    %s3991 = scalar_lea.vmem %s10, 1
    %v3992 = vld [vmem:[%s3991] sm:$0x1]
    %v3994 = vlaneseq
    %v3995 = vshrl.u32 %v3994, 7
    %v3996 = vsub.s32 0, %v3995
    %v3997 = vrot.slane %v3992, %v3996
    %v4003 = vunpack.c.l.b16 %v3987
    %v4004 = vunpack.c.l.b16 %v3988
    %v4005 = vunpack.c.l.b16 %v3989
    %v4006 = vunpack.c.l.b16 %v3990
    %v4007 = vpack.c.b16 %v4004, %v4003
    %v4008 = vpack.c.b16 %v4006, %v4005
    %v4012 = vsel %vm158, %v3985, 0
    %4014 = vmatprep.subr.bf16.mxu0 0
    %4015 = vmatpush1.bf16.msra.mxu0 0
    %4016 = vmatprep.subr.bf16.mxu0 0
    %4017 = vmatpush1.bf16.msra.mxu0 0
    %4018 = vmatprep.subr.bf16.mxu0 0
    %4019 = vmatpush1.bf16.msra.mxu0 0
    %4020 = vmatprep.subr.bf16.mxu0 0
    %4021 = vmatpush1.bf16.msra.mxu0 0
    %4022 = vmatprep.subr.bf16.mxu0 0
    %4023 = vmatpush1.bf16.msra.mxu0 0
    %4024 = vmatprep.subr.bf16.mxu0 0
    %4025 = vmatpush1.bf16.msra.mxu0 0
    %4026 = vmatprep.subr.bf16.mxu0 0
    %4027 = vmatpush1.bf16.msra.mxu0 %v4008
    %4028 = vmatprep.subr.bf16.mxu0 0
    %4029 = vmatpush1.bf16.msra.mxu0 %v4007
    %4030 = vmatprep.subr.bf16.mxu0 0
    %4031 = vmatpush2.bf16.msra.mxu0 0
    %4032 = vmatprep.subr.bf16.mxu0 0
    %4033 = vmatpush2.bf16.msra.mxu0 0
    %4034 = vmatprep.subr.bf16.mxu0 0
    %4035 = vmatpush2.bf16.msra.mxu0 0
    %4036 = vmatprep.subr.bf16.mxu0 0
    %4037 = vmatpush2.bf16.msra.mxu0 0
    %4038 = vmatprep.subr.bf16.mxu0 0
    %4039 = vmatpush2.bf16.msra.mxu0 0
    %4040 = vmatprep.subr.bf16.mxu0 0
    %4041 = vmatpush2.bf16.msra.mxu0 0
    %4042 = vmatprep.subr.bf16.mxu0 0
    %4043 = vmatpush2.bf16.msra.mxu0 0
    %4044 = vmatprep.subr.bf16.mxu0 0
    %4045 = vmatpush2.bf16.msra.mxu0 0
    %4046 = vmatprep.mubr.bf16.mxu0 0
    %4047 = vmatmul.mubr.bf16.gmra.mxu0 %v4012
    %v4048 = vpop.f32.mrf.mxu0
    %v4049 = vadd.f32 %v3997, %v4048
    %v4050 = vpop.f32.mrf.mxu0
    %v4051 = vpop.f32.mrf.mxu0
    %v4052 = vadd.f32 %v3997, %v4051
    %v4053 = vpop.f32.mrf.mxu0
    %4054 = vdwg.mxu0
    %v4055 = vmax.f32 %v4049, 0.0
    %v4056 = vmax.f32 %v4052, 0.0
    %v4057 = vpack.c.bf16 %v4056, %v4055
    %s4058 = scalar_lea.vmem %s11, 64
    %v4059 = vld [vmem:[%s4058] sm:$0xf]
    %v4060 = vld [vmem:[%s4058 + $0x4] sm:$0xf]
    %v4061 = vld [vmem:[%s4058 + $0x8] sm:$0xf]
    %v4062 = vld [vmem:[%s4058 + $0xc] sm:$0xf]
    %v4063 = vld [vmem:[%s4058 + $0x10] sm:$0xf]
    %v4064 = vld [vmem:[%s4058 + $0x14] sm:$0xf]
    %v4065 = vld [vmem:[%s4058 + $0x18] sm:$0xf]
    %v4066 = vld [vmem:[%s4058 + $0x1c] sm:$0xf]
    %v4067 = vld [vmem:[%s4058 + $0x20] sm:$0xf]
    %v4068 = vld [vmem:[%s4058 + $0x24] sm:$0xf]
    %v4069 = vld [vmem:[%s4058 + $0x28] sm:$0xf]
    %v4070 = vld [vmem:[%s4058 + $0x2c] sm:$0xf]
    %v4071 = vld [vmem:[%s4058 + $0x30] sm:$0xf]
    %v4072 = vld [vmem:[%s4058 + $0x34] sm:$0xf]
    %v4073 = vld [vmem:[%s4058 + $0x38] sm:$0xf]
    %v4074 = vld [vmem:[%s4058 + $0x3c] sm:$0xf]
    %s4075 = scalar_lea.vmem %s12, 1
    %v4076 = vld [vmem:[%s4075] sm:$0x1]
    %v4078 = vlaneseq
    %v4079 = vshrl.u32 %v4078, 7
    %v4080 = vsub.s32 0, %v4079
    %v4081 = vrot.slane %v4076, %v4080
    %v4099 = vunpack.c.l.b16 %v4059
    %v4100 = vunpack.c.l.b16 %v4060
    %v4101 = vunpack.c.l.b16 %v4061
    %v4102 = vunpack.c.l.b16 %v4062
    %v4103 = vunpack.c.l.b16 %v4063
    %v4104 = vunpack.c.l.b16 %v4064
    %v4105 = vunpack.c.l.b16 %v4065
    %v4106 = vunpack.c.l.b16 %v4066
    %v4107 = vunpack.c.l.b16 %v4067
    %v4108 = vunpack.c.l.b16 %v4068
    %v4109 = vunpack.c.l.b16 %v4069
    %v4110 = vunpack.c.l.b16 %v4070
    %v4111 = vunpack.c.l.b16 %v4071
    %v4112 = vunpack.c.l.b16 %v4072
    %v4113 = vunpack.c.l.b16 %v4073
    %v4114 = vunpack.c.l.b16 %v4074
    %v4115 = vpack.c.b16 %v4100, %v4099
    %v4116 = vpack.c.b16 %v4102, %v4101
    %v4117 = vpack.c.b16 %v4104, %v4103
    %v4118 = vpack.c.b16 %v4106, %v4105
    %v4119 = vpack.c.b16 %v4108, %v4107
    %v4120 = vpack.c.b16 %v4110, %v4109
    %v4121 = vpack.c.b16 %v4112, %v4111
    %v4122 = vpack.c.b16 %v4114, %v4113
    %4131 = vmatprep.subr.bf16.mxu0 0
    %4132 = vmatpush1.bf16.msra.mxu0 %v4122
    %4133 = vmatprep.subr.bf16.mxu0 0
    %4134 = vmatpush1.bf16.msra.mxu0 %v4121
    %4135 = vmatprep.subr.bf16.mxu0 0
    %4136 = vmatpush1.bf16.msra.mxu0 %v4120
    %4137 = vmatprep.subr.bf16.mxu0 0
    %4138 = vmatpush1.bf16.msra.mxu0 %v4119
    %4139 = vmatprep.subr.bf16.mxu0 0
    %4140 = vmatpush1.bf16.msra.mxu0 %v4118
    %4141 = vmatprep.subr.bf16.mxu0 0
    %4142 = vmatpush1.bf16.msra.mxu0 %v4117
    %4143 = vmatprep.subr.bf16.mxu0 0
    %4144 = vmatpush1.bf16.msra.mxu0 %v4116
    %4145 = vmatprep.subr.bf16.mxu0 0
    %4146 = vmatpush1.bf16.msra.mxu0 %v4115
    %4147 = vmatprep.subr.bf16.mxu0 0
    %4148 = vmatpush2.bf16.msra.mxu0 0
    %4149 = vmatprep.subr.bf16.mxu0 0
    %4150 = vmatpush2.bf16.msra.mxu0 0
    %4151 = vmatprep.subr.bf16.mxu0 0
    %4152 = vmatpush2.bf16.msra.mxu0 0
    %4153 = vmatprep.subr.bf16.mxu0 0
    %4154 = vmatpush2.bf16.msra.mxu0 0
    %4155 = vmatprep.subr.bf16.mxu0 0
    %4156 = vmatpush2.bf16.msra.mxu0 0
    %4157 = vmatprep.subr.bf16.mxu0 0
    %4158 = vmatpush2.bf16.msra.mxu0 0
    %4159 = vmatprep.subr.bf16.mxu0 0
    %4160 = vmatpush2.bf16.msra.mxu0 0
    %4161 = vmatprep.subr.bf16.mxu0 0
    %4162 = vmatpush2.bf16.msra.mxu0 0
    %4163 = vmatprep.mubr.bf16.mxu0 0
    %4164 = vmatmul.mubr.bf16.gmra.mxu0 %v4057
    %v4165 = vpop.f32.mrf.mxu0
    %v4166 = vadd.f32 %v4081, %v4165
    %v4167 = vpop.f32.mrf.mxu0
    %v4168 = vpop.f32.mrf.mxu0
    %v4169 = vadd.f32 %v4081, %v4168
    %v4170 = vpop.f32.mrf.mxu0
    %4171 = vdwg.mxu0
    %v4172 = vadd.f32 %v3983, %v4166
    %v4173 = vadd.f32 %v3984, %v4169
    %s4174 = scalar_lea.vmem %s7, 1
    %v4175 = vld [vmem:[%s4174] sm:$0x1]
    %s4176 = scalar_lea.vmem %s8, 1
    %v4177 = vld [vmem:[%s4176] sm:$0x1]
    %v4178 = vsel %vm158, %v4172, 0.0
    %4179 = vadd.xlane.f32.xlu0 %v4178
    %v4180 = vpop.xlane.xlu0 %4179
    %v4181 = vsel %vm158, %v4173, 0.0
    %4182 = vadd.xlane.f32.xlu0 %v4181
    %v4183 = vpop.xlane.xlu0 %4182
    %v4184 = vmul.f32 %v4180, %v1868
    %v4185 = vmul.f32 %v4183, %v1868
    %v4186 = vsub.f32 %v4172, %v4184
    %v4187 = vsub.f32 %v4173, %v4185
    %v4188 = vmul.f32 %v4186, %v4186
    %v4189 = vmul.f32 %v4187, %v4187
    %v4190 = vsel %vm158, %v4188, 0.0
    %4191 = vadd.xlane.f32.xlu0 %v4190
    %v4192 = vpop.xlane.xlu0 %4191
    %v4193 = vsel %vm158, %v4189, 0.0
    %4194 = vadd.xlane.f32.xlu0 %v4193
    %v4195 = vpop.xlane.xlu0 %4194
    %v4196 = vmul.f32 %v4192, %v1868
    %v4197 = vmul.f32 %v4195, %v1868
    %v4198 = vadd.f32 %v4196, 1e-05
    %v4199 = vadd.f32 %v4197, 1e-05
    %v4200 = vrsqrt.pop %v4198
    %v4201 = vrsqrt.pop %v4199
    %v4202 = vmul.f32 %v4186, %v4200
    %v4203 = vmul.f32 %v4187, %v4201
    %v4205 = vlaneseq
    %v4206 = vshrl.u32 %v4205, 7
    %v4207 = vsub.s32 0, %v4206
    %v4208 = vrot.slane %v4175, %v4207
    %v4210 = vmul.f32 %v4202, %v4208
    %v4211 = vmul.f32 %v4203, %v4208
    %v4213 = vlaneseq
    %v4214 = vshrl.u32 %v4213, 7
    %v4215 = vsub.s32 0, %v4214
    %v4216 = vrot.slane %v4177, %v4215
    %v4218 = vadd.f32 %v4210, %v4216
    %v4219 = vadd.f32 %v4211, %v4216
    %4220 = vst.msk [vmem:[%s15] sm:$0xff] %vm158, %v4218
    %4221 = vst.msk [vmem:[%s15 + $0x8] sm:$0xff] %vm158, %v4219
    %v4222 = vld [vmem:[%s13] sm:$0xff]
    %v4223 = vld [vmem:[%s13 + $0x8] sm:$0xff]
    %v4224 = vld [vmem:[%s13 + $0x10] sm:$0xff]
    %v4225 = vld [vmem:[%s13 + $0x18] sm:$0xff]
    %s4226 = scalar_lea.vmem %s13, 32
    %v4227 = vld [vmem:[%s4226] sm:$0xff]
    %v4228 = vld [vmem:[%s4226 + $0x8] sm:$0xff]
    %v4229 = vld [vmem:[%s4226 + $0x10] sm:$0xff]
    %v4230 = vld [vmem:[%s4226 + $0x18] sm:$0xff]
    %v4233 = vrot.slane %v4218, 1
    %vm4234 = vcmask 1041409
    %v4235 = vsel %vm4234, %v4219, %v4233
    %v4236 = vsel %vm158, %v4235, 0
    %4238 = vmatprep.subr.mxu0 0.0
    %4239 = vmatpush1.msra.mxu0 0.0
    %4240 = vmatprep.subr.mxu0 0.0
    %4241 = vmatpush1.msra.mxu0 0.0
    %4242 = vmatprep.subr.mxu0 0.0
    %4243 = vmatpush1.msra.mxu0 0.0
    %4244 = vmatprep.subr.mxu0 0.0
    %4245 = vmatpush1.msra.mxu0 0.0
    %4246 = vmatprep.subr.mxu0 0.0
    %4247 = vmatpush1.msra.mxu0 0.0
    %4248 = vmatprep.subr.mxu0 0.0
    %4249 = vmatpush1.msra.mxu0 0.0
    %4250 = vmatprep.subr.mxu0 0.0
    %4251 = vmatpush1.msra.mxu0 0.0
    %4252 = vmatprep.subr.mxu0 0.0
    %4253 = vmatpush1.msra.mxu0 0.0
    %4254 = vmatprep.subr.mxu0 0.0
    %4255 = vmatpush1.msra.mxu0 0.0
    %4256 = vmatprep.subr.mxu0 0.0
    %4257 = vmatpush1.msra.mxu0 0.0
    %4258 = vmatprep.subr.mxu0 0.0
    %4259 = vmatpush1.msra.mxu0 0.0
    %4260 = vmatprep.subr.mxu0 0.0
    %4261 = vmatpush1.msra.mxu0 0.0
    %4262 = vmatprep.subr.mxu0 0.0
    %4263 = vmatpush1.msra.mxu0 %v4230
    %4264 = vmatprep.subr.mxu0 0.0
    %4265 = vmatpush1.msra.mxu0 %v4229
    %4266 = vmatprep.subr.mxu0 0.0
    %4267 = vmatpush1.msra.mxu0 %v4228
    %4268 = vmatprep.subr.mxu0 0.0
    %4269 = vmatpush1.msra.mxu0 %v4227
    %4270 = vmatprep.subr.mxu0 0.0
    %4271 = vmatpush2.msra.mxu0 0.0
    %4272 = vmatprep.subr.mxu0 0.0
    %4273 = vmatpush2.msra.mxu0 0.0
    %4274 = vmatprep.subr.mxu0 0.0
    %4275 = vmatpush2.msra.mxu0 0.0
    %4276 = vmatprep.subr.mxu0 0.0
    %4277 = vmatpush2.msra.mxu0 0.0
    %4278 = vmatprep.subr.mxu0 0.0
    %4279 = vmatpush2.msra.mxu0 0.0
    %4280 = vmatprep.subr.mxu0 0.0
    %4281 = vmatpush2.msra.mxu0 0.0
    %4282 = vmatprep.subr.mxu0 0.0
    %4283 = vmatpush2.msra.mxu0 0.0
    %4284 = vmatprep.subr.mxu0 0.0
    %4285 = vmatpush2.msra.mxu0 0.0
    %4286 = vmatprep.subr.mxu0 0.0
    %4287 = vmatpush2.msra.mxu0 0.0
    %4288 = vmatprep.subr.mxu0 0.0
    %4289 = vmatpush2.msra.mxu0 0.0
    %4290 = vmatprep.subr.mxu0 0.0
    %4291 = vmatpush2.msra.mxu0 0.0
    %4292 = vmatprep.subr.mxu0 0.0
    %4293 = vmatpush2.msra.mxu0 0.0
    %4294 = vmatprep.subr.mxu0 0.0
    %4295 = vmatpush2.msra.mxu0 0.0
    %4296 = vmatprep.subr.mxu0 0.0
    %4297 = vmatpush2.msra.mxu0 0.0
    %4298 = vmatprep.subr.mxu0 0.0
    %4299 = vmatpush2.msra.mxu0 0.0
    %4300 = vmatprep.subr.mxu0 0.0
    %4301 = vmatpush2.msra.mxu0 0.0
    %4302 = vmatprep.mubr.f32.mxu0 0.0
    %4303 = vmatmul.mubr.f32.gmra.mxu0 %v4236
    %v4304 = vpop.f32.mrf.mxu0
    %v4305 = vadd.f32 0.0, %v4304
    %v4306 = vpop.f32.mrf.mxu0
    %4307 = vdwg.mxu0
    %v4308 = vrot.slane %v4219, 7
    %v4309 = vsel %vm4234, %v4308, %v4218
    %v4310 = vsel %vm158, %v4309, 0
    %4312 = vmatprep.subr.mxu0 0.0
    %4313 = vmatpush1.msra.mxu0 0.0
    %4314 = vmatprep.subr.mxu0 0.0
    %4315 = vmatpush1.msra.mxu0 0.0
    %4316 = vmatprep.subr.mxu0 0.0
    %4317 = vmatpush1.msra.mxu0 0.0
    %4318 = vmatprep.subr.mxu0 0.0
    %4319 = vmatpush1.msra.mxu0 0.0
    %4320 = vmatprep.subr.mxu0 0.0
    %4321 = vmatpush1.msra.mxu0 0.0
    %4322 = vmatprep.subr.mxu0 0.0
    %4323 = vmatpush1.msra.mxu0 0.0
    %4324 = vmatprep.subr.mxu0 0.0
    %4325 = vmatpush1.msra.mxu0 0.0
    %4326 = vmatprep.subr.mxu0 0.0
    %4327 = vmatpush1.msra.mxu0 0.0
    %4328 = vmatprep.subr.mxu0 0.0
    %4329 = vmatpush1.msra.mxu0 0.0
    %4330 = vmatprep.subr.mxu0 0.0
    %4331 = vmatpush1.msra.mxu0 0.0
    %4332 = vmatprep.subr.mxu0 0.0
    %4333 = vmatpush1.msra.mxu0 0.0
    %4334 = vmatprep.subr.mxu0 0.0
    %4335 = vmatpush1.msra.mxu0 0.0
    %4336 = vmatprep.subr.mxu0 0.0
    %4337 = vmatpush1.msra.mxu0 %v4225
    %4338 = vmatprep.subr.mxu0 0.0
    %4339 = vmatpush1.msra.mxu0 %v4224
    %4340 = vmatprep.subr.mxu0 0.0
    %4341 = vmatpush1.msra.mxu0 %v4223
    %4342 = vmatprep.subr.mxu0 0.0
    %4343 = vmatpush1.msra.mxu0 %v4222
    %4344 = vmatprep.subr.mxu0 0.0
    %4345 = vmatpush2.msra.mxu0 0.0
    %4346 = vmatprep.subr.mxu0 0.0
    %4347 = vmatpush2.msra.mxu0 0.0
    %4348 = vmatprep.subr.mxu0 0.0
    %4349 = vmatpush2.msra.mxu0 0.0
    %4350 = vmatprep.subr.mxu0 0.0
    %4351 = vmatpush2.msra.mxu0 0.0
    %4352 = vmatprep.subr.mxu0 0.0
    %4353 = vmatpush2.msra.mxu0 0.0
    %4354 = vmatprep.subr.mxu0 0.0
    %4355 = vmatpush2.msra.mxu0 0.0
    %4356 = vmatprep.subr.mxu0 0.0
    %4357 = vmatpush2.msra.mxu0 0.0
    %4358 = vmatprep.subr.mxu0 0.0
    %4359 = vmatpush2.msra.mxu0 0.0
    %4360 = vmatprep.subr.mxu0 0.0
    %4361 = vmatpush2.msra.mxu0 0.0
    %4362 = vmatprep.subr.mxu0 0.0
    %4363 = vmatpush2.msra.mxu0 0.0
    %4364 = vmatprep.subr.mxu0 0.0
    %4365 = vmatpush2.msra.mxu0 0.0
    %4366 = vmatprep.subr.mxu0 0.0
    %4367 = vmatpush2.msra.mxu0 0.0
    %4368 = vmatprep.subr.mxu0 0.0
    %4369 = vmatpush2.msra.mxu0 0.0
    %4370 = vmatprep.subr.mxu0 0.0
    %4371 = vmatpush2.msra.mxu0 0.0
    %4372 = vmatprep.subr.mxu0 0.0
    %4373 = vmatpush2.msra.mxu0 0.0
    %4374 = vmatprep.subr.mxu0 0.0
    %4375 = vmatpush2.msra.mxu0 0.0
    %4376 = vmatprep.mubr.f32.mxu0 0.0
    %4377 = vmatmul.mubr.f32.gmra.mxu0 %v4310
    %v4378 = vpop.f32.mrf.mxu0
    %v4379 = vadd.f32 %v4305, %v4378
    %v4380 = vpop.f32.mrf.mxu0
    %4381 = vdwg.mxu0
    %s4382 = scalar_lea.vmem %s13, 64
    %v4383 = vld [vmem:[%s4382] sm:$0xff]
    %v4384 = vld [vmem:[%s4382 + $0x8] sm:$0xff]
    %v4385 = vld [vmem:[%s4382 + $0x10] sm:$0xff]
    %v4386 = vld [vmem:[%s4382 + $0x18] sm:$0xff]
    %v4387 = vrot.slane %v4218, 2
    %v4388 = vrot.slane %v4219, 1
    %v4389 = vsel %vm4234, %v4388, %v4387
    %v4390 = vsel %vm158, %v4389, 0
    %4392 = vmatprep.subr.mxu0 0.0
    %4393 = vmatpush1.msra.mxu0 0.0
    %4394 = vmatprep.subr.mxu0 0.0
    %4395 = vmatpush1.msra.mxu0 0.0
    %4396 = vmatprep.subr.mxu0 0.0
    %4397 = vmatpush1.msra.mxu0 0.0
    %4398 = vmatprep.subr.mxu0 0.0
    %4399 = vmatpush1.msra.mxu0 0.0
    %4400 = vmatprep.subr.mxu0 0.0
    %4401 = vmatpush1.msra.mxu0 0.0
    %4402 = vmatprep.subr.mxu0 0.0
    %4403 = vmatpush1.msra.mxu0 0.0
    %4404 = vmatprep.subr.mxu0 0.0
    %4405 = vmatpush1.msra.mxu0 0.0
    %4406 = vmatprep.subr.mxu0 0.0
    %4407 = vmatpush1.msra.mxu0 0.0
    %4408 = vmatprep.subr.mxu0 0.0
    %4409 = vmatpush1.msra.mxu0 0.0
    %4410 = vmatprep.subr.mxu0 0.0
    %4411 = vmatpush1.msra.mxu0 0.0
    %4412 = vmatprep.subr.mxu0 0.0
    %4413 = vmatpush1.msra.mxu0 0.0
    %4414 = vmatprep.subr.mxu0 0.0
    %4415 = vmatpush1.msra.mxu0 0.0
    %4416 = vmatprep.subr.mxu0 0.0
    %4417 = vmatpush1.msra.mxu0 %v4386
    %4418 = vmatprep.subr.mxu0 0.0
    %4419 = vmatpush1.msra.mxu0 %v4385
    %4420 = vmatprep.subr.mxu0 0.0
    %4421 = vmatpush1.msra.mxu0 %v4384
    %4422 = vmatprep.subr.mxu0 0.0
    %4423 = vmatpush1.msra.mxu0 %v4383
    %4424 = vmatprep.subr.mxu0 0.0
    %4425 = vmatpush2.msra.mxu0 0.0
    %4426 = vmatprep.subr.mxu0 0.0
    %4427 = vmatpush2.msra.mxu0 0.0
    %4428 = vmatprep.subr.mxu0 0.0
    %4429 = vmatpush2.msra.mxu0 0.0
    %4430 = vmatprep.subr.mxu0 0.0
    %4431 = vmatpush2.msra.mxu0 0.0
    %4432 = vmatprep.subr.mxu0 0.0
    %4433 = vmatpush2.msra.mxu0 0.0
    %4434 = vmatprep.subr.mxu0 0.0
    %4435 = vmatpush2.msra.mxu0 0.0
    %4436 = vmatprep.subr.mxu0 0.0
    %4437 = vmatpush2.msra.mxu0 0.0
    %4438 = vmatprep.subr.mxu0 0.0
    %4439 = vmatpush2.msra.mxu0 0.0
    %4440 = vmatprep.subr.mxu0 0.0
    %4441 = vmatpush2.msra.mxu0 0.0
    %4442 = vmatprep.subr.mxu0 0.0
    %4443 = vmatpush2.msra.mxu0 0.0
    %4444 = vmatprep.subr.mxu0 0.0
    %4445 = vmatpush2.msra.mxu0 0.0
    %4446 = vmatprep.subr.mxu0 0.0
    %4447 = vmatpush2.msra.mxu0 0.0
    %4448 = vmatprep.subr.mxu0 0.0
    %4449 = vmatpush2.msra.mxu0 0.0
    %4450 = vmatprep.subr.mxu0 0.0
    %4451 = vmatpush2.msra.mxu0 0.0
    %4452 = vmatprep.subr.mxu0 0.0
    %4453 = vmatpush2.msra.mxu0 0.0
    %4454 = vmatprep.subr.mxu0 0.0
    %4455 = vmatpush2.msra.mxu0 0.0
    %4456 = vmatprep.mubr.f32.mxu0 0.0
    %4457 = vmatmul.mubr.f32.gmra.mxu0 %v4390
    %v4458 = vpop.f32.mrf.mxu0
    %v4459 = vadd.f32 0.0, %v4458
    %v4460 = vpop.f32.mrf.mxu0
    %4461 = vdwg.mxu0
    %v4462 = vadd.f32 %v4379, %v4459
    %s4463 = scalar_lea.vmem %s13, 96
    %v4464 = vld [vmem:[%s4463] sm:$0xff]
    %v4465 = vld [vmem:[%s4463 + $0x8] sm:$0xff]
    %v4466 = vld [vmem:[%s4463 + $0x10] sm:$0xff]
    %v4467 = vld [vmem:[%s4463 + $0x18] sm:$0xff]
    %v4468 = vrot.slane %v4218, 3
    %v4469 = vrot.slane %v4219, 2
    %v4470 = vsel %vm4234, %v4469, %v4468
    %v4471 = vsel %vm158, %v4470, 0
    %4473 = vmatprep.subr.mxu0 0.0
    %4474 = vmatpush1.msra.mxu0 0.0
    %4475 = vmatprep.subr.mxu0 0.0
    %4476 = vmatpush1.msra.mxu0 0.0
    %4477 = vmatprep.subr.mxu0 0.0
    %4478 = vmatpush1.msra.mxu0 0.0
    %4479 = vmatprep.subr.mxu0 0.0
    %4480 = vmatpush1.msra.mxu0 0.0
    %4481 = vmatprep.subr.mxu0 0.0
    %4482 = vmatpush1.msra.mxu0 0.0
    %4483 = vmatprep.subr.mxu0 0.0
    %4484 = vmatpush1.msra.mxu0 0.0
    %4485 = vmatprep.subr.mxu0 0.0
    %4486 = vmatpush1.msra.mxu0 0.0
    %4487 = vmatprep.subr.mxu0 0.0
    %4488 = vmatpush1.msra.mxu0 0.0
    %4489 = vmatprep.subr.mxu0 0.0
    %4490 = vmatpush1.msra.mxu0 0.0
    %4491 = vmatprep.subr.mxu0 0.0
    %4492 = vmatpush1.msra.mxu0 0.0
    %4493 = vmatprep.subr.mxu0 0.0
    %4494 = vmatpush1.msra.mxu0 0.0
    %4495 = vmatprep.subr.mxu0 0.0
    %4496 = vmatpush1.msra.mxu0 0.0
    %4497 = vmatprep.subr.mxu0 0.0
    %4498 = vmatpush1.msra.mxu0 %v4467
    %4499 = vmatprep.subr.mxu0 0.0
    %4500 = vmatpush1.msra.mxu0 %v4466
    %4501 = vmatprep.subr.mxu0 0.0
    %4502 = vmatpush1.msra.mxu0 %v4465
    %4503 = vmatprep.subr.mxu0 0.0
    %4504 = vmatpush1.msra.mxu0 %v4464
    %4505 = vmatprep.subr.mxu0 0.0
    %4506 = vmatpush2.msra.mxu0 0.0
    %4507 = vmatprep.subr.mxu0 0.0
    %4508 = vmatpush2.msra.mxu0 0.0
    %4509 = vmatprep.subr.mxu0 0.0
    %4510 = vmatpush2.msra.mxu0 0.0
    %4511 = vmatprep.subr.mxu0 0.0
    %4512 = vmatpush2.msra.mxu0 0.0
    %4513 = vmatprep.subr.mxu0 0.0
    %4514 = vmatpush2.msra.mxu0 0.0
    %4515 = vmatprep.subr.mxu0 0.0
    %4516 = vmatpush2.msra.mxu0 0.0
    %4517 = vmatprep.subr.mxu0 0.0
    %4518 = vmatpush2.msra.mxu0 0.0
    %4519 = vmatprep.subr.mxu0 0.0
    %4520 = vmatpush2.msra.mxu0 0.0
    %4521 = vmatprep.subr.mxu0 0.0
    %4522 = vmatpush2.msra.mxu0 0.0
    %4523 = vmatprep.subr.mxu0 0.0
    %4524 = vmatpush2.msra.mxu0 0.0
    %4525 = vmatprep.subr.mxu0 0.0
    %4526 = vmatpush2.msra.mxu0 0.0
    %4527 = vmatprep.subr.mxu0 0.0
    %4528 = vmatpush2.msra.mxu0 0.0
    %4529 = vmatprep.subr.mxu0 0.0
    %4530 = vmatpush2.msra.mxu0 0.0
    %4531 = vmatprep.subr.mxu0 0.0
    %4532 = vmatpush2.msra.mxu0 0.0
    %4533 = vmatprep.subr.mxu0 0.0
    %4534 = vmatpush2.msra.mxu0 0.0
    %4535 = vmatprep.subr.mxu0 0.0
    %4536 = vmatpush2.msra.mxu0 0.0
    %4537 = vmatprep.mubr.f32.mxu0 0.0
    %4538 = vmatmul.mubr.f32.gmra.mxu0 %v4471
    %v4539 = vpop.f32.mrf.mxu0
    %v4540 = vadd.f32 0.0, %v4539
    %v4541 = vpop.f32.mrf.mxu0
    %4542 = vdwg.mxu0
    %v4543 = vadd.f32 %v4462, %v4540
    %s4544 = scalar_lea.vmem %s13, 128
    %v4545 = vld [vmem:[%s4544] sm:$0xff]
    %v4546 = vld [vmem:[%s4544 + $0x8] sm:$0xff]
    %v4547 = vld [vmem:[%s4544 + $0x10] sm:$0xff]
    %v4548 = vld [vmem:[%s4544 + $0x18] sm:$0xff]
    %v4549 = vrot.slane %v4218, 4
    %v4550 = vrot.slane %v4219, 3
    %v4551 = vsel %vm4234, %v4550, %v4549
    %v4552 = vsel %vm158, %v4551, 0
    %4554 = vmatprep.subr.mxu0 0.0
    %4555 = vmatpush1.msra.mxu0 0.0
    %4556 = vmatprep.subr.mxu0 0.0
    %4557 = vmatpush1.msra.mxu0 0.0
    %4558 = vmatprep.subr.mxu0 0.0
    %4559 = vmatpush1.msra.mxu0 0.0
    %4560 = vmatprep.subr.mxu0 0.0
    %4561 = vmatpush1.msra.mxu0 0.0
    %4562 = vmatprep.subr.mxu0 0.0
    %4563 = vmatpush1.msra.mxu0 0.0
    %4564 = vmatprep.subr.mxu0 0.0
    %4565 = vmatpush1.msra.mxu0 0.0
    %4566 = vmatprep.subr.mxu0 0.0
    %4567 = vmatpush1.msra.mxu0 0.0
    %4568 = vmatprep.subr.mxu0 0.0
    %4569 = vmatpush1.msra.mxu0 0.0
    %4570 = vmatprep.subr.mxu0 0.0
    %4571 = vmatpush1.msra.mxu0 0.0
    %4572 = vmatprep.subr.mxu0 0.0
    %4573 = vmatpush1.msra.mxu0 0.0
    %4574 = vmatprep.subr.mxu0 0.0
    %4575 = vmatpush1.msra.mxu0 0.0
    %4576 = vmatprep.subr.mxu0 0.0
    %4577 = vmatpush1.msra.mxu0 0.0
    %4578 = vmatprep.subr.mxu0 0.0
    %4579 = vmatpush1.msra.mxu0 %v4548
    %4580 = vmatprep.subr.mxu0 0.0
    %4581 = vmatpush1.msra.mxu0 %v4547
    %4582 = vmatprep.subr.mxu0 0.0
    %4583 = vmatpush1.msra.mxu0 %v4546
    %4584 = vmatprep.subr.mxu0 0.0
    %4585 = vmatpush1.msra.mxu0 %v4545
    %4586 = vmatprep.subr.mxu0 0.0
    %4587 = vmatpush2.msra.mxu0 0.0
    %4588 = vmatprep.subr.mxu0 0.0
    %4589 = vmatpush2.msra.mxu0 0.0
    %4590 = vmatprep.subr.mxu0 0.0
    %4591 = vmatpush2.msra.mxu0 0.0
    %4592 = vmatprep.subr.mxu0 0.0
    %4593 = vmatpush2.msra.mxu0 0.0
    %4594 = vmatprep.subr.mxu0 0.0
    %4595 = vmatpush2.msra.mxu0 0.0
    %4596 = vmatprep.subr.mxu0 0.0
    %4597 = vmatpush2.msra.mxu0 0.0
    %4598 = vmatprep.subr.mxu0 0.0
    %4599 = vmatpush2.msra.mxu0 0.0
    %4600 = vmatprep.subr.mxu0 0.0
    %4601 = vmatpush2.msra.mxu0 0.0
    %4602 = vmatprep.subr.mxu0 0.0
    %4603 = vmatpush2.msra.mxu0 0.0
    %4604 = vmatprep.subr.mxu0 0.0
    %4605 = vmatpush2.msra.mxu0 0.0
    %4606 = vmatprep.subr.mxu0 0.0
    %4607 = vmatpush2.msra.mxu0 0.0
    %4608 = vmatprep.subr.mxu0 0.0
    %4609 = vmatpush2.msra.mxu0 0.0
    %4610 = vmatprep.subr.mxu0 0.0
    %4611 = vmatpush2.msra.mxu0 0.0
    %4612 = vmatprep.subr.mxu0 0.0
    %4613 = vmatpush2.msra.mxu0 0.0
    %4614 = vmatprep.subr.mxu0 0.0
    %4615 = vmatpush2.msra.mxu0 0.0
    %4616 = vmatprep.subr.mxu0 0.0
    %4617 = vmatpush2.msra.mxu0 0.0
    %4618 = vmatprep.mubr.f32.mxu0 0.0
    %4619 = vmatmul.mubr.f32.gmra.mxu0 %v4552
    %v4620 = vpop.f32.mrf.mxu0
    %v4621 = vadd.f32 0.0, %v4620
    %v4622 = vpop.f32.mrf.mxu0
    %4623 = vdwg.mxu0
    %v4624 = vadd.f32 %v4543, %v4621
    %s4625 = scalar_lea.vmem %s13, 160
    %v4626 = vld [vmem:[%s4625] sm:$0xff]
    %v4627 = vld [vmem:[%s4625 + $0x8] sm:$0xff]
    %v4628 = vld [vmem:[%s4625 + $0x10] sm:$0xff]
    %v4629 = vld [vmem:[%s4625 + $0x18] sm:$0xff]
    %v4630 = vrot.slane %v4218, 5
    %v4631 = vrot.slane %v4219, 4
    %v4632 = vsel %vm4234, %v4631, %v4630
    %v4633 = vsel %vm158, %v4632, 0
    %4635 = vmatprep.subr.mxu0 0.0
    %4636 = vmatpush1.msra.mxu0 0.0
    %4637 = vmatprep.subr.mxu0 0.0
    %4638 = vmatpush1.msra.mxu0 0.0
    %4639 = vmatprep.subr.mxu0 0.0
    %4640 = vmatpush1.msra.mxu0 0.0
    %4641 = vmatprep.subr.mxu0 0.0
    %4642 = vmatpush1.msra.mxu0 0.0
    %4643 = vmatprep.subr.mxu0 0.0
    %4644 = vmatpush1.msra.mxu0 0.0
    %4645 = vmatprep.subr.mxu0 0.0
    %4646 = vmatpush1.msra.mxu0 0.0
    %4647 = vmatprep.subr.mxu0 0.0
    %4648 = vmatpush1.msra.mxu0 0.0
    %4649 = vmatprep.subr.mxu0 0.0
    %4650 = vmatpush1.msra.mxu0 0.0
    %4651 = vmatprep.subr.mxu0 0.0
    %4652 = vmatpush1.msra.mxu0 0.0
    %4653 = vmatprep.subr.mxu0 0.0
    %4654 = vmatpush1.msra.mxu0 0.0
    %4655 = vmatprep.subr.mxu0 0.0
    %4656 = vmatpush1.msra.mxu0 0.0
    %4657 = vmatprep.subr.mxu0 0.0
    %4658 = vmatpush1.msra.mxu0 0.0
    %4659 = vmatprep.subr.mxu0 0.0
    %4660 = vmatpush1.msra.mxu0 %v4629
    %4661 = vmatprep.subr.mxu0 0.0
    %4662 = vmatpush1.msra.mxu0 %v4628
    %4663 = vmatprep.subr.mxu0 0.0
    %4664 = vmatpush1.msra.mxu0 %v4627
    %4665 = vmatprep.subr.mxu0 0.0
    %4666 = vmatpush1.msra.mxu0 %v4626
    %4667 = vmatprep.subr.mxu0 0.0
    %4668 = vmatpush2.msra.mxu0 0.0
    %4669 = vmatprep.subr.mxu0 0.0
    %4670 = vmatpush2.msra.mxu0 0.0
    %4671 = vmatprep.subr.mxu0 0.0
    %4672 = vmatpush2.msra.mxu0 0.0
    %4673 = vmatprep.subr.mxu0 0.0
    %4674 = vmatpush2.msra.mxu0 0.0
    %4675 = vmatprep.subr.mxu0 0.0
    %4676 = vmatpush2.msra.mxu0 0.0
    %4677 = vmatprep.subr.mxu0 0.0
    %4678 = vmatpush2.msra.mxu0 0.0
    %4679 = vmatprep.subr.mxu0 0.0
    %4680 = vmatpush2.msra.mxu0 0.0
    %4681 = vmatprep.subr.mxu0 0.0
    %4682 = vmatpush2.msra.mxu0 0.0
    %4683 = vmatprep.subr.mxu0 0.0
    %4684 = vmatpush2.msra.mxu0 0.0
    %4685 = vmatprep.subr.mxu0 0.0
    %4686 = vmatpush2.msra.mxu0 0.0
    %4687 = vmatprep.subr.mxu0 0.0
    %4688 = vmatpush2.msra.mxu0 0.0
    %4689 = vmatprep.subr.mxu0 0.0
    %4690 = vmatpush2.msra.mxu0 0.0
    %4691 = vmatprep.subr.mxu0 0.0
    %4692 = vmatpush2.msra.mxu0 0.0
    %4693 = vmatprep.subr.mxu0 0.0
    %4694 = vmatpush2.msra.mxu0 0.0
    %4695 = vmatprep.subr.mxu0 0.0
    %4696 = vmatpush2.msra.mxu0 0.0
    %4697 = vmatprep.subr.mxu0 0.0
    %4698 = vmatpush2.msra.mxu0 0.0
    %4699 = vmatprep.mubr.f32.mxu0 0.0
    %4700 = vmatmul.mubr.f32.gmra.mxu0 %v4633
    %v4701 = vpop.f32.mrf.mxu0
    %v4702 = vadd.f32 0.0, %v4701
    %v4703 = vpop.f32.mrf.mxu0
    %4704 = vdwg.mxu0
    %v4705 = vadd.f32 %v4624, %v4702
    %s4706 = scalar_lea.vmem %s13, 192
    %v4707 = vld [vmem:[%s4706] sm:$0xff]
    %v4708 = vld [vmem:[%s4706 + $0x8] sm:$0xff]
    %v4709 = vld [vmem:[%s4706 + $0x10] sm:$0xff]
    %v4710 = vld [vmem:[%s4706 + $0x18] sm:$0xff]
    %v4711 = vrot.slane %v4218, 6
    %v4712 = vrot.slane %v4219, 5
    %v4713 = vsel %vm4234, %v4712, %v4711
    %v4714 = vsel %vm158, %v4713, 0
    %4716 = vmatprep.subr.mxu0 0.0
    %4717 = vmatpush1.msra.mxu0 0.0
    %4718 = vmatprep.subr.mxu0 0.0
    %4719 = vmatpush1.msra.mxu0 0.0
    %4720 = vmatprep.subr.mxu0 0.0
    %4721 = vmatpush1.msra.mxu0 0.0
    %4722 = vmatprep.subr.mxu0 0.0
    %4723 = vmatpush1.msra.mxu0 0.0
    %4724 = vmatprep.subr.mxu0 0.0
    %4725 = vmatpush1.msra.mxu0 0.0
    %4726 = vmatprep.subr.mxu0 0.0
    %4727 = vmatpush1.msra.mxu0 0.0
    %4728 = vmatprep.subr.mxu0 0.0
    %4729 = vmatpush1.msra.mxu0 0.0
    %4730 = vmatprep.subr.mxu0 0.0
    %4731 = vmatpush1.msra.mxu0 0.0
    %4732 = vmatprep.subr.mxu0 0.0
    %4733 = vmatpush1.msra.mxu0 0.0
    %4734 = vmatprep.subr.mxu0 0.0
    %4735 = vmatpush1.msra.mxu0 0.0
    %4736 = vmatprep.subr.mxu0 0.0
    %4737 = vmatpush1.msra.mxu0 0.0
    %4738 = vmatprep.subr.mxu0 0.0
    %4739 = vmatpush1.msra.mxu0 0.0
    %4740 = vmatprep.subr.mxu0 0.0
    %4741 = vmatpush1.msra.mxu0 %v4710
    %4742 = vmatprep.subr.mxu0 0.0
    %4743 = vmatpush1.msra.mxu0 %v4709
    %4744 = vmatprep.subr.mxu0 0.0
    %4745 = vmatpush1.msra.mxu0 %v4708
    %4746 = vmatprep.subr.mxu0 0.0
    %4747 = vmatpush1.msra.mxu0 %v4707
    %4748 = vmatprep.subr.mxu0 0.0
    %4749 = vmatpush2.msra.mxu0 0.0
    %4750 = vmatprep.subr.mxu0 0.0
    %4751 = vmatpush2.msra.mxu0 0.0
    %4752 = vmatprep.subr.mxu0 0.0
    %4753 = vmatpush2.msra.mxu0 0.0
    %4754 = vmatprep.subr.mxu0 0.0
    %4755 = vmatpush2.msra.mxu0 0.0
    %4756 = vmatprep.subr.mxu0 0.0
    %4757 = vmatpush2.msra.mxu0 0.0
    %4758 = vmatprep.subr.mxu0 0.0
    %4759 = vmatpush2.msra.mxu0 0.0
    %4760 = vmatprep.subr.mxu0 0.0
    %4761 = vmatpush2.msra.mxu0 0.0
    %4762 = vmatprep.subr.mxu0 0.0
    %4763 = vmatpush2.msra.mxu0 0.0
    %4764 = vmatprep.subr.mxu0 0.0
    %4765 = vmatpush2.msra.mxu0 0.0
    %4766 = vmatprep.subr.mxu0 0.0
    %4767 = vmatpush2.msra.mxu0 0.0
    %4768 = vmatprep.subr.mxu0 0.0
    %4769 = vmatpush2.msra.mxu0 0.0
    %4770 = vmatprep.subr.mxu0 0.0
    %4771 = vmatpush2.msra.mxu0 0.0
    %4772 = vmatprep.subr.mxu0 0.0
    %4773 = vmatpush2.msra.mxu0 0.0
    %4774 = vmatprep.subr.mxu0 0.0
    %4775 = vmatpush2.msra.mxu0 0.0
    %4776 = vmatprep.subr.mxu0 0.0
    %4777 = vmatpush2.msra.mxu0 0.0
    %4778 = vmatprep.subr.mxu0 0.0
    %4779 = vmatpush2.msra.mxu0 0.0
    %4780 = vmatprep.mubr.f32.mxu0 0.0
    %4781 = vmatmul.mubr.f32.gmra.mxu0 %v4714
    %v4782 = vpop.f32.mrf.mxu0
    %v4783 = vadd.f32 0.0, %v4782
    %v4784 = vpop.f32.mrf.mxu0
    %4785 = vdwg.mxu0
    %v4786 = vadd.f32 %v4705, %v4783
    %s4787 = scalar_lea.vmem %s13, 224
    %v4788 = vld [vmem:[%s4787] sm:$0xff]
    %v4789 = vld [vmem:[%s4787 + $0x8] sm:$0xff]
    %v4790 = vld [vmem:[%s4787 + $0x10] sm:$0xff]
    %v4791 = vld [vmem:[%s4787 + $0x18] sm:$0xff]
    %v4792 = vrot.slane %v4218, 7
    %v4793 = vrot.slane %v4219, 6
    %v4794 = vsel %vm4234, %v4793, %v4792
    %v4795 = vsel %vm158, %v4794, 0
    %4797 = vmatprep.subr.mxu0 0.0
    %4798 = vmatpush1.msra.mxu0 0.0
    %4799 = vmatprep.subr.mxu0 0.0
    %4800 = vmatpush1.msra.mxu0 0.0
    %4801 = vmatprep.subr.mxu0 0.0
    %4802 = vmatpush1.msra.mxu0 0.0
    %4803 = vmatprep.subr.mxu0 0.0
    %4804 = vmatpush1.msra.mxu0 0.0
    %4805 = vmatprep.subr.mxu0 0.0
    %4806 = vmatpush1.msra.mxu0 0.0
    %4807 = vmatprep.subr.mxu0 0.0
    %4808 = vmatpush1.msra.mxu0 0.0
    %4809 = vmatprep.subr.mxu0 0.0
    %4810 = vmatpush1.msra.mxu0 0.0
    %4811 = vmatprep.subr.mxu0 0.0
    %4812 = vmatpush1.msra.mxu0 0.0
    %4813 = vmatprep.subr.mxu0 0.0
    %4814 = vmatpush1.msra.mxu0 0.0
    %4815 = vmatprep.subr.mxu0 0.0
    %4816 = vmatpush1.msra.mxu0 0.0
    %4817 = vmatprep.subr.mxu0 0.0
    %4818 = vmatpush1.msra.mxu0 0.0
    %4819 = vmatprep.subr.mxu0 0.0
    %4820 = vmatpush1.msra.mxu0 0.0
    %4821 = vmatprep.subr.mxu0 0.0
    %4822 = vmatpush1.msra.mxu0 %v4791
    %4823 = vmatprep.subr.mxu0 0.0
    %4824 = vmatpush1.msra.mxu0 %v4790
    %4825 = vmatprep.subr.mxu0 0.0
    %4826 = vmatpush1.msra.mxu0 %v4789
    %4827 = vmatprep.subr.mxu0 0.0
    %4828 = vmatpush1.msra.mxu0 %v4788
    %4829 = vmatprep.subr.mxu0 0.0
    %4830 = vmatpush2.msra.mxu0 0.0
    %4831 = vmatprep.subr.mxu0 0.0
    %4832 = vmatpush2.msra.mxu0 0.0
    %4833 = vmatprep.subr.mxu0 0.0
    %4834 = vmatpush2.msra.mxu0 0.0
    %4835 = vmatprep.subr.mxu0 0.0
    %4836 = vmatpush2.msra.mxu0 0.0
    %4837 = vmatprep.subr.mxu0 0.0
    %4838 = vmatpush2.msra.mxu0 0.0
    %4839 = vmatprep.subr.mxu0 0.0
    %4840 = vmatpush2.msra.mxu0 0.0
    %4841 = vmatprep.subr.mxu0 0.0
    %4842 = vmatpush2.msra.mxu0 0.0
    %4843 = vmatprep.subr.mxu0 0.0
    %4844 = vmatpush2.msra.mxu0 0.0
    %4845 = vmatprep.subr.mxu0 0.0
    %4846 = vmatpush2.msra.mxu0 0.0
    %4847 = vmatprep.subr.mxu0 0.0
    %4848 = vmatpush2.msra.mxu0 0.0
    %4849 = vmatprep.subr.mxu0 0.0
    %4850 = vmatpush2.msra.mxu0 0.0
    %4851 = vmatprep.subr.mxu0 0.0
    %4852 = vmatpush2.msra.mxu0 0.0
    %4853 = vmatprep.subr.mxu0 0.0
    %4854 = vmatpush2.msra.mxu0 0.0
    %4855 = vmatprep.subr.mxu0 0.0
    %4856 = vmatpush2.msra.mxu0 0.0
    %4857 = vmatprep.subr.mxu0 0.0
    %4858 = vmatpush2.msra.mxu0 0.0
    %4859 = vmatprep.subr.mxu0 0.0
    %4860 = vmatpush2.msra.mxu0 0.0
    %4861 = vmatprep.mubr.f32.mxu0 0.0
    %4862 = vmatmul.mubr.f32.gmra.mxu0 %v4795
    %v4863 = vpop.f32.mrf.mxu0
    %v4864 = vadd.f32 0.0, %v4863
    %v4865 = vpop.f32.mrf.mxu0
    %4866 = vdwg.mxu0
    %v4867 = vadd.f32 %v4786, %v4864
    %v4868 = vld [vmem:[%s14] sm:$0x1]
    %v4870 = vlaneseq
    %v4871 = vshrl.u32 %v4870, 7
    %v4872 = vsub.s32 0, %v4871
    %v4873 = vrot.slane %v4868, %v4872
    %v4875 = vadd.f32 %v4867, %v4873
    %vm4876 = vcmask 17408
    %4877 = vst.msk [vmem:[#allocation2] sm:$0x3] %vm4876, %v4875
    // Predicated region
    $region62: #{tmae_forward.1} parent=1 // pred_check
      _
    $region63: #{tmae_forward.1} parent=1 // pred_check_branch
      %4879 = sbr.rel (0) target = $region65
    $region64: #{tmae_forward.1} parent=1 // pred_region
      _
    $region65: #{tmae_forward.1} parent=1 // pred_fallthru
      _
    // Predicated region
    $region66: #{tmae_forward.1} parent=1 // pred_check
      _
    $region67: #{tmae_forward.1} parent=1 // pred_check_branch
      %4881 = sbr.rel (0) target = $region69
    $region68: #{tmae_forward.1} parent=1 // pred_region
      %s4883 = ssub.s32 32, 32
      %4884 = vsyncadd [#allocation3], %s4883
      %s4886 = sshll.u32 [#allocation2], 4
      %s4887 = int_to_ptr.vmem [resolvable:$true] %s4886
      %4889 = dma.vmem_to_hbm [thread:$0]  %s4887, 32, %s16, [#allocation3]
    $region69: #{tmae_forward.1} parent=1 // pred_fallthru
      _
    // Predicated region
    $region70: #{tmae_forward.1} parent=1 // pred_check
      _
    $region71: #{tmae_forward.1} parent=1 // pred_check_branch
      %4891 = sbr.rel (0) target = $region73
    $region72: #{tmae_forward.1} parent=1 // pred_region
      _
    $region73: #{tmae_forward.1} parent=1 // pred_fallthru
      _
    // Predicated region
    $region74: #{tmae_forward.1} parent=1 // pred_check
      _
    $region75: #{tmae_forward.1} parent=1 // pred_check_branch
      %4893 = sbr.rel (0) target = $region77
    $region76: #{tmae_forward.1} parent=1 // pred_region
      %4894 = dma.done [#allocation3], 32
    $region77: #{tmae_forward.1} parent=1 // pred_fallthru
      _
    %4895 = vsyncpa [#allocation3], 1

</llo_original>
